<compile_context>
chip_gen: v5e
topology: v5e:2x2
jax: 0.10.0
libtpu: 0.0.40
codegen_flags: <defaults>
</compile_context>

<pallas_src>
import jax
import jax.numpy as jnp
from jax.experimental import pallas as pl
from jax.experimental.pallas import tpu as pltpu

EPS = 1e-5  # nn.InstanceNorm2d default eps


def _make_fused_kernel(H, W, C):
    """Fused: [conv3x3(reflect-pad) + IN + relu] -> [conv3x3 + IN] + residual."""
    HW = H * W

    def reflect_pad(img):
        # img: (H, W, C) -> (H+2, W+2, C), matches nn.ReflectionPad2d(1).
        rows = jnp.concatenate([img[1:2], img, img[H - 2:H - 1]], axis=0)
        return jnp.concatenate(
            [rows[:, 1:2, :], rows, rows[:, W - 2:W - 1, :]], axis=1)

    def conv_in(img, w_ref, g_ref, beta_ref, apply_relu):
        # img: (H, W, C) f32.
        xpad = reflect_pad(img)
        # im2col: one (HW, 9C) x (9C, C) MXU matmul instead of 9 tiny ones.
        patches = jnp.concatenate(
            [xpad[dy:dy + H, dx:dx + W, :].reshape(HW, C)
             for dy in range(3) for dx in range(3)], axis=1)        # (HW, 9C)
        acc = jnp.dot(patches, w_ref[...].astype(jnp.float32),
                      preferred_element_type=jnp.float32)           # (HW, C)

        # InstanceNorm2d stats in one pass over acc (mean and E[x^2]).
        # The conv bias is intentionally omitted: IN subtracts the per-channel
        # spatial mean, which cancels any per-channel constant bias exactly.
        mean = jnp.mean(acc, axis=0, keepdims=True)                  # (1, C)
        mean_sq = jnp.mean(acc * acc, axis=0, keepdims=True)         # (1, C)
        var = mean_sq - mean * mean
        # Folded affine: y = acc * scale + shift   (single FMA-shaped pass)
        scale = g_ref[...].astype(jnp.float32) * jax.lax.rsqrt(var + EPS)
        shift = beta_ref[...].astype(jnp.float32) - mean * scale
        y = acc * scale + shift
        if apply_relu:
            y = jnp.maximum(y, 0.0)
        return y                                                     # (HW, C)

    def kernel(x_ref, w1_ref, g1_ref, be1_ref, w2_ref, g2_ref, be2_ref,
               out_ref):
        x = x_ref[0].astype(jnp.float32)                             # (H, W, C)
        h = conv_in(x, w1_ref, g1_ref, be1_ref, apply_relu=True)
        h = conv_in(h.reshape(H, W, C), w2_ref, g2_ref, be2_ref,
                    apply_relu=False)
        out = h.reshape(H, W, C) + x                                 # residual
        out_ref[...] = out.reshape(1, H, W, C).astype(out_ref.dtype)

    return kernel


def _fused_residual_nhwc(x_nhwc, w1m, g1, be1, w2m, g2, be2):
    N, H, W, C = x_nhwc.shape
    kernel = _make_fused_kernel(H, W, C)
    img_spec = pl.BlockSpec((1, H, W, C), lambda n: (n, 0, 0, 0))
    w_spec = pl.BlockSpec((9 * C, C), lambda n: (0, 0))
    v_spec = pl.BlockSpec((1, C), lambda n: (0, 0))
    return pl.pallas_call(
        kernel,
        out_shape=jax.ShapeDtypeStruct((N, H, W, C), x_nhwc.dtype),
        grid=(N,),
        in_specs=[img_spec, w_spec, v_spec, v_spec, w_spec, v_spec, v_spec],
        out_specs=img_spec,
        compiler_params=pltpu.CompilerParams(
            dimension_semantics=("parallel",)),
    )(x_nhwc, w1m, g1, be1, w2m, g2, be2)


@jax.jit
def residual_forward(x_nchw, params):
    """Pallas implementation of Residual.forward. Input/output are NCHW."""
    C = x_nchw.shape[1]
    x_nhwc = jnp.transpose(x_nchw, (0, 2, 3, 1))
    # Weight prep (tiny, parameter-sized): PyTorch (Cout, Cin, kh, kw) ->
    # im2col matrix (kh*kw*Cin, Cout), rows ordered (dy, dx, ci).
    w1m = jnp.transpose(params["w1"], (2, 3, 1, 0)).reshape(9 * C, C)
    w2m = jnp.transpose(params["w2"], (2, 3, 1, 0)).reshape(9 * C, C)
    g1 = params["g1"].reshape(1, C)
    be1 = params["beta1"].reshape(1, C)
    g2 = params["g2"].reshape(1, C)
    be2 = params["beta2"].reshape(1, C)
    # Note: conv biases b1/b2 are mathematically cancelled by InstanceNorm's
    # mean subtraction, so they are not passed to the kernel.
    out_nhwc = _fused_residual_nhwc(x_nhwc, w1m, g1, be1, w2m, g2, be2)
    return jnp.transpose(out_nhwc, (0, 3, 1, 2))


def _ref_forward(x_nchw, params):
    """Plain-JAX reference (mirrors the PyTorch forward) for validation."""
    def stage(x, w, b, g, beta, relu):
        xpad = jnp.pad(x, ((0, 0), (0, 0), (1, 1), (1, 1)), mode="reflect")
        y = jax.lax.conv_general_dilated(
            xpad, w, (1, 1), "VALID",
            dimension_numbers=("NCHW", "OIHW", "NCHW"),
            precision=jax.lax.Precision.HIGHEST)
        y = y + b[None, :, None, None]
        mean = y.mean(axis=(2, 3), keepdims=True)
        var = ((y - mean) ** 2).mean(axis=(2, 3), keepdims=True)
        y = (y - mean) * jax.lax.rsqrt(var + EPS)
        y = y * g[None, :, None, None] + beta[None, :, None, None]
        return jnp.maximum(y, 0.0) if relu else y

    out = stage(x_nchw, params["w1"], params["b1"], params["g1"],
                params["beta1"], True)
    out = stage(out, params["w2"], params["b2"], params["g2"],
                params["beta2"], False)
    return out + x_nchw


if __name__ == "__main__":
    N, C, H, W = 2, 4, 16, 16
    key = jax.random.PRNGKey(0)
    ks = jax.random.split(key, 9)

    x = jax.random.normal(ks[0], (N, C, H, W), jnp.float32)

    # Deterministic synthetic parameters (shapes match nn.Conv2d(C, C, 3) and
    # nn.InstanceNorm2d(C, affine=True)).
    fan_in = C * 3 * 3
    params = {
        "w1": jax.random.normal(ks[1], (C, C, 3, 3), jnp.float32) / jnp.sqrt(fan_in),
        "b1": jax.random.normal(ks[2], (C,), jnp.float32) * 0.1,
        "g1": 1.0 + 0.1 * jax.random.normal(ks[3], (C,), jnp.float32),
        "beta1": 0.1 * jax.random.normal(ks[4], (C,), jnp.float32),
        "w2": jax.random.normal(ks[5], (C, C, 3, 3), jnp.float32) / jnp.sqrt(fan_in),
        "b2": jax.random.normal(ks[6], (C,), jnp.float32) * 0.1,
        "g2": 1.0 + 0.1 * jax.random.normal(ks[7], (C,), jnp.float32),
        "beta2": 0.1 * jax.random.normal(ks[8], (C,), jnp.float32),
    }

    out = jax.block_until_ready(residual_forward(x, params))
    ref = jax.block_until_ready(_ref_forward(x, params))

    assert out.shape == (N, C, H, W), out.shape
    assert jnp.allclose(out, ref, atol=1e-4, rtol=1e-4), (
        float(jnp.max(jnp.abs(out - ref))))
    print("KERNEL_OK")
</pallas_src>

<mosaic_0001>
module attributes {stable_mosaic.version = 11 : i64} {
  func.func @kernel(%arg0: i32, %arg1: memref<1x16x16x4xf32, #tpu.memory_space<vmem>>, %arg2: memref<36x4xf32, #tpu.memory_space<vmem>>, %arg3: memref<1x4xf32, #tpu.memory_space<vmem>>, %arg4: memref<1x4xf32, #tpu.memory_space<vmem>>, %arg5: memref<36x4xf32, #tpu.memory_space<vmem>>, %arg6: memref<1x4xf32, #tpu.memory_space<vmem>>, %arg7: memref<1x4xf32, #tpu.memory_space<vmem>>, %arg8: memref<1x16x16x4xf32, #tpu.memory_space<vmem>>) attributes {dimension_semantics = [#tpu.dimension_semantics<parallel>], iteration_bounds = array<i64: 2>, scalar_prefetch = 0 : i64, scratch_operands = 0 : i64, tpu.core_type = #tpu.core_type<tc>, window_params = [{transform_indices = @transform_0, window_bounds = array<i64: 1, 16, 16, 4>}, {pipeline_mode = #tpu.pipeline_mode<synchronous>, transform_indices = @transform_1, window_bounds = array<i64: 36, 4>}, {pipeline_mode = #tpu.pipeline_mode<synchronous>, transform_indices = @transform_2, window_bounds = array<i64: 1, 4>}, {pipeline_mode = #tpu.pipeline_mode<synchronous>, transform_indices = @transform_3, window_bounds = array<i64: 1, 4>}, {pipeline_mode = #tpu.pipeline_mode<synchronous>, transform_indices = @transform_4, window_bounds = array<i64: 36, 4>}, {pipeline_mode = #tpu.pipeline_mode<synchronous>, transform_indices = @transform_5, window_bounds = array<i64: 1, 4>}, {pipeline_mode = #tpu.pipeline_mode<synchronous>, transform_indices = @transform_6, window_bounds = array<i64: 1, 4>}, {transform_indices = @transform_7, window_bounds = array<i64: 1, 16, 16, 4>}]} {
    %c0 = arith.constant 0 : index
    %c0_0 = arith.constant 0 : index
    %c0_1 = arith.constant 0 : index
    %c0_2 = arith.constant 0 : index
    %0 = vector.load %arg1[%c0, %c0_0, %c0_1, %c0_2] : memref<1x16x16x4xf32, #tpu.memory_space<vmem>>, vector<1x16x16x4xf32>
    %1 = vector.shape_cast %0 : vector<1x16x16x4xf32> to vector<16x16x4xf32>
    %2 = vector.extract_strided_slice %1 {offsets = [1, 0, 0], sizes = [1, 16, 4], strides = [1, 1, 1]} : vector<16x16x4xf32> to vector<1x16x4xf32>
    %3 = vector.extract_strided_slice %1 {offsets = [14, 0, 0], sizes = [1, 16, 4], strides = [1, 1, 1]} : vector<16x16x4xf32> to vector<1x16x4xf32>
    %4 = tpu.concatenate %2, %1, %3 in 0 : vector<1x16x4xf32>, vector<16x16x4xf32>, vector<1x16x4xf32> -> vector<18x16x4xf32>
    %5 = vector.extract_strided_slice %4 {offsets = [0, 1, 0], sizes = [18, 1, 4], strides = [1, 1, 1]} : vector<18x16x4xf32> to vector<18x1x4xf32>
    %6 = vector.extract_strided_slice %4 {offsets = [0, 14, 0], sizes = [18, 1, 4], strides = [1, 1, 1]} : vector<18x16x4xf32> to vector<18x1x4xf32>
    %7 = tpu.concatenate %5, %4, %6 in 1 : vector<18x1x4xf32>, vector<18x16x4xf32>, vector<18x1x4xf32> -> vector<18x18x4xf32>
    %8 = vector.extract_strided_slice %7 {offsets = [0, 0, 0], sizes = [16, 16, 4], strides = [1, 1, 1]} : vector<18x18x4xf32> to vector<16x16x4xf32>
    %9 = vector.shape_cast %8 : vector<16x16x4xf32> to vector<256x4xf32>
    %10 = vector.extract_strided_slice %7 {offsets = [0, 1, 0], sizes = [16, 16, 4], strides = [1, 1, 1]} : vector<18x18x4xf32> to vector<16x16x4xf32>
    %11 = vector.shape_cast %10 : vector<16x16x4xf32> to vector<256x4xf32>
    %12 = vector.extract_strided_slice %7 {offsets = [0, 2, 0], sizes = [16, 16, 4], strides = [1, 1, 1]} : vector<18x18x4xf32> to vector<16x16x4xf32>
    %13 = vector.shape_cast %12 : vector<16x16x4xf32> to vector<256x4xf32>
    %14 = vector.extract_strided_slice %7 {offsets = [1, 0, 0], sizes = [16, 16, 4], strides = [1, 1, 1]} : vector<18x18x4xf32> to vector<16x16x4xf32>
    %15 = vector.shape_cast %14 : vector<16x16x4xf32> to vector<256x4xf32>
    %16 = vector.extract_strided_slice %7 {offsets = [1, 1, 0], sizes = [16, 16, 4], strides = [1, 1, 1]} : vector<18x18x4xf32> to vector<16x16x4xf32>
    %17 = vector.shape_cast %16 : vector<16x16x4xf32> to vector<256x4xf32>
    %18 = vector.extract_strided_slice %7 {offsets = [1, 2, 0], sizes = [16, 16, 4], strides = [1, 1, 1]} : vector<18x18x4xf32> to vector<16x16x4xf32>
    %19 = vector.shape_cast %18 : vector<16x16x4xf32> to vector<256x4xf32>
    %20 = vector.extract_strided_slice %7 {offsets = [2, 0, 0], sizes = [16, 16, 4], strides = [1, 1, 1]} : vector<18x18x4xf32> to vector<16x16x4xf32>
    %21 = vector.shape_cast %20 : vector<16x16x4xf32> to vector<256x4xf32>
    %22 = vector.extract_strided_slice %7 {offsets = [2, 1, 0], sizes = [16, 16, 4], strides = [1, 1, 1]} : vector<18x18x4xf32> to vector<16x16x4xf32>
    %23 = vector.shape_cast %22 : vector<16x16x4xf32> to vector<256x4xf32>
    %24 = vector.extract_strided_slice %7 {offsets = [2, 2, 0], sizes = [16, 16, 4], strides = [1, 1, 1]} : vector<18x18x4xf32> to vector<16x16x4xf32>
    %25 = vector.shape_cast %24 : vector<16x16x4xf32> to vector<256x4xf32>
    %26 = tpu.concatenate %9, %11, %13, %15, %17, %19, %21, %23, %25 in 1 : vector<256x4xf32>, vector<256x4xf32>, vector<256x4xf32>, vector<256x4xf32>, vector<256x4xf32>, vector<256x4xf32>, vector<256x4xf32>, vector<256x4xf32>, vector<256x4xf32> -> vector<256x36xf32>
    %c0_3 = arith.constant 0 : index
    %c0_4 = arith.constant 0 : index
    %27 = vector.load %arg2[%c0_3, %c0_4] : memref<36x4xf32, #tpu.memory_space<vmem>>, vector<36x4xf32>
    %cst = arith.constant dense<0.000000e+00> : vector<256x4xf32>
    %28 = tpu.matmul %26, %27, %cst {dimension_numbers = #tpu.dot_dimension_numbers<[1], [0], [0], [1], [0, 0, 1, 1], [], []>} : vector<256x36xf32>, vector<36x4xf32>, vector<256x4xf32> -> vector<256x4xf32>
    %cst_5 = arith.constant dense<0.000000e+00> : vector<4xf32>
    %29 = vector.multi_reduction <add>, %28, %cst_5 [0] : vector<256x4xf32> to vector<4xf32>
    %30 = vector.shape_cast %29 : vector<4xf32> to vector<1x4xf32>
    %cst_6 = arith.constant 2.560000e+02 : f32
    %31 = vector.broadcast %cst_6 : f32 to vector<1x4xf32>
    %32 = arith.divf %30, %31 : vector<1x4xf32>
    %33 = arith.mulf %28, %28 : vector<256x4xf32>
    %cst_7 = arith.constant dense<0.000000e+00> : vector<4xf32>
    %34 = vector.multi_reduction <add>, %33, %cst_7 [0] : vector<256x4xf32> to vector<4xf32>
    %35 = vector.shape_cast %34 : vector<4xf32> to vector<1x4xf32>
    %cst_8 = arith.constant 2.560000e+02 : f32
    %36 = vector.broadcast %cst_8 : f32 to vector<1x4xf32>
    %37 = arith.divf %35, %36 : vector<1x4xf32>
    %38 = arith.mulf %32, %32 : vector<1x4xf32>
    %39 = arith.subf %37, %38 : vector<1x4xf32>
    %c0_9 = arith.constant 0 : index
    %c0_10 = arith.constant 0 : index
    %40 = vector.load %arg3[%c0_9, %c0_10] : memref<1x4xf32, #tpu.memory_space<vmem>>, vector<1x4xf32>
    %cst_11 = arith.constant 9.99999974E-6 : f32
    %41 = vector.broadcast %cst_11 : f32 to vector<1x4xf32>
    %42 = arith.addf %39, %41 : vector<1x4xf32>
    %43 = math.rsqrt %42 : vector<1x4xf32>
    %44 = arith.mulf %40, %43 : vector<1x4xf32>
    %c0_12 = arith.constant 0 : index
    %c0_13 = arith.constant 0 : index
    %45 = vector.load %arg4[%c0_12, %c0_13] : memref<1x4xf32, #tpu.memory_space<vmem>>, vector<1x4xf32>
    %46 = arith.mulf %32, %44 : vector<1x4xf32>
    %47 = arith.subf %45, %46 : vector<1x4xf32>
    %48 = vector.broadcast %44 : vector<1x4xf32> to vector<256x4xf32>
    %49 = arith.mulf %28, %48 : vector<256x4xf32>
    %50 = vector.broadcast %47 : vector<1x4xf32> to vector<256x4xf32>
    %51 = arith.addf %49, %50 : vector<256x4xf32>
    %cst_14 = arith.constant 0.000000e+00 : f32
    %52 = vector.broadcast %cst_14 : f32 to vector<256x4xf32>
    %53 = arith.maximumf %51, %52 : vector<256x4xf32>
    %54 = vector.shape_cast %53 : vector<256x4xf32> to vector<16x16x4xf32>
    %55 = vector.extract_strided_slice %54 {offsets = [1, 0, 0], sizes = [1, 16, 4], strides = [1, 1, 1]} : vector<16x16x4xf32> to vector<1x16x4xf32>
    %56 = vector.extract_strided_slice %54 {offsets = [14, 0, 0], sizes = [1, 16, 4], strides = [1, 1, 1]} : vector<16x16x4xf32> to vector<1x16x4xf32>
    %57 = tpu.concatenate %55, %54, %56 in 0 : vector<1x16x4xf32>, vector<16x16x4xf32>, vector<1x16x4xf32> -> vector<18x16x4xf32>
    %58 = vector.extract_strided_slice %57 {offsets = [0, 1, 0], sizes = [18, 1, 4], strides = [1, 1, 1]} : vector<18x16x4xf32> to vector<18x1x4xf32>
    %59 = vector.extract_strided_slice %57 {offsets = [0, 14, 0], sizes = [18, 1, 4], strides = [1, 1, 1]} : vector<18x16x4xf32> to vector<18x1x4xf32>
    %60 = tpu.concatenate %58, %57, %59 in 1 : vector<18x1x4xf32>, vector<18x16x4xf32>, vector<18x1x4xf32> -> vector<18x18x4xf32>
    %61 = vector.extract_strided_slice %60 {offsets = [0, 0, 0], sizes = [16, 16, 4], strides = [1, 1, 1]} : vector<18x18x4xf32> to vector<16x16x4xf32>
    %62 = vector.shape_cast %61 : vector<16x16x4xf32> to vector<256x4xf32>
    %63 = vector.extract_strided_slice %60 {offsets = [0, 1, 0], sizes = [16, 16, 4], strides = [1, 1, 1]} : vector<18x18x4xf32> to vector<16x16x4xf32>
    %64 = vector.shape_cast %63 : vector<16x16x4xf32> to vector<256x4xf32>
    %65 = vector.extract_strided_slice %60 {offsets = [0, 2, 0], sizes = [16, 16, 4], strides = [1, 1, 1]} : vector<18x18x4xf32> to vector<16x16x4xf32>
    %66 = vector.shape_cast %65 : vector<16x16x4xf32> to vector<256x4xf32>
    %67 = vector.extract_strided_slice %60 {offsets = [1, 0, 0], sizes = [16, 16, 4], strides = [1, 1, 1]} : vector<18x18x4xf32> to vector<16x16x4xf32>
    %68 = vector.shape_cast %67 : vector<16x16x4xf32> to vector<256x4xf32>
    %69 = vector.extract_strided_slice %60 {offsets = [1, 1, 0], sizes = [16, 16, 4], strides = [1, 1, 1]} : vector<18x18x4xf32> to vector<16x16x4xf32>
    %70 = vector.shape_cast %69 : vector<16x16x4xf32> to vector<256x4xf32>
    %71 = vector.extract_strided_slice %60 {offsets = [1, 2, 0], sizes = [16, 16, 4], strides = [1, 1, 1]} : vector<18x18x4xf32> to vector<16x16x4xf32>
    %72 = vector.shape_cast %71 : vector<16x16x4xf32> to vector<256x4xf32>
    %73 = vector.extract_strided_slice %60 {offsets = [2, 0, 0], sizes = [16, 16, 4], strides = [1, 1, 1]} : vector<18x18x4xf32> to vector<16x16x4xf32>
    %74 = vector.shape_cast %73 : vector<16x16x4xf32> to vector<256x4xf32>
    %75 = vector.extract_strided_slice %60 {offsets = [2, 1, 0], sizes = [16, 16, 4], strides = [1, 1, 1]} : vector<18x18x4xf32> to vector<16x16x4xf32>
    %76 = vector.shape_cast %75 : vector<16x16x4xf32> to vector<256x4xf32>
    %77 = vector.extract_strided_slice %60 {offsets = [2, 2, 0], sizes = [16, 16, 4], strides = [1, 1, 1]} : vector<18x18x4xf32> to vector<16x16x4xf32>
    %78 = vector.shape_cast %77 : vector<16x16x4xf32> to vector<256x4xf32>
    %79 = tpu.concatenate %62, %64, %66, %68, %70, %72, %74, %76, %78 in 1 : vector<256x4xf32>, vector<256x4xf32>, vector<256x4xf32>, vector<256x4xf32>, vector<256x4xf32>, vector<256x4xf32>, vector<256x4xf32>, vector<256x4xf32>, vector<256x4xf32> -> vector<256x36xf32>
    %c0_15 = arith.constant 0 : index
    %c0_16 = arith.constant 0 : index
    %80 = vector.load %arg5[%c0_15, %c0_16] : memref<36x4xf32, #tpu.memory_space<vmem>>, vector<36x4xf32>
    %cst_17 = arith.constant dense<0.000000e+00> : vector<256x4xf32>
    %81 = tpu.matmul %79, %80, %cst_17 {dimension_numbers = #tpu.dot_dimension_numbers<[1], [0], [0], [1], [0, 0, 1, 1], [], []>} : vector<256x36xf32>, vector<36x4xf32>, vector<256x4xf32> -> vector<256x4xf32>
    %cst_18 = arith.constant dense<0.000000e+00> : vector<4xf32>
    %82 = vector.multi_reduction <add>, %81, %cst_18 [0] : vector<256x4xf32> to vector<4xf32>
    %83 = vector.shape_cast %82 : vector<4xf32> to vector<1x4xf32>
    %cst_19 = arith.constant 2.560000e+02 : f32
    %84 = vector.broadcast %cst_19 : f32 to vector<1x4xf32>
    %85 = arith.divf %83, %84 : vector<1x4xf32>
    %86 = arith.mulf %81, %81 : vector<256x4xf32>
    %cst_20 = arith.constant dense<0.000000e+00> : vector<4xf32>
    %87 = vector.multi_reduction <add>, %86, %cst_20 [0] : vector<256x4xf32> to vector<4xf32>
    %88 = vector.shape_cast %87 : vector<4xf32> to vector<1x4xf32>
    %cst_21 = arith.constant 2.560000e+02 : f32
    %89 = vector.broadcast %cst_21 : f32 to vector<1x4xf32>
    %90 = arith.divf %88, %89 : vector<1x4xf32>
    %91 = arith.mulf %85, %85 : vector<1x4xf32>
    %92 = arith.subf %90, %91 : vector<1x4xf32>
    %c0_22 = arith.constant 0 : index
    %c0_23 = arith.constant 0 : index
    %93 = vector.load %arg6[%c0_22, %c0_23] : memref<1x4xf32, #tpu.memory_space<vmem>>, vector<1x4xf32>
    %cst_24 = arith.constant 9.99999974E-6 : f32
    %94 = vector.broadcast %cst_24 : f32 to vector<1x4xf32>
    %95 = arith.addf %92, %94 : vector<1x4xf32>
    %96 = math.rsqrt %95 : vector<1x4xf32>
    %97 = arith.mulf %93, %96 : vector<1x4xf32>
    %c0_25 = arith.constant 0 : index
    %c0_26 = arith.constant 0 : index
    %98 = vector.load %arg7[%c0_25, %c0_26] : memref<1x4xf32, #tpu.memory_space<vmem>>, vector<1x4xf32>
    %99 = arith.mulf %85, %97 : vector<1x4xf32>
    %100 = arith.subf %98, %99 : vector<1x4xf32>
    %101 = vector.broadcast %97 : vector<1x4xf32> to vector<256x4xf32>
    %102 = arith.mulf %81, %101 : vector<256x4xf32>
    %103 = vector.broadcast %100 : vector<1x4xf32> to vector<256x4xf32>
    %104 = arith.addf %102, %103 : vector<256x4xf32>
    %105 = vector.shape_cast %104 : vector<256x4xf32> to vector<16x16x4xf32>
    %106 = arith.addf %105, %1 : vector<16x16x4xf32>
    %107 = vector.shape_cast %106 : vector<16x16x4xf32> to vector<1x16x16x4xf32>
    %c0_27 = arith.constant 0 : index
    %c0_28 = arith.constant 0 : index
    %c0_29 = arith.constant 0 : index
    %c0_30 = arith.constant 0 : index
    %108 = vector.load %arg8[%c0_27, %c0_28, %c0_29, %c0_30] : memref<1x16x16x4xf32, #tpu.memory_space<vmem>>, vector<1x16x16x4xf32>
    tpu.vector_store %arg8[%c0_27, %c0_28, %c0_29, %c0_30], %107 {strides = array<i32>} : memref<1x16x16x4xf32, #tpu.memory_space<vmem>>, vector<1x16x16x4xf32>,
    return
  }
  func.func @transform_0(%arg0: i32) -> (i32, i32, i32, i32) {
    %c0_i32 = arith.constant 0 : i32
    %c0_i32_0 = arith.constant 0 : i32
    %c0_i32_1 = arith.constant 0 : i32
    %c0_i32_2 = arith.constant 0 : i32
    return %arg0, %c0_i32, %c0_i32_0, %c0_i32_1 : i32, i32, i32, i32
  }
  func.func @transform_1(%arg0: i32) -> (i32, i32) {
    %c0_i32 = arith.constant 0 : i32
    %c0_i32_0 = arith.constant 0 : i32
    %c0_i32_1 = arith.constant 0 : i32
    return %c0_i32, %c0_i32_0 : i32, i32
  }
  func.func @transform_2(%arg0: i32) -> (i32, i32) {
    %c0_i32 = arith.constant 0 : i32
    %c0_i32_0 = arith.constant 0 : i32
    %c0_i32_1 = arith.constant 0 : i32
    return %c0_i32, %c0_i32_0 : i32, i32
  }
  func.func @transform_3(%arg0: i32) -> (i32, i32) {
    %c0_i32 = arith.constant 0 : i32
    %c0_i32_0 = arith.constant 0 : i32
    %c0_i32_1 = arith.constant 0 : i32
    return %c0_i32, %c0_i32_0 : i32, i32
  }
  func.func @transform_4(%arg0: i32) -> (i32, i32) {
    %c0_i32 = arith.constant 0 : i32
    %c0_i32_0 = arith.constant 0 : i32
    %c0_i32_1 = arith.constant 0 : i32
    return %c0_i32, %c0_i32_0 : i32, i32
  }
  func.func @transform_5(%arg0: i32) -> (i32, i32) {
    %c0_i32 = arith.constant 0 : i32
    %c0_i32_0 = arith.constant 0 : i32
    %c0_i32_1 = arith.constant 0 : i32
    return %c0_i32, %c0_i32_0 : i32, i32
  }
  func.func @transform_6(%arg0: i32) -> (i32, i32) {
    %c0_i32 = arith.constant 0 : i32
    %c0_i32_0 = arith.constant 0 : i32
    %c0_i32_1 = arith.constant 0 : i32
    return %c0_i32, %c0_i32_0 : i32, i32
  }
  func.func @transform_7(%arg0: i32) -> (i32, i32, i32, i32) {
    %c0_i32 = arith.constant 0 : i32
    %c0_i32_0 = arith.constant 0 : i32
    %c0_i32_1 = arith.constant 0 : i32
    %c0_i32_2 = arith.constant 0 : i32
    return %arg0, %c0_i32, %c0_i32_0, %c0_i32_1 : i32, i32, i32, i32
  }
}

</mosaic_0001>

<llo_original>
// kernel: residual_forward.1
$region0: #{residual_forward.1}
  #allocation0 [shape = 'u32[]', space=smem, size = 0x4, offset = 0x4, fixed_abs, tag = 'smem constant byte address 0x4 - core index']
  #allocation1 [shape = 'u32[72,128]{1,0:T(1,128)}', space=vmem, size = 0x9000, scoped, tag = 'internal scratch']
  %s0 = inlined_call_operand.vmem [shape: f32[2,16,16,4], index: 0, kind: input, shape index: {}]
  %s1 = inlined_call_operand.vmem [shape: f32[36,4], index: 1, kind: input, shape index: {}]
  %s2 = inlined_call_operand.vmem [shape: f32[1,4], index: 2, kind: input, shape index: {}]
  %s3 = inlined_call_operand.vmem [shape: f32[1,4], index: 3, kind: input, shape index: {}]
  %s4 = inlined_call_operand.vmem [shape: f32[36,4], index: 4, kind: input, shape index: {}]
  %s5 = inlined_call_operand.vmem [shape: f32[1,4], index: 5, kind: input, shape index: {}]
  %s6 = inlined_call_operand.vmem [shape: f32[1,4], index: 6, kind: input, shape index: {}]
  %s7 = inlined_call_operand.vmem [shape: f32[2,16,16,4], index: 7, kind: output, shape index: {}]
  %s8 = sld [smem:[#allocation0]]
  $region61: #{residual_forward.1} parent=0
    _
  %s10 = ssub.s32 1, %s8
  %s11 = scalar_select 0, %s10, %s8
  loop: start=0, step=1, limit=4
  $region2: #{residual_forward.1} parent=0 // loop_pre_header
    _
  $region3: #{residual_forward.1} parent=0 // loop_header
    %s13 = sphi 0, %s17
    %p14 = scmp.ge.s32.totalorder %s13, 4
    %s23 = sphi 0, %s25
    %s26 = sphi 0, %s23
    %s27 = sphi 0, %s26
    %s43 = sphi 0, %s27
    %s47 = sphi 0, %s47
    %s49 = sphi 0, %s47
    %s50 = sphi 0, %s49
    %s64 = sphi 0, %s50
    %s68 = sphi 0, %s68
    %s70 = sphi 0, %s68
    %s71 = sphi 0, %s70
    %s85 = sphi 0, %s71
    %s89 = sphi 0, %s89
    %s91 = sphi 0, %s89
    %s92 = sphi 0, %s91
    %s106 = sphi 0, %s92
    %s110 = sphi 0, %s110
    %s112 = sphi 0, %s110
    %s113 = sphi 0, %s112
    %s127 = sphi 0, %s113
    %s131 = sphi 0, %s131
    %s133 = sphi 0, %s131
    %s134 = sphi 0, %s133
    %s148 = sphi 0, %s134
    %s152 = sphi 0, %s152
    %s154 = sphi 0, %s152
    %s155 = sphi 0, %s154
    %s169 = sphi 0, %s155
    %s175 = sphi 0, %s177
    %s178 = sphi 0, %s175
    %s179 = sphi 0, %s178
    %s195 = sphi 0, %s179
  $region4: #{residual_forward.1} parent=0 // loop_header_branch
    %16 = sbr.rel (%p14) target = $region8
  $region5: #{residual_forward.1} parent=0 // loop_body
    %s18 = ssub.s32 %s13, 1
    %s19 = ssub.s32 %s13, 2
    %s20 = sadd.s32 %s13, 1
    %s21 = ssub.s32 %s13, %s20
    %p22 = scmp.eq.s32.totalorder %s21, 0
    %s24 = sadd.s32 %s23, 1
    %s25 = scalar_select %p22, %s23, %s24
    %p28 = pneg %p22
    %p29 = scmp.eq.s32.totalorder %s13, 1
    %p30 = por %p28, %p29
    %p31 = scmp.ne.s32.totalorder %s23, %s26
    %p32 = scmp.eq.s32.totalorder %s13, 0
    %p33 = por %p31, %p32
    %p34 = scmp.ne.s32.totalorder %s23, %s26
    %p35 = scmp.eq.s32.totalorder %s18, 1
    %p36 = por %p34, %p35
    %p37 = scmp.ne.s32.totalorder %s26, %s27
    %p38 = scmp.eq.s32.totalorder %s18, 0
    %p39 = por %p37, %p38
    %p40 = scmp.ne.s32.totalorder %s26, %s27
    %p41 = scmp.eq.s32.totalorder %s19, 1
    %p42 = por %p40, %p41
    %p44 = scmp.ne.s32.totalorder %s27, %s43
    %p45 = scmp.eq.s32.totalorder %s19, 0
    %p46 = por %p44, %p45
    %s48 = sadd.s32 %s47, 1
    %p51 = scmp.eq.s32.totalorder %s13, 1
    %p52 = scmp.ne.s32.totalorder %s47, %s49
    %p53 = scmp.eq.s32.totalorder %s13, 0
    %p54 = por %p52, %p53
    %p55 = scmp.ne.s32.totalorder %s47, %s49
    %p56 = scmp.eq.s32.totalorder %s18, 1
    %p57 = por %p55, %p56
    %p58 = scmp.ne.s32.totalorder %s49, %s50
    %p59 = scmp.eq.s32.totalorder %s18, 0
    %p60 = por %p58, %p59
    %p61 = scmp.ne.s32.totalorder %s49, %s50
    %p62 = scmp.eq.s32.totalorder %s19, 1
    %p63 = por %p61, %p62
    %p65 = scmp.ne.s32.totalorder %s50, %s64
    %p66 = scmp.eq.s32.totalorder %s19, 0
    %p67 = por %p65, %p66
    %s69 = sadd.s32 %s68, 1
    %p72 = scmp.eq.s32.totalorder %s13, 1
    %p73 = scmp.ne.s32.totalorder %s68, %s70
    %p74 = scmp.eq.s32.totalorder %s13, 0
    %p75 = por %p73, %p74
    %p76 = scmp.ne.s32.totalorder %s68, %s70
    %p77 = scmp.eq.s32.totalorder %s18, 1
    %p78 = por %p76, %p77
    %p79 = scmp.ne.s32.totalorder %s70, %s71
    %p80 = scmp.eq.s32.totalorder %s18, 0
    %p81 = por %p79, %p80
    %p82 = scmp.ne.s32.totalorder %s70, %s71
    %p83 = scmp.eq.s32.totalorder %s19, 1
    %p84 = por %p82, %p83
    %p86 = scmp.ne.s32.totalorder %s71, %s85
    %p87 = scmp.eq.s32.totalorder %s19, 0
    %p88 = por %p86, %p87
    %s90 = sadd.s32 %s89, 1
    %p93 = scmp.eq.s32.totalorder %s13, 1
    %p94 = scmp.ne.s32.totalorder %s89, %s91
    %p95 = scmp.eq.s32.totalorder %s13, 0
    %p96 = por %p94, %p95
    %p97 = scmp.ne.s32.totalorder %s89, %s91
    %p98 = scmp.eq.s32.totalorder %s18, 1
    %p99 = por %p97, %p98
    %p100 = scmp.ne.s32.totalorder %s91, %s92
    %p101 = scmp.eq.s32.totalorder %s18, 0
    %p102 = por %p100, %p101
    %p103 = scmp.ne.s32.totalorder %s91, %s92
    %p104 = scmp.eq.s32.totalorder %s19, 1
    %p105 = por %p103, %p104
    %p107 = scmp.ne.s32.totalorder %s92, %s106
    %p108 = scmp.eq.s32.totalorder %s19, 0
    %p109 = por %p107, %p108
    %s111 = sadd.s32 %s110, 1
    %p114 = scmp.eq.s32.totalorder %s13, 1
    %p115 = scmp.ne.s32.totalorder %s110, %s112
    %p116 = scmp.eq.s32.totalorder %s13, 0
    %p117 = por %p115, %p116
    %p118 = scmp.ne.s32.totalorder %s110, %s112
    %p119 = scmp.eq.s32.totalorder %s18, 1
    %p120 = por %p118, %p119
    %p121 = scmp.ne.s32.totalorder %s112, %s113
    %p122 = scmp.eq.s32.totalorder %s18, 0
    %p123 = por %p121, %p122
    %p124 = scmp.ne.s32.totalorder %s112, %s113
    %p125 = scmp.eq.s32.totalorder %s19, 1
    %p126 = por %p124, %p125
    %p128 = scmp.ne.s32.totalorder %s113, %s127
    %p129 = scmp.eq.s32.totalorder %s19, 0
    %p130 = por %p128, %p129
    %s132 = sadd.s32 %s131, 1
    %p135 = scmp.eq.s32.totalorder %s13, 1
    %p136 = scmp.ne.s32.totalorder %s131, %s133
    %p137 = scmp.eq.s32.totalorder %s13, 0
    %p138 = por %p136, %p137
    %p139 = scmp.ne.s32.totalorder %s131, %s133
    %p140 = scmp.eq.s32.totalorder %s18, 1
    %p141 = por %p139, %p140
    %p142 = scmp.ne.s32.totalorder %s133, %s134
    %p143 = scmp.eq.s32.totalorder %s18, 0
    %p144 = por %p142, %p143
    %p145 = scmp.ne.s32.totalorder %s133, %s134
    %p146 = scmp.eq.s32.totalorder %s19, 1
    %p147 = por %p145, %p146
    %p149 = scmp.ne.s32.totalorder %s134, %s148
    %p150 = scmp.eq.s32.totalorder %s19, 0
    %p151 = por %p149, %p150
    %s153 = sadd.s32 %s152, 1
    %p156 = scmp.eq.s32.totalorder %s13, 1
    %p157 = scmp.ne.s32.totalorder %s152, %s154
    %p158 = scmp.eq.s32.totalorder %s13, 0
    %p159 = por %p157, %p158
    %p160 = scmp.ne.s32.totalorder %s152, %s154
    %p161 = scmp.eq.s32.totalorder %s18, 1
    %p162 = por %p160, %p161
    %p163 = scmp.ne.s32.totalorder %s154, %s155
    %p164 = scmp.eq.s32.totalorder %s18, 0
    %p165 = por %p163, %p164
    %p166 = scmp.ne.s32.totalorder %s154, %s155
    %p167 = scmp.eq.s32.totalorder %s19, 1
    %p168 = por %p166, %p167
    %p170 = scmp.ne.s32.totalorder %s155, %s169
    %p171 = scmp.eq.s32.totalorder %s19, 0
    %p172 = por %p170, %p171
    %s173 = ssub.s32 %s13, %s20
    %p174 = scmp.eq.s32.totalorder %s173, 0
    %s176 = sadd.s32 %s175, 1
    %s177 = scalar_select %p174, %s175, %s176
    %p180 = pneg %p174
    %p181 = scmp.eq.s32.totalorder %s13, 1
    %p182 = por %p180, %p181
    %p183 = scmp.ne.s32.totalorder %s175, %s178
    %p184 = scmp.eq.s32.totalorder %s13, 0
    %p185 = por %p183, %p184
    %p186 = scmp.ne.s32.totalorder %s175, %s178
    %p187 = scmp.eq.s32.totalorder %s18, 1
    %p188 = por %p186, %p187
    %p189 = scmp.ne.s32.totalorder %s178, %s179
    %p190 = scmp.eq.s32.totalorder %s18, 0
    %p191 = por %p189, %p190
    %p192 = scmp.ne.s32.totalorder %s178, %s179
    %p193 = scmp.eq.s32.totalorder %s19, 1
    %p194 = por %p192, %p193
    %p196 = scmp.ne.s32.totalorder %s179, %s195
    %p197 = scmp.eq.s32.totalorder %s19, 0
    %p198 = por %p196, %p197
    %p199 = scmp.le.s32.totalorder 1, %s13
    %p200 = scmp.lt.s32.totalorder %s13, 3
    %p201 = pnand %p199, %p200
    %p202 = pneg %p201
    // Predicated region
    $region9: #{residual_forward.1} parent=5 // pred_check
      _
    $region10: #{residual_forward.1} parent=5 // pred_check_branch
      %204 = sbr.rel (%p201) target = $region12
    $region11: #{residual_forward.1} parent=5 // pred_region
      %s205 = ssub.s32 %s13, 1
      // Predicated region
      $region13: #{residual_forward.1} parent=11 // pred_check
        %p206 = pneg %p60
      $region14: #{residual_forward.1} parent=11 // pred_check_branch
        %208 = sbr.rel (%p206) target = $region16
      $region15: #{residual_forward.1} parent=11 // pred_region
        _
      $region16: #{residual_forward.1} parent=11 // pred_fallthru
        _
      // Predicated region
      $region17: #{residual_forward.1} parent=11 // pred_check
        %p209 = pneg %p81
      $region18: #{residual_forward.1} parent=11 // pred_check_branch
        %211 = sbr.rel (%p209) target = $region20
      $region19: #{residual_forward.1} parent=11 // pred_region
        _
      $region20: #{residual_forward.1} parent=11 // pred_fallthru
        _
      // Predicated region
      $region21: #{residual_forward.1} parent=11 // pred_check
        %p212 = pneg %p102
      $region22: #{residual_forward.1} parent=11 // pred_check_branch
        %214 = sbr.rel (%p212) target = $region24
      $region23: #{residual_forward.1} parent=11 // pred_region
        _
      $region24: #{residual_forward.1} parent=11 // pred_fallthru
        _
      // Predicated region
      $region25: #{residual_forward.1} parent=11 // pred_check
        %p215 = pneg %p123
      $region26: #{residual_forward.1} parent=11 // pred_check_branch
        %217 = sbr.rel (%p215) target = $region28
      $region27: #{residual_forward.1} parent=11 // pred_region
        _
      $region28: #{residual_forward.1} parent=11 // pred_fallthru
        _
      // Predicated region
      $region29: #{residual_forward.1} parent=11 // pred_check
        %p218 = pneg %p144
      $region30: #{residual_forward.1} parent=11 // pred_check_branch
        %220 = sbr.rel (%p218) target = $region32
      $region31: #{residual_forward.1} parent=11 // pred_region
        _
      $region32: #{residual_forward.1} parent=11 // pred_fallthru
        _
      // Predicated region
      $region33: #{residual_forward.1} parent=11 // pred_check
        %p221 = pneg %p165
      $region34: #{residual_forward.1} parent=11 // pred_check_branch
        %223 = sbr.rel (%p221) target = $region36
      $region35: #{residual_forward.1} parent=11 // pred_region
        _
      $region36: #{residual_forward.1} parent=11 // pred_fallthru
        _
    $region12: #{residual_forward.1} parent=5 // pred_fallthru
      _
    %p224 = scmp.lt.s32.totalorder %s13, 2
    // Predicated region
    $region37: #{residual_forward.1} parent=5 // pred_check
      %p225 = pneg %p224
    $region38: #{residual_forward.1} parent=5 // pred_check_branch
      %227 = sbr.rel (%p225) target = $region40
    $region39: #{residual_forward.1} parent=5 // pred_region
      // Predicated region
      $region41: #{residual_forward.1} parent=39 // pred_check
        %p228 = pneg %p33
      $region42: #{residual_forward.1} parent=39 // pred_check_branch
        %230 = sbr.rel (%p228) target = $region44
      $region43: #{residual_forward.1} parent=39 // pred_region
        %p231 = scmp.lt.s32.totalorder %s13, 1
        %s232 = scalar_select %p231, %s13, 1
        %s233 = smul.addr %s232, 32
        %s234 = smul.addr %s233, 8
        %s235 = scalar_lea.vmem %s0, %s234
      $region44: #{residual_forward.1} parent=39 // pred_fallthru
        _
    $region40: #{residual_forward.1} parent=5 // pred_fallthru
      _
    %p236 = scmp.le.s32.totalorder 1, %s13
    %p237 = scmp.lt.s32.totalorder %s13, 3
    %p238 = pnand %p236, %p237
    %p239 = pneg %p238
    // Predicated region
    $region45: #{residual_forward.1} parent=5 // pred_check
      _
    $region46: #{residual_forward.1} parent=5 // pred_check_branch
      %241 = sbr.rel (%p238) target = $region48
    $region47: #{residual_forward.1} parent=5 // pred_region
      %s242 = ssub.s32 %s13, 1
      %p243 = scmp.lt.s32.totalorder %s18, 1
      %s244 = scalar_select %p243, %s18, 1
      %s245 = smul.addr %s244, 32
      %s246 = smul.addr %s245, 8
      %s247 = scalar_lea.vmem %s0, %s246
      %p248 = pneg %p39
      %p249 = pneg %p36
      %p250 = pneg %p60
      %p251 = pneg %p57
      %p252 = pneg %p81
      %p253 = pneg %p78
      %p254 = pneg %p102
      %p255 = pneg %p99
      %p256 = pneg %p123
      %p257 = pneg %p120
      %p258 = pneg %p144
      %p259 = pneg %p141
      %p260 = pneg %p165
      %p261 = pneg %p162
      %p262 = pneg %p191
      %p263 = pneg %p188
      %p264 = scmp.lt.s32.totalorder %s18, 1
      %s265 = scalar_select %p264, %s18, 1
      %s266 = smul.addr %s265, 32
      %s267 = smul.addr %s266, 8
      %s268 = scalar_lea.vmem %s7, %s267
      %p269 = scmp.lt.s32.totalorder %s18, 1
      %s270 = scalar_select %p269, %s18, 1
      %s271 = smul.addr %s270, 32
      %s272 = smul.addr %s271, 8
      %s273 = scalar_lea.vmem %s0, %s272
      %p274 = scmp.lt.s32.totalorder %s18, 1
      %s275 = scalar_select %p274, %s18, 1
      %s276 = smul.addr %s275, 32
      %s277 = smul.addr %s276, 8
      %s278 = scalar_lea.vmem %s7, %s277
      %v279 = vld [vmem:[%s273] sm:$0xff]
      %v280 = vld [vmem:[%s273 + $0x8] sm:$0xff]
      %v281 = vld [vmem:[%s273 + $0x10] sm:$0xff]
      %v282 = vld [vmem:[%s273 + $0x18] sm:$0xff]
      %v283 = vld [vmem:[%s273 + $0x20] sm:$0xff]
      %v284 = vld [vmem:[%s273 + $0x28] sm:$0xff]
      %v285 = vld [vmem:[%s273 + $0x30] sm:$0xff]
      %v286 = vld [vmem:[%s273 + $0x38] sm:$0xff]
      %v287 = vld [vmem:[%s273 + $0x40] sm:$0xff]
      %v288 = vld [vmem:[%s273 + $0x48] sm:$0xff]
      %v289 = vld [vmem:[%s273 + $0x50] sm:$0xff]
      %v290 = vld [vmem:[%s273 + $0x58] sm:$0xff]
      %v291 = vld [vmem:[%s273 + $0x60] sm:$0xff]
      %v292 = vld [vmem:[%s273 + $0x68] sm:$0xff]
      %v293 = vld [vmem:[%s273 + $0x70] sm:$0xff]
      %v294 = vld [vmem:[%s273 + $0x78] sm:$0xff]
      %v295 = vld [vmem:[%s273 + $0x80] sm:$0xff]
      %v296 = vld [vmem:[%s273 + $0x88] sm:$0xff]
      %v297 = vld [vmem:[%s273 + $0x90] sm:$0xff]
      %v298 = vld [vmem:[%s273 + $0x98] sm:$0xff]
      %v299 = vld [vmem:[%s273 + $0xa0] sm:$0xff]
      %v300 = vld [vmem:[%s273 + $0xa8] sm:$0xff]
      %v301 = vld [vmem:[%s273 + $0xb0] sm:$0xff]
      %v302 = vld [vmem:[%s273 + $0xb8] sm:$0xff]
      %v303 = vld [vmem:[%s273 + $0xc0] sm:$0xff]
      %v304 = vld [vmem:[%s273 + $0xc8] sm:$0xff]
      %v305 = vld [vmem:[%s273 + $0xd0] sm:$0xff]
      %v306 = vld [vmem:[%s273 + $0xd8] sm:$0xff]
      %v307 = vld [vmem:[%s273 + $0xe0] sm:$0xff]
      %v308 = vld [vmem:[%s273 + $0xe8] sm:$0xff]
      %v309 = vld [vmem:[%s273 + $0xf0] sm:$0xff]
      %v310 = vld [vmem:[%s273 + $0xf8] sm:$0xff]
      %v327 = vrot.slane %v281, 1
      %v328 = vrot.slane %v279, 1
      %v329 = vrot.slane %v283, 1
      %v330 = vrot.slane %v285, 1
      %v331 = vrot.slane %v287, 1
      %v332 = vrot.slane %v289, 1
      %v333 = vrot.slane %v291, 1
      %v334 = vrot.slane %v293, 1
      %v335 = vrot.slane %v295, 1
      %v336 = vrot.slane %v297, 1
      %v337 = vrot.slane %v299, 1
      %v338 = vrot.slane %v301, 1
      %v339 = vrot.slane %v303, 1
      %v340 = vrot.slane %v305, 1
      %v341 = vrot.slane %v307, 1
      %v342 = vrot.slane %v309, 1
      %vm375 = vcmask 1040384
      %v376 = vrot.slane %v281, 7
      %v377 = vrot.slane %v282, 7
      %v378 = vsel %vm375, %v376, %v377
      %v379 = vrot.slane %v279, 7
      %v380 = vrot.slane %v280, 7
      %v381 = vsel %vm375, %v379, %v380
      %v382 = vrot.slane %v283, 7
      %v383 = vrot.slane %v284, 7
      %v384 = vsel %vm375, %v382, %v383
      %v385 = vrot.slane %v285, 7
      %v386 = vrot.slane %v286, 7
      %v387 = vsel %vm375, %v385, %v386
      %v388 = vrot.slane %v287, 7
      %v389 = vrot.slane %v288, 7
      %v390 = vsel %vm375, %v388, %v389
      %v391 = vrot.slane %v289, 7
      %v392 = vrot.slane %v290, 7
      %v393 = vsel %vm375, %v391, %v392
      %v394 = vrot.slane %v291, 7
      %v395 = vrot.slane %v292, 7
      %v396 = vsel %vm375, %v394, %v395
      %v397 = vrot.slane %v293, 7
      %v398 = vrot.slane %v294, 7
      %v399 = vsel %vm375, %v397, %v398
      %v400 = vrot.slane %v295, 7
      %v401 = vrot.slane %v296, 7
      %v402 = vsel %vm375, %v400, %v401
      %v403 = vrot.slane %v297, 7
      %v404 = vrot.slane %v298, 7
      %v405 = vsel %vm375, %v403, %v404
      %v406 = vrot.slane %v299, 7
      %v407 = vrot.slane %v300, 7
      %v408 = vsel %vm375, %v406, %v407
      %v409 = vrot.slane %v301, 7
      %v410 = vrot.slane %v302, 7
      %v411 = vsel %vm375, %v409, %v410
      %v412 = vrot.slane %v303, 7
      %v413 = vrot.slane %v304, 7
      %v414 = vsel %vm375, %v412, %v413
      %v415 = vrot.slane %v305, 7
      %v416 = vrot.slane %v306, 7
      %v417 = vsel %vm375, %v415, %v416
      %v418 = vrot.slane %v307, 7
      %v419 = vrot.slane %v308, 7
      %v420 = vsel %vm375, %v418, %v419
      %v421 = vrot.slane %v309, 7
      %v422 = vrot.slane %v310, 7
      %v423 = vsel %vm375, %v421, %v422
      %v471 = vrot.slane %v282, 5
      %v472 = vrot.slane %v280, 5
      %v473 = vrot.slane %v284, 5
      %v474 = vrot.slane %v286, 5
      %v475 = vrot.slane %v288, 5
      %v476 = vrot.slane %v290, 5
      %v477 = vrot.slane %v292, 5
      %v478 = vrot.slane %v294, 5
      %v479 = vrot.slane %v296, 5
      %v480 = vrot.slane %v298, 5
      %v481 = vrot.slane %v300, 5
      %v482 = vrot.slane %v302, 5
      %v483 = vrot.slane %v304, 5
      %v484 = vrot.slane %v306, 5
      %v485 = vrot.slane %v308, 5
      %v486 = vrot.slane %v310, 5
      %v503 = vsel %vm375, %v327, %v376
      %v504 = vsel %vm375, %v328, %v379
      %v505 = vsel %vm375, %v329, %v382
      %v506 = vsel %vm375, %v330, %v385
      %v507 = vsel %vm375, %v331, %v388
      %v508 = vsel %vm375, %v332, %v391
      %v509 = vsel %vm375, %v333, %v394
      %v510 = vsel %vm375, %v334, %v397
      %v511 = vsel %vm375, %v335, %v400
      %v512 = vsel %vm375, %v336, %v403
      %v513 = vsel %vm375, %v337, %v406
      %v514 = vsel %vm375, %v338, %v409
      %v515 = vsel %vm375, %v339, %v412
      %v516 = vsel %vm375, %v340, %v415
      %v517 = vsel %vm375, %v341, %v418
      %v518 = vsel %vm375, %v342, %v421
      %v519 = vsel %vm375, %v377, %v471
      %v520 = vsel %vm375, %v380, %v472
      %v521 = vsel %vm375, %v383, %v473
      %v522 = vsel %vm375, %v386, %v474
      %v523 = vsel %vm375, %v389, %v475
      %v524 = vsel %vm375, %v392, %v476
      %v525 = vsel %vm375, %v395, %v477
      %v526 = vsel %vm375, %v398, %v478
      %v527 = vsel %vm375, %v401, %v479
      %v528 = vsel %vm375, %v404, %v480
      %v529 = vsel %vm375, %v407, %v481
      %v530 = vsel %vm375, %v410, %v482
      %v531 = vsel %vm375, %v413, %v483
      %v532 = vsel %vm375, %v416, %v484
      %v533 = vsel %vm375, %v419, %v485
      %v534 = vsel %vm375, %v422, %v486
      %vm565 = vcmask 1046528
      %v566 = vrot.slane %v503, 1
      %v567 = vrot.slane %v378, 1
      %v568 = vsel %vm565, %v566, %v567
      %v569 = vrot.slane %v519, 1
      %v570 = vsel %vm565, %v567, %v569
      %v571 = vrot.slane %v504, 1
      %v572 = vrot.slane %v381, 1
      %v573 = vsel %vm565, %v571, %v572
      %v574 = vrot.slane %v520, 1
      %v575 = vsel %vm565, %v572, %v574
      %v576 = vrot.slane %v505, 1
      %v577 = vrot.slane %v384, 1
      %v578 = vsel %vm565, %v576, %v577
      %v579 = vrot.slane %v521, 1
      %v580 = vsel %vm565, %v577, %v579
      %v581 = vrot.slane %v506, 1
      %v582 = vrot.slane %v387, 1
      %v583 = vsel %vm565, %v581, %v582
      %v584 = vrot.slane %v522, 1
      %v585 = vsel %vm565, %v582, %v584
      %v586 = vrot.slane %v507, 1
      %v587 = vrot.slane %v390, 1
      %v588 = vsel %vm565, %v586, %v587
      %v589 = vrot.slane %v523, 1
      %v590 = vsel %vm565, %v587, %v589
      %v591 = vrot.slane %v508, 1
      %v592 = vrot.slane %v393, 1
      %v593 = vsel %vm565, %v591, %v592
      %v594 = vrot.slane %v524, 1
      %v595 = vsel %vm565, %v592, %v594
      %v596 = vrot.slane %v509, 1
      %v597 = vrot.slane %v396, 1
      %v598 = vsel %vm565, %v596, %v597
      %v599 = vrot.slane %v525, 1
      %v600 = vsel %vm565, %v597, %v599
      %v601 = vrot.slane %v510, 1
      %v602 = vrot.slane %v399, 1
      %v603 = vsel %vm565, %v601, %v602
      %v604 = vrot.slane %v526, 1
      %v605 = vsel %vm565, %v602, %v604
      %v606 = vrot.slane %v511, 1
      %v607 = vrot.slane %v402, 1
      %v608 = vsel %vm565, %v606, %v607
      %v609 = vrot.slane %v527, 1
      %v610 = vsel %vm565, %v607, %v609
      %v611 = vrot.slane %v512, 1
      %v612 = vrot.slane %v405, 1
      %v613 = vsel %vm565, %v611, %v612
      %v614 = vrot.slane %v528, 1
      %v615 = vsel %vm565, %v612, %v614
      %v616 = vrot.slane %v513, 1
      %v617 = vrot.slane %v408, 1
      %v618 = vsel %vm565, %v616, %v617
      %v619 = vrot.slane %v529, 1
      %v620 = vsel %vm565, %v617, %v619
      %v621 = vrot.slane %v514, 1
      %v622 = vrot.slane %v411, 1
      %v623 = vsel %vm565, %v621, %v622
      %v624 = vrot.slane %v530, 1
      %v625 = vsel %vm565, %v622, %v624
      %v626 = vrot.slane %v515, 1
      %v627 = vrot.slane %v414, 1
      %v628 = vsel %vm565, %v626, %v627
      %v629 = vrot.slane %v531, 1
      %v630 = vsel %vm565, %v627, %v629
      %v631 = vrot.slane %v516, 1
      %v632 = vrot.slane %v417, 1
      %v633 = vsel %vm565, %v631, %v632
      %v634 = vrot.slane %v532, 1
      %v635 = vsel %vm565, %v632, %v634
      %v636 = vrot.slane %v517, 1
      %v637 = vrot.slane %v420, 1
      %v638 = vsel %vm565, %v636, %v637
      %v639 = vrot.slane %v533, 1
      %v640 = vsel %vm565, %v637, %v639
      %vm641 = vcmask 1045504
      %v642 = vrot.slane %v503, 2
      %v643 = vrot.slane %v378, 2
      %v644 = vsel %vm641, %v642, %v643
      %v645 = vrot.slane %v519, 2
      %v646 = vsel %vm641, %v643, %v645
      %v647 = vrot.slane %v504, 2
      %v648 = vrot.slane %v381, 2
      %v649 = vsel %vm641, %v647, %v648
      %v650 = vrot.slane %v520, 2
      %v651 = vsel %vm641, %v648, %v650
      %v652 = vrot.slane %v505, 2
      %v653 = vrot.slane %v384, 2
      %v654 = vsel %vm641, %v652, %v653
      %v655 = vrot.slane %v521, 2
      %v656 = vsel %vm641, %v653, %v655
      %v657 = vrot.slane %v506, 2
      %v658 = vrot.slane %v387, 2
      %v659 = vsel %vm641, %v657, %v658
      %v660 = vrot.slane %v522, 2
      %v661 = vsel %vm641, %v658, %v660
      %v662 = vrot.slane %v507, 2
      %v663 = vrot.slane %v390, 2
      %v664 = vsel %vm641, %v662, %v663
      %v665 = vrot.slane %v523, 2
      %v666 = vsel %vm641, %v663, %v665
      %v667 = vrot.slane %v508, 2
      %v668 = vrot.slane %v393, 2
      %v669 = vsel %vm641, %v667, %v668
      %v670 = vrot.slane %v524, 2
      %v671 = vsel %vm641, %v668, %v670
      %v672 = vrot.slane %v509, 2
      %v673 = vrot.slane %v396, 2
      %v674 = vsel %vm641, %v672, %v673
      %v675 = vrot.slane %v525, 2
      %v676 = vsel %vm641, %v673, %v675
      %v677 = vrot.slane %v510, 2
      %v678 = vrot.slane %v399, 2
      %v679 = vsel %vm641, %v677, %v678
      %v680 = vrot.slane %v526, 2
      %v681 = vsel %vm641, %v678, %v680
      %v682 = vrot.slane %v511, 2
      %v683 = vrot.slane %v402, 2
      %v684 = vsel %vm641, %v682, %v683
      %v685 = vrot.slane %v527, 2
      %v686 = vsel %vm641, %v683, %v685
      %v687 = vrot.slane %v512, 2
      %v688 = vrot.slane %v405, 2
      %v689 = vsel %vm641, %v687, %v688
      %v690 = vrot.slane %v528, 2
      %v691 = vsel %vm641, %v688, %v690
      %v692 = vrot.slane %v513, 2
      %v693 = vrot.slane %v408, 2
      %v694 = vsel %vm641, %v692, %v693
      %v695 = vrot.slane %v529, 2
      %v696 = vsel %vm641, %v693, %v695
      %v697 = vrot.slane %v514, 2
      %v698 = vrot.slane %v411, 2
      %v699 = vsel %vm641, %v697, %v698
      %v700 = vrot.slane %v530, 2
      %v701 = vsel %vm641, %v698, %v700
      %v702 = vrot.slane %v515, 2
      %v703 = vrot.slane %v414, 2
      %v704 = vsel %vm641, %v702, %v703
      %v705 = vrot.slane %v531, 2
      %v706 = vsel %vm641, %v703, %v705
      %v707 = vrot.slane %v516, 2
      %v708 = vrot.slane %v417, 2
      %v709 = vsel %vm641, %v707, %v708
      %v710 = vrot.slane %v532, 2
      %v711 = vsel %vm641, %v708, %v710
      %v712 = vrot.slane %v517, 2
      %v713 = vrot.slane %v420, 2
      %v714 = vsel %vm641, %v712, %v713
      %v715 = vrot.slane %v533, 2
      %v716 = vsel %vm641, %v713, %v715
      %v719 = vrot.slane %v518, 1
      %v720 = vrot.slane %v423, 1
      %v721 = vsel %vm565, %v719, %v720
      %v722 = vrot.slane %v534, 1
      %v723 = vsel %vm565, %v720, %v722
      %v724 = vrot.slane %v518, 2
      %v725 = vrot.slane %v423, 2
      %v726 = vsel %vm641, %v724, %v725
      %v727 = vrot.slane %v534, 2
      %v728 = vsel %vm641, %v725, %v727
      %729 = vrot.lane.b32.xlu0 %v568, 4
      %v730 = vpop.permute.xlu0 %729
      %731 = vrot.lane.b32.xlu0 %v570, 4
      %v732 = vpop.permute.xlu0 %731
      %733 = vrot.lane.b32.xlu0 %v573, 4
      %v734 = vpop.permute.xlu0 %733
      %735 = vrot.lane.b32.xlu0 %v575, 4
      %v736 = vpop.permute.xlu0 %735
      %737 = vrot.lane.b32.xlu0 %v578, 4
      %v738 = vpop.permute.xlu0 %737
      %739 = vrot.lane.b32.xlu0 %v580, 4
      %v740 = vpop.permute.xlu0 %739
      %741 = vrot.lane.b32.xlu0 %v583, 4
      %v742 = vpop.permute.xlu0 %741
      %743 = vrot.lane.b32.xlu0 %v585, 4
      %v744 = vpop.permute.xlu0 %743
      %745 = vrot.lane.b32.xlu0 %v588, 4
      %v746 = vpop.permute.xlu0 %745
      %747 = vrot.lane.b32.xlu0 %v590, 4
      %v748 = vpop.permute.xlu0 %747
      %749 = vrot.lane.b32.xlu0 %v593, 4
      %v750 = vpop.permute.xlu0 %749
      %751 = vrot.lane.b32.xlu0 %v595, 4
      %v752 = vpop.permute.xlu0 %751
      %753 = vrot.lane.b32.xlu0 %v598, 4
      %v754 = vpop.permute.xlu0 %753
      %755 = vrot.lane.b32.xlu0 %v600, 4
      %v756 = vpop.permute.xlu0 %755
      %757 = vrot.lane.b32.xlu0 %v603, 4
      %v758 = vpop.permute.xlu0 %757
      %759 = vrot.lane.b32.xlu0 %v605, 4
      %v760 = vpop.permute.xlu0 %759
      %761 = vrot.lane.b32.xlu0 %v608, 4
      %v762 = vpop.permute.xlu0 %761
      %763 = vrot.lane.b32.xlu0 %v610, 4
      %v764 = vpop.permute.xlu0 %763
      %765 = vrot.lane.b32.xlu0 %v613, 4
      %v766 = vpop.permute.xlu0 %765
      %767 = vrot.lane.b32.xlu0 %v615, 4
      %v768 = vpop.permute.xlu0 %767
      %769 = vrot.lane.b32.xlu0 %v618, 4
      %v770 = vpop.permute.xlu0 %769
      %771 = vrot.lane.b32.xlu0 %v620, 4
      %v772 = vpop.permute.xlu0 %771
      %773 = vrot.lane.b32.xlu0 %v623, 4
      %v774 = vpop.permute.xlu0 %773
      %775 = vrot.lane.b32.xlu0 %v625, 4
      %v776 = vpop.permute.xlu0 %775
      %777 = vrot.lane.b32.xlu0 %v628, 4
      %v778 = vpop.permute.xlu0 %777
      %779 = vrot.lane.b32.xlu0 %v630, 4
      %v780 = vpop.permute.xlu0 %779
      %781 = vrot.lane.b32.xlu0 %v633, 4
      %v782 = vpop.permute.xlu0 %781
      %783 = vrot.lane.b32.xlu0 %v635, 4
      %v784 = vpop.permute.xlu0 %783
      %785 = vrot.lane.b32.xlu0 %v638, 4
      %v786 = vpop.permute.xlu0 %785
      %787 = vrot.lane.b32.xlu0 %v640, 4
      %v788 = vpop.permute.xlu0 %787
      %819 = vrot.lane.b32.xlu0 %v644, 8
      %v820 = vpop.permute.xlu0 %819
      %821 = vrot.lane.b32.xlu0 %v646, 8
      %v822 = vpop.permute.xlu0 %821
      %823 = vrot.lane.b32.xlu0 %v649, 8
      %v824 = vpop.permute.xlu0 %823
      %825 = vrot.lane.b32.xlu0 %v651, 8
      %v826 = vpop.permute.xlu0 %825
      %827 = vrot.lane.b32.xlu0 %v654, 8
      %v828 = vpop.permute.xlu0 %827
      %829 = vrot.lane.b32.xlu0 %v656, 8
      %v830 = vpop.permute.xlu0 %829
      %831 = vrot.lane.b32.xlu0 %v659, 8
      %v832 = vpop.permute.xlu0 %831
      %833 = vrot.lane.b32.xlu0 %v661, 8
      %v834 = vpop.permute.xlu0 %833
      %835 = vrot.lane.b32.xlu0 %v664, 8
      %v836 = vpop.permute.xlu0 %835
      %837 = vrot.lane.b32.xlu0 %v666, 8
      %v838 = vpop.permute.xlu0 %837
      %839 = vrot.lane.b32.xlu0 %v669, 8
      %v840 = vpop.permute.xlu0 %839
      %841 = vrot.lane.b32.xlu0 %v671, 8
      %v842 = vpop.permute.xlu0 %841
      %843 = vrot.lane.b32.xlu0 %v674, 8
      %v844 = vpop.permute.xlu0 %843
      %845 = vrot.lane.b32.xlu0 %v676, 8
      %v846 = vpop.permute.xlu0 %845
      %847 = vrot.lane.b32.xlu0 %v679, 8
      %v848 = vpop.permute.xlu0 %847
      %849 = vrot.lane.b32.xlu0 %v681, 8
      %v850 = vpop.permute.xlu0 %849
      %851 = vrot.lane.b32.xlu0 %v684, 8
      %v852 = vpop.permute.xlu0 %851
      %853 = vrot.lane.b32.xlu0 %v686, 8
      %v854 = vpop.permute.xlu0 %853
      %855 = vrot.lane.b32.xlu0 %v689, 8
      %v856 = vpop.permute.xlu0 %855
      %857 = vrot.lane.b32.xlu0 %v691, 8
      %v858 = vpop.permute.xlu0 %857
      %859 = vrot.lane.b32.xlu0 %v694, 8
      %v860 = vpop.permute.xlu0 %859
      %861 = vrot.lane.b32.xlu0 %v696, 8
      %v862 = vpop.permute.xlu0 %861
      %863 = vrot.lane.b32.xlu0 %v699, 8
      %v864 = vpop.permute.xlu0 %863
      %865 = vrot.lane.b32.xlu0 %v701, 8
      %v866 = vpop.permute.xlu0 %865
      %867 = vrot.lane.b32.xlu0 %v704, 8
      %v868 = vpop.permute.xlu0 %867
      %869 = vrot.lane.b32.xlu0 %v706, 8
      %v870 = vpop.permute.xlu0 %869
      %871 = vrot.lane.b32.xlu0 %v709, 8
      %v872 = vpop.permute.xlu0 %871
      %873 = vrot.lane.b32.xlu0 %v711, 8
      %v874 = vpop.permute.xlu0 %873
      %875 = vrot.lane.b32.xlu0 %v714, 8
      %v876 = vpop.permute.xlu0 %875
      %877 = vrot.lane.b32.xlu0 %v716, 8
      %v878 = vpop.permute.xlu0 %877
      %909 = vrot.lane.b32.xlu0 %v504, 12
      %v910 = vpop.permute.xlu0 %909
      %911 = vrot.lane.b32.xlu0 %v381, 12
      %v912 = vpop.permute.xlu0 %911
      %913 = vrot.lane.b32.xlu0 %v503, 12
      %v914 = vpop.permute.xlu0 %913
      %915 = vrot.lane.b32.xlu0 %v378, 12
      %v916 = vpop.permute.xlu0 %915
      %917 = vrot.lane.b32.xlu0 %v505, 12
      %v918 = vpop.permute.xlu0 %917
      %919 = vrot.lane.b32.xlu0 %v384, 12
      %v920 = vpop.permute.xlu0 %919
      %921 = vrot.lane.b32.xlu0 %v506, 12
      %v922 = vpop.permute.xlu0 %921
      %923 = vrot.lane.b32.xlu0 %v387, 12
      %v924 = vpop.permute.xlu0 %923
      %925 = vrot.lane.b32.xlu0 %v507, 12
      %v926 = vpop.permute.xlu0 %925
      %927 = vrot.lane.b32.xlu0 %v390, 12
      %v928 = vpop.permute.xlu0 %927
      %929 = vrot.lane.b32.xlu0 %v508, 12
      %v930 = vpop.permute.xlu0 %929
      %931 = vrot.lane.b32.xlu0 %v393, 12
      %v932 = vpop.permute.xlu0 %931
      %933 = vrot.lane.b32.xlu0 %v509, 12
      %v934 = vpop.permute.xlu0 %933
      %935 = vrot.lane.b32.xlu0 %v396, 12
      %v936 = vpop.permute.xlu0 %935
      %937 = vrot.lane.b32.xlu0 %v510, 12
      %v938 = vpop.permute.xlu0 %937
      %939 = vrot.lane.b32.xlu0 %v399, 12
      %v940 = vpop.permute.xlu0 %939
      %941 = vrot.lane.b32.xlu0 %v511, 12
      %v942 = vpop.permute.xlu0 %941
      %943 = vrot.lane.b32.xlu0 %v402, 12
      %v944 = vpop.permute.xlu0 %943
      %945 = vrot.lane.b32.xlu0 %v512, 12
      %v946 = vpop.permute.xlu0 %945
      %947 = vrot.lane.b32.xlu0 %v405, 12
      %v948 = vpop.permute.xlu0 %947
      %949 = vrot.lane.b32.xlu0 %v513, 12
      %v950 = vpop.permute.xlu0 %949
      %951 = vrot.lane.b32.xlu0 %v408, 12
      %v952 = vpop.permute.xlu0 %951
      %953 = vrot.lane.b32.xlu0 %v514, 12
      %v954 = vpop.permute.xlu0 %953
      %955 = vrot.lane.b32.xlu0 %v411, 12
      %v956 = vpop.permute.xlu0 %955
      %957 = vrot.lane.b32.xlu0 %v515, 12
      %v958 = vpop.permute.xlu0 %957
      %959 = vrot.lane.b32.xlu0 %v414, 12
      %v960 = vpop.permute.xlu0 %959
      %961 = vrot.lane.b32.xlu0 %v516, 12
      %v962 = vpop.permute.xlu0 %961
      %963 = vrot.lane.b32.xlu0 %v417, 12
      %v964 = vpop.permute.xlu0 %963
      %965 = vrot.lane.b32.xlu0 %v517, 12
      %v966 = vpop.permute.xlu0 %965
      %967 = vrot.lane.b32.xlu0 %v420, 12
      %v968 = vpop.permute.xlu0 %967
      %969 = vrot.lane.b32.xlu0 %v518, 12
      %v970 = vpop.permute.xlu0 %969
      %971 = vrot.lane.b32.xlu0 %v423, 12
      %v972 = vpop.permute.xlu0 %971
      %1005 = vrot.lane.b32.xlu0 %v573, 16
      %v1006 = vpop.permute.xlu0 %1005
      %1007 = vrot.lane.b32.xlu0 %v575, 16
      %v1008 = vpop.permute.xlu0 %1007
      %1009 = vrot.lane.b32.xlu0 %v568, 16
      %v1010 = vpop.permute.xlu0 %1009
      %1011 = vrot.lane.b32.xlu0 %v570, 16
      %v1012 = vpop.permute.xlu0 %1011
      %1013 = vrot.lane.b32.xlu0 %v578, 16
      %v1014 = vpop.permute.xlu0 %1013
      %1015 = vrot.lane.b32.xlu0 %v580, 16
      %v1016 = vpop.permute.xlu0 %1015
      %1017 = vrot.lane.b32.xlu0 %v583, 16
      %v1018 = vpop.permute.xlu0 %1017
      %1019 = vrot.lane.b32.xlu0 %v585, 16
      %v1020 = vpop.permute.xlu0 %1019
      %1021 = vrot.lane.b32.xlu0 %v588, 16
      %v1022 = vpop.permute.xlu0 %1021
      %1023 = vrot.lane.b32.xlu0 %v590, 16
      %v1024 = vpop.permute.xlu0 %1023
      %1025 = vrot.lane.b32.xlu0 %v593, 16
      %v1026 = vpop.permute.xlu0 %1025
      %1027 = vrot.lane.b32.xlu0 %v595, 16
      %v1028 = vpop.permute.xlu0 %1027
      %1029 = vrot.lane.b32.xlu0 %v598, 16
      %v1030 = vpop.permute.xlu0 %1029
      %1031 = vrot.lane.b32.xlu0 %v600, 16
      %v1032 = vpop.permute.xlu0 %1031
      %1033 = vrot.lane.b32.xlu0 %v603, 16
      %v1034 = vpop.permute.xlu0 %1033
      %1035 = vrot.lane.b32.xlu0 %v605, 16
      %v1036 = vpop.permute.xlu0 %1035
      %1037 = vrot.lane.b32.xlu0 %v608, 16
      %v1038 = vpop.permute.xlu0 %1037
      %1039 = vrot.lane.b32.xlu0 %v610, 16
      %v1040 = vpop.permute.xlu0 %1039
      %1041 = vrot.lane.b32.xlu0 %v613, 16
      %v1042 = vpop.permute.xlu0 %1041
      %1043 = vrot.lane.b32.xlu0 %v615, 16
      %v1044 = vpop.permute.xlu0 %1043
      %1045 = vrot.lane.b32.xlu0 %v618, 16
      %v1046 = vpop.permute.xlu0 %1045
      %1047 = vrot.lane.b32.xlu0 %v620, 16
      %v1048 = vpop.permute.xlu0 %1047
      %1049 = vrot.lane.b32.xlu0 %v623, 16
      %v1050 = vpop.permute.xlu0 %1049
      %1051 = vrot.lane.b32.xlu0 %v625, 16
      %v1052 = vpop.permute.xlu0 %1051
      %1053 = vrot.lane.b32.xlu0 %v628, 16
      %v1054 = vpop.permute.xlu0 %1053
      %1055 = vrot.lane.b32.xlu0 %v630, 16
      %v1056 = vpop.permute.xlu0 %1055
      %1057 = vrot.lane.b32.xlu0 %v633, 16
      %v1058 = vpop.permute.xlu0 %1057
      %1059 = vrot.lane.b32.xlu0 %v635, 16
      %v1060 = vpop.permute.xlu0 %1059
      %1061 = vrot.lane.b32.xlu0 %v638, 16
      %v1062 = vpop.permute.xlu0 %1061
      %1063 = vrot.lane.b32.xlu0 %v640, 16
      %v1064 = vpop.permute.xlu0 %1063
      %1065 = vrot.lane.b32.xlu0 %v721, 16
      %v1066 = vpop.permute.xlu0 %1065
      %1067 = vrot.lane.b32.xlu0 %v723, 16
      %v1068 = vpop.permute.xlu0 %1067
      %1101 = vrot.lane.b32.xlu0 %v649, 20
      %v1102 = vpop.permute.xlu0 %1101
      %1103 = vrot.lane.b32.xlu0 %v651, 20
      %v1104 = vpop.permute.xlu0 %1103
      %1105 = vrot.lane.b32.xlu0 %v644, 20
      %v1106 = vpop.permute.xlu0 %1105
      %1107 = vrot.lane.b32.xlu0 %v646, 20
      %v1108 = vpop.permute.xlu0 %1107
      %1109 = vrot.lane.b32.xlu0 %v654, 20
      %v1110 = vpop.permute.xlu0 %1109
      %1111 = vrot.lane.b32.xlu0 %v656, 20
      %v1112 = vpop.permute.xlu0 %1111
      %1113 = vrot.lane.b32.xlu0 %v659, 20
      %v1114 = vpop.permute.xlu0 %1113
      %1115 = vrot.lane.b32.xlu0 %v661, 20
      %v1116 = vpop.permute.xlu0 %1115
      %1117 = vrot.lane.b32.xlu0 %v664, 20
      %v1118 = vpop.permute.xlu0 %1117
      %1119 = vrot.lane.b32.xlu0 %v666, 20
      %v1120 = vpop.permute.xlu0 %1119
      %1121 = vrot.lane.b32.xlu0 %v669, 20
      %v1122 = vpop.permute.xlu0 %1121
      %1123 = vrot.lane.b32.xlu0 %v671, 20
      %v1124 = vpop.permute.xlu0 %1123
      %1125 = vrot.lane.b32.xlu0 %v674, 20
      %v1126 = vpop.permute.xlu0 %1125
      %1127 = vrot.lane.b32.xlu0 %v676, 20
      %v1128 = vpop.permute.xlu0 %1127
      %1129 = vrot.lane.b32.xlu0 %v679, 20
      %v1130 = vpop.permute.xlu0 %1129
      %1131 = vrot.lane.b32.xlu0 %v681, 20
      %v1132 = vpop.permute.xlu0 %1131
      %1133 = vrot.lane.b32.xlu0 %v684, 20
      %v1134 = vpop.permute.xlu0 %1133
      %1135 = vrot.lane.b32.xlu0 %v686, 20
      %v1136 = vpop.permute.xlu0 %1135
      %1137 = vrot.lane.b32.xlu0 %v689, 20
      %v1138 = vpop.permute.xlu0 %1137
      %1139 = vrot.lane.b32.xlu0 %v691, 20
      %v1140 = vpop.permute.xlu0 %1139
      %1141 = vrot.lane.b32.xlu0 %v694, 20
      %v1142 = vpop.permute.xlu0 %1141
      %1143 = vrot.lane.b32.xlu0 %v696, 20
      %v1144 = vpop.permute.xlu0 %1143
      %1145 = vrot.lane.b32.xlu0 %v699, 20
      %v1146 = vpop.permute.xlu0 %1145
      %1147 = vrot.lane.b32.xlu0 %v701, 20
      %v1148 = vpop.permute.xlu0 %1147
      %1149 = vrot.lane.b32.xlu0 %v704, 20
      %v1150 = vpop.permute.xlu0 %1149
      %1151 = vrot.lane.b32.xlu0 %v706, 20
      %v1152 = vpop.permute.xlu0 %1151
      %1153 = vrot.lane.b32.xlu0 %v709, 20
      %v1154 = vpop.permute.xlu0 %1153
      %1155 = vrot.lane.b32.xlu0 %v711, 20
      %v1156 = vpop.permute.xlu0 %1155
      %1157 = vrot.lane.b32.xlu0 %v714, 20
      %v1158 = vpop.permute.xlu0 %1157
      %1159 = vrot.lane.b32.xlu0 %v716, 20
      %v1160 = vpop.permute.xlu0 %1159
      %1161 = vrot.lane.b32.xlu0 %v726, 20
      %v1162 = vpop.permute.xlu0 %1161
      %1163 = vrot.lane.b32.xlu0 %v728, 20
      %v1164 = vpop.permute.xlu0 %1163
      %1197 = vrot.lane.b32.xlu0 %v503, 24
      %v1198 = vpop.permute.xlu0 %1197
      %1199 = vrot.lane.b32.xlu0 %v378, 24
      %v1200 = vpop.permute.xlu0 %1199
      %1201 = vrot.lane.b32.xlu0 %v505, 24
      %v1202 = vpop.permute.xlu0 %1201
      %1203 = vrot.lane.b32.xlu0 %v384, 24
      %v1204 = vpop.permute.xlu0 %1203
      %1205 = vrot.lane.b32.xlu0 %v506, 24
      %v1206 = vpop.permute.xlu0 %1205
      %1207 = vrot.lane.b32.xlu0 %v387, 24
      %v1208 = vpop.permute.xlu0 %1207
      %1209 = vrot.lane.b32.xlu0 %v507, 24
      %v1210 = vpop.permute.xlu0 %1209
      %1211 = vrot.lane.b32.xlu0 %v390, 24
      %v1212 = vpop.permute.xlu0 %1211
      %1213 = vrot.lane.b32.xlu0 %v508, 24
      %v1214 = vpop.permute.xlu0 %1213
      %1215 = vrot.lane.b32.xlu0 %v393, 24
      %v1216 = vpop.permute.xlu0 %1215
      %1217 = vrot.lane.b32.xlu0 %v509, 24
      %v1218 = vpop.permute.xlu0 %1217
      %1219 = vrot.lane.b32.xlu0 %v396, 24
      %v1220 = vpop.permute.xlu0 %1219
      %1221 = vrot.lane.b32.xlu0 %v510, 24
      %v1222 = vpop.permute.xlu0 %1221
      %1223 = vrot.lane.b32.xlu0 %v399, 24
      %v1224 = vpop.permute.xlu0 %1223
      %1225 = vrot.lane.b32.xlu0 %v511, 24
      %v1226 = vpop.permute.xlu0 %1225
      %1227 = vrot.lane.b32.xlu0 %v402, 24
      %v1228 = vpop.permute.xlu0 %1227
      %1229 = vrot.lane.b32.xlu0 %v512, 24
      %v1230 = vpop.permute.xlu0 %1229
      %1231 = vrot.lane.b32.xlu0 %v405, 24
      %v1232 = vpop.permute.xlu0 %1231
      %1233 = vrot.lane.b32.xlu0 %v513, 24
      %v1234 = vpop.permute.xlu0 %1233
      %1235 = vrot.lane.b32.xlu0 %v408, 24
      %v1236 = vpop.permute.xlu0 %1235
      %1237 = vrot.lane.b32.xlu0 %v514, 24
      %v1238 = vpop.permute.xlu0 %1237
      %1239 = vrot.lane.b32.xlu0 %v411, 24
      %v1240 = vpop.permute.xlu0 %1239
      %1241 = vrot.lane.b32.xlu0 %v515, 24
      %v1242 = vpop.permute.xlu0 %1241
      %1243 = vrot.lane.b32.xlu0 %v414, 24
      %v1244 = vpop.permute.xlu0 %1243
      %1245 = vrot.lane.b32.xlu0 %v516, 24
      %v1246 = vpop.permute.xlu0 %1245
      %1247 = vrot.lane.b32.xlu0 %v417, 24
      %v1248 = vpop.permute.xlu0 %1247
      %1249 = vrot.lane.b32.xlu0 %v517, 24
      %v1250 = vpop.permute.xlu0 %1249
      %1251 = vrot.lane.b32.xlu0 %v420, 24
      %v1252 = vpop.permute.xlu0 %1251
      %1253 = vrot.lane.b32.xlu0 %v518, 24
      %v1254 = vpop.permute.xlu0 %1253
      %1255 = vrot.lane.b32.xlu0 %v423, 24
      %v1256 = vpop.permute.xlu0 %1255
      %1287 = vrot.lane.b32.xlu0 %v568, 28
      %v1288 = vpop.permute.xlu0 %1287
      %1289 = vrot.lane.b32.xlu0 %v570, 28
      %v1290 = vpop.permute.xlu0 %1289
      %1291 = vrot.lane.b32.xlu0 %v578, 28
      %v1292 = vpop.permute.xlu0 %1291
      %1293 = vrot.lane.b32.xlu0 %v580, 28
      %v1294 = vpop.permute.xlu0 %1293
      %1295 = vrot.lane.b32.xlu0 %v583, 28
      %v1296 = vpop.permute.xlu0 %1295
      %1297 = vrot.lane.b32.xlu0 %v585, 28
      %v1298 = vpop.permute.xlu0 %1297
      %1299 = vrot.lane.b32.xlu0 %v588, 28
      %v1300 = vpop.permute.xlu0 %1299
      %1301 = vrot.lane.b32.xlu0 %v590, 28
      %v1302 = vpop.permute.xlu0 %1301
      %1303 = vrot.lane.b32.xlu0 %v593, 28
      %v1304 = vpop.permute.xlu0 %1303
      %1305 = vrot.lane.b32.xlu0 %v595, 28
      %v1306 = vpop.permute.xlu0 %1305
      %1307 = vrot.lane.b32.xlu0 %v598, 28
      %v1308 = vpop.permute.xlu0 %1307
      %1309 = vrot.lane.b32.xlu0 %v600, 28
      %v1310 = vpop.permute.xlu0 %1309
      %1311 = vrot.lane.b32.xlu0 %v603, 28
      %v1312 = vpop.permute.xlu0 %1311
      %1313 = vrot.lane.b32.xlu0 %v605, 28
      %v1314 = vpop.permute.xlu0 %1313
      %1315 = vrot.lane.b32.xlu0 %v608, 28
      %v1316 = vpop.permute.xlu0 %1315
      %1317 = vrot.lane.b32.xlu0 %v610, 28
      %v1318 = vpop.permute.xlu0 %1317
      %1319 = vrot.lane.b32.xlu0 %v613, 28
      %v1320 = vpop.permute.xlu0 %1319
      %1321 = vrot.lane.b32.xlu0 %v615, 28
      %v1322 = vpop.permute.xlu0 %1321
      %1323 = vrot.lane.b32.xlu0 %v618, 28
      %v1324 = vpop.permute.xlu0 %1323
      %1325 = vrot.lane.b32.xlu0 %v620, 28
      %v1326 = vpop.permute.xlu0 %1325
      %1327 = vrot.lane.b32.xlu0 %v623, 28
      %v1328 = vpop.permute.xlu0 %1327
      %1329 = vrot.lane.b32.xlu0 %v625, 28
      %v1330 = vpop.permute.xlu0 %1329
      %1331 = vrot.lane.b32.xlu0 %v628, 28
      %v1332 = vpop.permute.xlu0 %1331
      %1333 = vrot.lane.b32.xlu0 %v630, 28
      %v1334 = vpop.permute.xlu0 %1333
      %1335 = vrot.lane.b32.xlu0 %v633, 28
      %v1336 = vpop.permute.xlu0 %1335
      %1337 = vrot.lane.b32.xlu0 %v635, 28
      %v1338 = vpop.permute.xlu0 %1337
      %1339 = vrot.lane.b32.xlu0 %v638, 28
      %v1340 = vpop.permute.xlu0 %1339
      %1341 = vrot.lane.b32.xlu0 %v640, 28
      %v1342 = vpop.permute.xlu0 %1341
      %1343 = vrot.lane.b32.xlu0 %v721, 28
      %v1344 = vpop.permute.xlu0 %1343
      %1345 = vrot.lane.b32.xlu0 %v723, 28
      %v1346 = vpop.permute.xlu0 %1345
      %1377 = vrot.lane.b32.xlu0 %v644, 32
      %v1378 = vpop.permute.xlu0 %1377
      %1379 = vrot.lane.b32.xlu0 %v646, 32
      %v1380 = vpop.permute.xlu0 %1379
      %1381 = vrot.lane.b32.xlu0 %v654, 32
      %v1382 = vpop.permute.xlu0 %1381
      %1383 = vrot.lane.b32.xlu0 %v656, 32
      %v1384 = vpop.permute.xlu0 %1383
      %1385 = vrot.lane.b32.xlu0 %v659, 32
      %v1386 = vpop.permute.xlu0 %1385
      %1387 = vrot.lane.b32.xlu0 %v661, 32
      %v1388 = vpop.permute.xlu0 %1387
      %1389 = vrot.lane.b32.xlu0 %v664, 32
      %v1390 = vpop.permute.xlu0 %1389
      %1391 = vrot.lane.b32.xlu0 %v666, 32
      %v1392 = vpop.permute.xlu0 %1391
      %1393 = vrot.lane.b32.xlu0 %v669, 32
      %v1394 = vpop.permute.xlu0 %1393
      %1395 = vrot.lane.b32.xlu0 %v671, 32
      %v1396 = vpop.permute.xlu0 %1395
      %1397 = vrot.lane.b32.xlu0 %v674, 32
      %v1398 = vpop.permute.xlu0 %1397
      %1399 = vrot.lane.b32.xlu0 %v676, 32
      %v1400 = vpop.permute.xlu0 %1399
      %1401 = vrot.lane.b32.xlu0 %v679, 32
      %v1402 = vpop.permute.xlu0 %1401
      %1403 = vrot.lane.b32.xlu0 %v681, 32
      %v1404 = vpop.permute.xlu0 %1403
      %1405 = vrot.lane.b32.xlu0 %v684, 32
      %v1406 = vpop.permute.xlu0 %1405
      %1407 = vrot.lane.b32.xlu0 %v686, 32
      %v1408 = vpop.permute.xlu0 %1407
      %1409 = vrot.lane.b32.xlu0 %v689, 32
      %v1410 = vpop.permute.xlu0 %1409
      %1411 = vrot.lane.b32.xlu0 %v691, 32
      %v1412 = vpop.permute.xlu0 %1411
      %1413 = vrot.lane.b32.xlu0 %v694, 32
      %v1414 = vpop.permute.xlu0 %1413
      %1415 = vrot.lane.b32.xlu0 %v696, 32
      %v1416 = vpop.permute.xlu0 %1415
      %1417 = vrot.lane.b32.xlu0 %v699, 32
      %v1418 = vpop.permute.xlu0 %1417
      %1419 = vrot.lane.b32.xlu0 %v701, 32
      %v1420 = vpop.permute.xlu0 %1419
      %1421 = vrot.lane.b32.xlu0 %v704, 32
      %v1422 = vpop.permute.xlu0 %1421
      %1423 = vrot.lane.b32.xlu0 %v706, 32
      %v1424 = vpop.permute.xlu0 %1423
      %1425 = vrot.lane.b32.xlu0 %v709, 32
      %v1426 = vpop.permute.xlu0 %1425
      %1427 = vrot.lane.b32.xlu0 %v711, 32
      %v1428 = vpop.permute.xlu0 %1427
      %1429 = vrot.lane.b32.xlu0 %v714, 32
      %v1430 = vpop.permute.xlu0 %1429
      %1431 = vrot.lane.b32.xlu0 %v716, 32
      %v1432 = vpop.permute.xlu0 %1431
      %1433 = vrot.lane.b32.xlu0 %v726, 32
      %v1434 = vpop.permute.xlu0 %1433
      %1435 = vrot.lane.b32.xlu0 %v728, 32
      %v1436 = vpop.permute.xlu0 %1435
      %vm1467 = vcmask 31744
      %v1468 = vsel %vm1467, %v503, %v730
      %v1469 = vsel %vm1467, %v378, %v732
      %v1470 = vsel %vm1467, %v504, %v734
      %v1471 = vsel %vm1467, %v381, %v736
      %v1472 = vsel %vm1467, %v505, %v738
      %v1473 = vsel %vm1467, %v384, %v740
      %v1474 = vsel %vm1467, %v506, %v742
      %v1475 = vsel %vm1467, %v387, %v744
      %v1476 = vsel %vm1467, %v507, %v746
      %v1477 = vsel %vm1467, %v390, %v748
      %v1478 = vsel %vm1467, %v508, %v750
      %v1479 = vsel %vm1467, %v393, %v752
      %v1480 = vsel %vm1467, %v509, %v754
      %v1481 = vsel %vm1467, %v396, %v756
      %v1482 = vsel %vm1467, %v510, %v758
      %v1483 = vsel %vm1467, %v399, %v760
      %v1484 = vsel %vm1467, %v511, %v762
      %v1485 = vsel %vm1467, %v402, %v764
      %v1486 = vsel %vm1467, %v512, %v766
      %v1487 = vsel %vm1467, %v405, %v768
      %v1488 = vsel %vm1467, %v513, %v770
      %v1489 = vsel %vm1467, %v408, %v772
      %v1490 = vsel %vm1467, %v514, %v774
      %v1491 = vsel %vm1467, %v411, %v776
      %v1492 = vsel %vm1467, %v515, %v778
      %v1493 = vsel %vm1467, %v414, %v780
      %v1494 = vsel %vm1467, %v516, %v782
      %v1495 = vsel %vm1467, %v417, %v784
      %v1496 = vsel %vm1467, %v517, %v786
      %v1497 = vsel %vm1467, %v420, %v788
      %vm1498 = vcmask 64512
      %v1499 = vsel %vm1498, %v1468, %v820
      %v1500 = vsel %vm1498, %v1469, %v822
      %v1501 = vsel %vm1498, %v1470, %v824
      %v1502 = vsel %vm1498, %v1471, %v826
      %v1503 = vsel %vm1498, %v1472, %v828
      %v1504 = vsel %vm1498, %v1473, %v830
      %v1505 = vsel %vm1498, %v1474, %v832
      %v1506 = vsel %vm1498, %v1475, %v834
      %v1507 = vsel %vm1498, %v1476, %v836
      %v1508 = vsel %vm1498, %v1477, %v838
      %v1509 = vsel %vm1498, %v1478, %v840
      %v1510 = vsel %vm1498, %v1479, %v842
      %v1511 = vsel %vm1498, %v1480, %v844
      %v1512 = vsel %vm1498, %v1481, %v846
      %v1513 = vsel %vm1498, %v1482, %v848
      %v1514 = vsel %vm1498, %v1483, %v850
      %v1515 = vsel %vm1498, %v1484, %v852
      %v1516 = vsel %vm1498, %v1485, %v854
      %v1517 = vsel %vm1498, %v1486, %v856
      %v1518 = vsel %vm1498, %v1487, %v858
      %v1519 = vsel %vm1498, %v1488, %v860
      %v1520 = vsel %vm1498, %v1489, %v862
      %v1521 = vsel %vm1498, %v1490, %v864
      %v1522 = vsel %vm1498, %v1491, %v866
      %v1523 = vsel %vm1498, %v1492, %v868
      %v1524 = vsel %vm1498, %v1493, %v870
      %v1525 = vsel %vm1498, %v1494, %v872
      %v1526 = vsel %vm1498, %v1495, %v874
      %v1527 = vsel %vm1498, %v1496, %v876
      %v1528 = vsel %vm1498, %v1497, %v878
      %vm1529 = vcmask 97280
      %v1530 = vsel %vm1529, %v1499, %v910
      %v1531 = vsel %vm1529, %v1500, %v912
      %v1532 = vsel %vm1529, %v1501, %v914
      %v1533 = vsel %vm1529, %v1502, %v916
      %v1534 = vsel %vm1529, %v1499, %v918
      %v1535 = vsel %vm1529, %v1500, %v920
      %v1536 = vsel %vm1529, %v1503, %v922
      %v1537 = vsel %vm1529, %v1504, %v924
      %v1538 = vsel %vm1529, %v1505, %v926
      %v1539 = vsel %vm1529, %v1506, %v928
      %v1540 = vsel %vm1529, %v1507, %v930
      %v1541 = vsel %vm1529, %v1508, %v932
      %v1542 = vsel %vm1529, %v1509, %v934
      %v1543 = vsel %vm1529, %v1510, %v936
      %v1544 = vsel %vm1529, %v1511, %v938
      %v1545 = vsel %vm1529, %v1512, %v940
      %v1546 = vsel %vm1529, %v1513, %v942
      %v1547 = vsel %vm1529, %v1514, %v944
      %v1548 = vsel %vm1529, %v1515, %v946
      %v1549 = vsel %vm1529, %v1516, %v948
      %v1550 = vsel %vm1529, %v1517, %v950
      %v1551 = vsel %vm1529, %v1518, %v952
      %v1552 = vsel %vm1529, %v1519, %v954
      %v1553 = vsel %vm1529, %v1520, %v956
      %v1554 = vsel %vm1529, %v1521, %v958
      %v1555 = vsel %vm1529, %v1522, %v960
      %v1556 = vsel %vm1529, %v1523, %v962
      %v1557 = vsel %vm1529, %v1524, %v964
      %v1558 = vsel %vm1529, %v1525, %v966
      %v1559 = vsel %vm1529, %v1526, %v968
      %v1560 = vsel %vm1529, %v1527, %v970
      %v1561 = vsel %vm1529, %v1528, %v972
      %vm1562 = vcmask 130048
      %v1563 = vsel %vm1562, %v1530, %v1006
      %v1564 = vsel %vm1562, %v1531, %v1008
      %v1565 = vsel %vm1562, %v1532, %v1010
      %v1566 = vsel %vm1562, %v1533, %v1012
      %v1567 = vsel %vm1562, %v1534, %v1014
      %v1568 = vsel %vm1562, %v1535, %v1016
      %v1569 = vsel %vm1562, %v1536, %v1018
      %v1570 = vsel %vm1562, %v1537, %v1020
      %v1571 = vsel %vm1562, %v1538, %v1022
      %v1572 = vsel %vm1562, %v1539, %v1024
      %v1573 = vsel %vm1562, %v1540, %v1026
      %v1574 = vsel %vm1562, %v1541, %v1028
      %v1575 = vsel %vm1562, %v1542, %v1030
      %v1576 = vsel %vm1562, %v1543, %v1032
      %v1577 = vsel %vm1562, %v1544, %v1034
      %v1578 = vsel %vm1562, %v1545, %v1036
      %v1579 = vsel %vm1562, %v1546, %v1038
      %v1580 = vsel %vm1562, %v1547, %v1040
      %v1581 = vsel %vm1562, %v1548, %v1042
      %v1582 = vsel %vm1562, %v1549, %v1044
      %v1583 = vsel %vm1562, %v1550, %v1046
      %v1584 = vsel %vm1562, %v1551, %v1048
      %v1585 = vsel %vm1562, %v1552, %v1050
      %v1586 = vsel %vm1562, %v1553, %v1052
      %v1587 = vsel %vm1562, %v1554, %v1054
      %v1588 = vsel %vm1562, %v1555, %v1056
      %v1589 = vsel %vm1562, %v1556, %v1058
      %v1590 = vsel %vm1562, %v1557, %v1060
      %v1591 = vsel %vm1562, %v1558, %v1062
      %v1592 = vsel %vm1562, %v1559, %v1064
      %v1593 = vsel %vm1562, %v1560, %v1066
      %v1594 = vsel %vm1562, %v1561, %v1068
      %vm1595 = vcmask 162816
      %v1596 = vsel %vm1595, %v1563, %v1102
      %v1597 = vsel %vm1595, %v1564, %v1104
      %v1598 = vsel %vm1595, %v1565, %v1106
      %v1599 = vsel %vm1595, %v1566, %v1108
      %v1600 = vsel %vm1595, %v1567, %v1110
      %v1601 = vsel %vm1595, %v1568, %v1112
      %v1602 = vsel %vm1595, %v1569, %v1114
      %v1603 = vsel %vm1595, %v1570, %v1116
      %v1604 = vsel %vm1595, %v1571, %v1118
      %v1605 = vsel %vm1595, %v1572, %v1120
      %v1606 = vsel %vm1595, %v1573, %v1122
      %v1607 = vsel %vm1595, %v1574, %v1124
      %v1608 = vsel %vm1595, %v1575, %v1126
      %v1609 = vsel %vm1595, %v1576, %v1128
      %v1610 = vsel %vm1595, %v1577, %v1130
      %v1611 = vsel %vm1595, %v1578, %v1132
      %v1612 = vsel %vm1595, %v1579, %v1134
      %v1613 = vsel %vm1595, %v1580, %v1136
      %v1614 = vsel %vm1595, %v1581, %v1138
      %v1615 = vsel %vm1595, %v1582, %v1140
      %v1616 = vsel %vm1595, %v1583, %v1142
      %v1617 = vsel %vm1595, %v1584, %v1144
      %v1618 = vsel %vm1595, %v1585, %v1146
      %v1619 = vsel %vm1595, %v1586, %v1148
      %v1620 = vsel %vm1595, %v1587, %v1150
      %v1621 = vsel %vm1595, %v1588, %v1152
      %v1622 = vsel %vm1595, %v1589, %v1154
      %v1623 = vsel %vm1595, %v1590, %v1156
      %v1624 = vsel %vm1595, %v1591, %v1158
      %v1625 = vsel %vm1595, %v1592, %v1160
      %v1626 = vsel %vm1595, %v1593, %v1162
      %v1627 = vsel %vm1595, %v1594, %v1164
      %vm1628 = vcmask 195584
      %v1629 = vsel %vm1628, %v1596, %v1198
      %v1630 = vsel %vm1628, %v1597, %v1200
      %v1631 = vsel %vm1628, %v1598, %v1202
      %v1632 = vsel %vm1628, %v1599, %v1204
      %v1633 = vsel %vm1628, %v1600, %v1206
      %v1634 = vsel %vm1628, %v1601, %v1208
      %v1635 = vsel %vm1628, %v1602, %v1210
      %v1636 = vsel %vm1628, %v1603, %v1212
      %v1637 = vsel %vm1628, %v1604, %v1214
      %v1638 = vsel %vm1628, %v1605, %v1216
      %v1639 = vsel %vm1628, %v1606, %v1218
      %v1640 = vsel %vm1628, %v1607, %v1220
      %v1641 = vsel %vm1628, %v1608, %v1222
      %v1642 = vsel %vm1628, %v1609, %v1224
      %v1643 = vsel %vm1628, %v1610, %v1226
      %v1644 = vsel %vm1628, %v1611, %v1228
      %v1645 = vsel %vm1628, %v1612, %v1230
      %v1646 = vsel %vm1628, %v1613, %v1232
      %v1647 = vsel %vm1628, %v1614, %v1234
      %v1648 = vsel %vm1628, %v1615, %v1236
      %v1649 = vsel %vm1628, %v1616, %v1238
      %v1650 = vsel %vm1628, %v1617, %v1240
      %v1651 = vsel %vm1628, %v1618, %v1242
      %v1652 = vsel %vm1628, %v1619, %v1244
      %v1653 = vsel %vm1628, %v1620, %v1246
      %v1654 = vsel %vm1628, %v1621, %v1248
      %v1655 = vsel %vm1628, %v1622, %v1250
      %v1656 = vsel %vm1628, %v1623, %v1252
      %v1657 = vsel %vm1628, %v1624, %v1254
      %v1658 = vsel %vm1628, %v1625, %v1256
      %v1659 = vsel %vm1628, %v1626, %v1250
      %v1660 = vsel %vm1628, %v1627, %v1252
      %vm1661 = vcmask 228352
      %v1662 = vsel %vm1661, %v1629, %v1288
      %v1663 = vsel %vm1661, %v1630, %v1290
      %v1664 = vsel %vm1661, %v1631, %v1292
      %v1665 = vsel %vm1661, %v1632, %v1294
      %v1666 = vsel %vm1661, %v1633, %v1296
      %v1667 = vsel %vm1661, %v1634, %v1298
      %v1668 = vsel %vm1661, %v1635, %v1300
      %v1669 = vsel %vm1661, %v1636, %v1302
      %v1670 = vsel %vm1661, %v1637, %v1304
      %v1671 = vsel %vm1661, %v1638, %v1306
      %v1672 = vsel %vm1661, %v1639, %v1308
      %v1673 = vsel %vm1661, %v1640, %v1310
      %v1674 = vsel %vm1661, %v1641, %v1312
      %v1675 = vsel %vm1661, %v1642, %v1314
      %v1676 = vsel %vm1661, %v1643, %v1316
      %v1677 = vsel %vm1661, %v1644, %v1318
      %v1678 = vsel %vm1661, %v1645, %v1320
      %v1679 = vsel %vm1661, %v1646, %v1322
      %v1680 = vsel %vm1661, %v1647, %v1324
      %v1681 = vsel %vm1661, %v1648, %v1326
      %v1682 = vsel %vm1661, %v1649, %v1328
      %v1683 = vsel %vm1661, %v1650, %v1330
      %v1684 = vsel %vm1661, %v1651, %v1332
      %v1685 = vsel %vm1661, %v1652, %v1334
      %v1686 = vsel %vm1661, %v1653, %v1336
      %v1687 = vsel %vm1661, %v1654, %v1338
      %v1688 = vsel %vm1661, %v1655, %v1340
      %v1689 = vsel %vm1661, %v1656, %v1342
      %v1690 = vsel %vm1661, %v1657, %v1344
      %v1691 = vsel %vm1661, %v1658, %v1346
      %v1692 = vsel %vm1661, %v1659, %v1340
      %v1693 = vsel %vm1661, %v1660, %v1342
      %vm1694 = vcmask 261120
      %v1695 = vsel %vm1694, %v1662, %v1378
      %v1696 = vsel %vm1694, %v1663, %v1380
      %v1697 = vsel %vm1694, %v1664, %v1382
      %v1698 = vsel %vm1694, %v1665, %v1384
      %v1699 = vsel %vm1694, %v1666, %v1386
      %v1700 = vsel %vm1694, %v1667, %v1388
      %v1701 = vsel %vm1694, %v1668, %v1390
      %v1702 = vsel %vm1694, %v1669, %v1392
      %v1703 = vsel %vm1694, %v1670, %v1394
      %v1704 = vsel %vm1694, %v1671, %v1396
      %v1705 = vsel %vm1694, %v1672, %v1398
      %v1706 = vsel %vm1694, %v1673, %v1400
      %v1707 = vsel %vm1694, %v1674, %v1402
      %v1708 = vsel %vm1694, %v1675, %v1404
      %v1709 = vsel %vm1694, %v1676, %v1406
      %v1710 = vsel %vm1694, %v1677, %v1408
      %v1711 = vsel %vm1694, %v1678, %v1410
      %v1712 = vsel %vm1694, %v1679, %v1412
      %v1713 = vsel %vm1694, %v1680, %v1414
      %v1714 = vsel %vm1694, %v1681, %v1416
      %v1715 = vsel %vm1694, %v1682, %v1418
      %v1716 = vsel %vm1694, %v1683, %v1420
      %v1717 = vsel %vm1694, %v1684, %v1422
      %v1718 = vsel %vm1694, %v1685, %v1424
      %v1719 = vsel %vm1694, %v1686, %v1426
      %v1720 = vsel %vm1694, %v1687, %v1428
      %v1721 = vsel %vm1694, %v1688, %v1430
      %v1722 = vsel %vm1694, %v1689, %v1432
      %v1723 = vsel %vm1694, %v1690, %v1434
      %v1724 = vsel %vm1694, %v1691, %v1436
      %v1725 = vsel %vm1694, %v1692, %v1430
      %v1726 = vsel %vm1694, %v1693, %v1432
      %v1727 = vld [vmem:[%s1] sm:$0xff]
      %v1728 = vld [vmem:[%s1 + $0x8] sm:$0xff]
      %v1729 = vld [vmem:[%s1 + $0x10] sm:$0xff]
      %v1730 = vld [vmem:[%s1 + $0x18] sm:$0xff]
      %v1731 = vld [vmem:[%s1 + $0x20] sm:$0xf]
      %vm1732 = vcmask 293888
      %v1734 = vsel %vm1732, %v1695, 0
      %v1737 = vsel %vm1732, %v1696, 0
      %v1740 = vsel %vm1732, %v1697, 0
      %v1743 = vsel %vm1732, %v1698, 0
      %v1746 = vsel %vm1732, %v1699, 0
      %v1749 = vsel %vm1732, %v1700, 0
      %v1752 = vsel %vm1732, %v1701, 0
      %v1755 = vsel %vm1732, %v1702, 0
      %v1758 = vsel %vm1732, %v1703, 0
      %v1761 = vsel %vm1732, %v1704, 0
      %v1764 = vsel %vm1732, %v1705, 0
      %v1767 = vsel %vm1732, %v1706, 0
      %v1770 = vsel %vm1732, %v1707, 0
      %v1773 = vsel %vm1732, %v1708, 0
      %v1776 = vsel %vm1732, %v1709, 0
      %v1779 = vsel %vm1732, %v1710, 0
      %v1782 = vsel %vm1732, %v1711, 0
      %v1785 = vsel %vm1732, %v1712, 0
      %v1788 = vsel %vm1732, %v1713, 0
      %v1791 = vsel %vm1732, %v1714, 0
      %v1794 = vsel %vm1732, %v1715, 0
      %v1797 = vsel %vm1732, %v1716, 0
      %v1800 = vsel %vm1732, %v1717, 0
      %v1803 = vsel %vm1732, %v1718, 0
      %v1806 = vsel %vm1732, %v1719, 0
      %v1809 = vsel %vm1732, %v1720, 0
      %v1812 = vsel %vm1732, %v1721, 0
      %v1815 = vsel %vm1732, %v1722, 0
      %v1818 = vsel %vm1732, %v1723, 0
      %v1821 = vsel %vm1732, %v1724, 0
      %v1824 = vsel %vm1732, %v1725, 0
      %v1827 = vsel %vm1732, %v1726, 0
      %vm1829 = vcmask 1043456
      %v1831 = vsel %vm1829, %v1731, 0
      %1833 = vmatpush.msra.mxu0 0.0
      %1834 = vmatpush.msra.mxu0 0.0
      %1835 = vmatpush.msra.mxu0 0.0
      %1836 = vmatpush.msra.mxu0 0.0
      %1837 = vmatpush.msra.mxu0 0.0
      %1838 = vmatpush.msra.mxu0 0.0
      %1839 = vmatpush.msra.mxu0 0.0
      %1840 = vmatpush.msra.mxu0 0.0
      %1841 = vmatpush.msra.mxu0 0.0
      %1842 = vmatpush.msra.mxu0 0.0
      %1843 = vmatpush.msra.mxu0 0.0
      %1844 = vmatpush.msra.mxu0 %v1831
      %1845 = vmatpush.msra.mxu0 %v1730
      %1846 = vmatpush.msra.mxu0 %v1729
      %1847 = vmatpush.msra.mxu0 %v1728
      %1848 = vmatpush.msra.mxu0 %v1727
      %1849 = vmatmul.f32.gmra.mxu0 %v1734
      %v1850 = vpop.f32.mrf.mxu0
      %v1851 = vadd.f32 0.0, %v1850
      %1852 = vmatmul.f32.gmra.mxu0 %v1737
      %v1853 = vpop.f32.mrf.mxu0
      %v1854 = vadd.f32 0.0, %v1853
      %1855 = vmatmul.f32.gmra.mxu0 %v1740
      %v1856 = vpop.f32.mrf.mxu0
      %v1857 = vadd.f32 0.0, %v1856
      %1858 = vmatmul.f32.gmra.mxu0 %v1743
      %v1859 = vpop.f32.mrf.mxu0
      %v1860 = vadd.f32 0.0, %v1859
      %1861 = vmatmul.f32.gmra.mxu0 %v1746
      %v1862 = vpop.f32.mrf.mxu0
      %v1863 = vadd.f32 0.0, %v1862
      %1864 = vmatmul.f32.gmra.mxu0 %v1749
      %v1865 = vpop.f32.mrf.mxu0
      %v1866 = vadd.f32 0.0, %v1865
      %1867 = vmatmul.f32.gmra.mxu0 %v1752
      %v1868 = vpop.f32.mrf.mxu0
      %v1869 = vadd.f32 0.0, %v1868
      %1870 = vmatmul.f32.gmra.mxu0 %v1755
      %v1871 = vpop.f32.mrf.mxu0
      %v1872 = vadd.f32 0.0, %v1871
      %1873 = vmatmul.f32.gmra.mxu0 %v1758
      %v1874 = vpop.f32.mrf.mxu0
      %v1875 = vadd.f32 0.0, %v1874
      %1876 = vmatmul.f32.gmra.mxu0 %v1761
      %v1877 = vpop.f32.mrf.mxu0
      %v1878 = vadd.f32 0.0, %v1877
      %1879 = vmatmul.f32.gmra.mxu0 %v1764
      %v1880 = vpop.f32.mrf.mxu0
      %v1881 = vadd.f32 0.0, %v1880
      %1882 = vmatmul.f32.gmra.mxu0 %v1767
      %v1883 = vpop.f32.mrf.mxu0
      %v1884 = vadd.f32 0.0, %v1883
      %1885 = vmatmul.f32.gmra.mxu0 %v1770
      %v1886 = vpop.f32.mrf.mxu0
      %v1887 = vadd.f32 0.0, %v1886
      %1888 = vmatmul.f32.gmra.mxu0 %v1773
      %v1889 = vpop.f32.mrf.mxu0
      %v1890 = vadd.f32 0.0, %v1889
      %1891 = vmatmul.f32.gmra.mxu0 %v1776
      %v1892 = vpop.f32.mrf.mxu0
      %v1893 = vadd.f32 0.0, %v1892
      %1894 = vmatmul.f32.gmra.mxu0 %v1779
      %v1895 = vpop.f32.mrf.mxu0
      %v1896 = vadd.f32 0.0, %v1895
      %1897 = vmatmul.f32.gmra.mxu0 %v1782
      %v1898 = vpop.f32.mrf.mxu0
      %v1899 = vadd.f32 0.0, %v1898
      %1900 = vmatmul.f32.gmra.mxu0 %v1785
      %v1901 = vpop.f32.mrf.mxu0
      %v1902 = vadd.f32 0.0, %v1901
      %1903 = vmatmul.f32.gmra.mxu0 %v1788
      %v1904 = vpop.f32.mrf.mxu0
      %v1905 = vadd.f32 0.0, %v1904
      %1906 = vmatmul.f32.gmra.mxu0 %v1791
      %v1907 = vpop.f32.mrf.mxu0
      %v1908 = vadd.f32 0.0, %v1907
      %1909 = vmatmul.f32.gmra.mxu0 %v1794
      %v1910 = vpop.f32.mrf.mxu0
      %v1911 = vadd.f32 0.0, %v1910
      %1912 = vmatmul.f32.gmra.mxu0 %v1797
      %v1913 = vpop.f32.mrf.mxu0
      %v1914 = vadd.f32 0.0, %v1913
      %1915 = vmatmul.f32.gmra.mxu0 %v1800
      %v1916 = vpop.f32.mrf.mxu0
      %v1917 = vadd.f32 0.0, %v1916
      %1918 = vmatmul.f32.gmra.mxu0 %v1803
      %v1919 = vpop.f32.mrf.mxu0
      %v1920 = vadd.f32 0.0, %v1919
      %1921 = vmatmul.f32.gmra.mxu0 %v1806
      %v1922 = vpop.f32.mrf.mxu0
      %v1923 = vadd.f32 0.0, %v1922
      %1924 = vmatmul.f32.gmra.mxu0 %v1809
      %v1925 = vpop.f32.mrf.mxu0
      %v1926 = vadd.f32 0.0, %v1925
      %1927 = vmatmul.f32.gmra.mxu0 %v1812
      %v1928 = vpop.f32.mrf.mxu0
      %v1929 = vadd.f32 0.0, %v1928
      %1930 = vmatmul.f32.gmra.mxu0 %v1815
      %v1931 = vpop.f32.mrf.mxu0
      %v1932 = vadd.f32 0.0, %v1931
      %1933 = vmatmul.f32.gmra.mxu0 %v1818
      %v1934 = vpop.f32.mrf.mxu0
      %v1935 = vadd.f32 0.0, %v1934
      %1936 = vmatmul.f32.gmra.mxu0 %v1821
      %v1937 = vpop.f32.mrf.mxu0
      %v1938 = vadd.f32 0.0, %v1937
      %1939 = vmatmul.f32.gmra.mxu0 %v1824
      %v1940 = vpop.f32.mrf.mxu0
      %v1941 = vadd.f32 0.0, %v1940
      %1942 = vmatmul.f32.gmra.mxu0 %v1827
      %v1943 = vpop.f32.mrf.mxu0
      %v1944 = vadd.f32 0.0, %v1943
      %1945 = vdwg.mxu0
      %v1946 = vsel %vm1467, %v1851, 0.0
      %v1947 = vsel %vm1467, %v1854, 0.0
      %v1948 = vadd.f32 %v1946, %v1947
      %v1949 = vsel %vm1467, %v1857, 0.0
      %v1950 = vadd.f32 %v1948, %v1949
      %v1951 = vsel %vm1467, %v1860, 0.0
      %v1952 = vadd.f32 %v1950, %v1951
      %v1953 = vsel %vm1467, %v1863, 0.0
      %v1954 = vadd.f32 %v1952, %v1953
      %v1955 = vsel %vm1467, %v1866, 0.0
      %v1956 = vadd.f32 %v1954, %v1955
      %v1957 = vsel %vm1467, %v1869, 0.0
      %v1958 = vadd.f32 %v1956, %v1957
      %v1959 = vsel %vm1467, %v1872, 0.0
      %v1960 = vadd.f32 %v1958, %v1959
      %v1961 = vsel %vm1467, %v1875, 0.0
      %v1962 = vadd.f32 %v1960, %v1961
      %v1963 = vsel %vm1467, %v1878, 0.0
      %v1964 = vadd.f32 %v1962, %v1963
      %v1965 = vsel %vm1467, %v1881, 0.0
      %v1966 = vadd.f32 %v1964, %v1965
      %v1967 = vsel %vm1467, %v1884, 0.0
      %v1968 = vadd.f32 %v1966, %v1967
      %v1969 = vsel %vm1467, %v1887, 0.0
      %v1970 = vadd.f32 %v1968, %v1969
      %v1971 = vsel %vm1467, %v1890, 0.0
      %v1972 = vadd.f32 %v1970, %v1971
      %v1973 = vsel %vm1467, %v1893, 0.0
      %v1974 = vadd.f32 %v1972, %v1973
      %v1975 = vsel %vm1467, %v1896, 0.0
      %v1976 = vadd.f32 %v1974, %v1975
      %v1977 = vsel %vm1467, %v1899, 0.0
      %v1978 = vadd.f32 %v1976, %v1977
      %v1979 = vsel %vm1467, %v1902, 0.0
      %v1980 = vadd.f32 %v1978, %v1979
      %v1981 = vsel %vm1467, %v1905, 0.0
      %v1982 = vadd.f32 %v1980, %v1981
      %v1983 = vsel %vm1467, %v1908, 0.0
      %v1984 = vadd.f32 %v1982, %v1983
      %v1985 = vsel %vm1467, %v1911, 0.0
      %v1986 = vadd.f32 %v1984, %v1985
      %v1987 = vsel %vm1467, %v1914, 0.0
      %v1988 = vadd.f32 %v1986, %v1987
      %v1989 = vsel %vm1467, %v1917, 0.0
      %v1990 = vadd.f32 %v1988, %v1989
      %v1991 = vsel %vm1467, %v1920, 0.0
      %v1992 = vadd.f32 %v1990, %v1991
      %v1993 = vsel %vm1467, %v1923, 0.0
      %v1994 = vadd.f32 %v1992, %v1993
      %v1995 = vsel %vm1467, %v1926, 0.0
      %v1996 = vadd.f32 %v1994, %v1995
      %v1997 = vsel %vm1467, %v1929, 0.0
      %v1998 = vadd.f32 %v1996, %v1997
      %v1999 = vsel %vm1467, %v1932, 0.0
      %v2000 = vadd.f32 %v1998, %v1999
      %v2001 = vsel %vm1467, %v1935, 0.0
      %v2002 = vadd.f32 %v2000, %v2001
      %v2003 = vsel %vm1467, %v1938, 0.0
      %v2004 = vadd.f32 %v2002, %v2003
      %v2005 = vsel %vm1467, %v1941, 0.0
      %v2006 = vadd.f32 %v2004, %v2005
      %v2007 = vsel %vm1467, %v1944, 0.0
      %v2008 = vadd.f32 %v2006, %v2007
      %v2009 = vrot.slane %v2008, 4
      %v2010 = vadd.f32 %v2008, %v2009
      %v2011 = vrot.slane %v2010, 2
      %v2012 = vadd.f32 %v2010, %v2011
      %v2013 = vrot.slane %v2012, 1
      %v2014 = vadd.f32 %v2012, %v2013
      %v2015 = vrcp.pop 256.0
      %v2016 = vmul.f32 256.0, %v2015
      %v2017 = vsub.f32 1.0, %v2016
      %v2018 = vmul.f32 %v2015, %v2017
      %v2019 = vadd.f32 %v2015, %v2018
      %vm2020 = vweird.f32 %v2015
      %v2021 = vsel %vm2020, %v2015, %v2019
      %v2022 = vmul.f32 %v2014, %v2021
      %v2023 = vmul.f32 %v1851, %v1851
      %v2024 = vmul.f32 %v1854, %v1854
      %v2025 = vmul.f32 %v1857, %v1857
      %v2026 = vmul.f32 %v1860, %v1860
      %v2027 = vmul.f32 %v1863, %v1863
      %v2028 = vmul.f32 %v1866, %v1866
      %v2029 = vmul.f32 %v1869, %v1869
      %v2030 = vmul.f32 %v1872, %v1872
      %v2031 = vmul.f32 %v1875, %v1875
      %v2032 = vmul.f32 %v1878, %v1878
      %v2033 = vmul.f32 %v1881, %v1881
      %v2034 = vmul.f32 %v1884, %v1884
      %v2035 = vmul.f32 %v1887, %v1887
      %v2036 = vmul.f32 %v1890, %v1890
      %v2037 = vmul.f32 %v1893, %v1893
      %v2038 = vmul.f32 %v1896, %v1896
      %v2039 = vmul.f32 %v1899, %v1899
      %v2040 = vmul.f32 %v1902, %v1902
      %v2041 = vmul.f32 %v1905, %v1905
      %v2042 = vmul.f32 %v1908, %v1908
      %v2043 = vmul.f32 %v1911, %v1911
      %v2044 = vmul.f32 %v1914, %v1914
      %v2045 = vmul.f32 %v1917, %v1917
      %v2046 = vmul.f32 %v1920, %v1920
      %v2047 = vmul.f32 %v1923, %v1923
      %v2048 = vmul.f32 %v1926, %v1926
      %v2049 = vmul.f32 %v1929, %v1929
      %v2050 = vmul.f32 %v1932, %v1932
      %v2051 = vmul.f32 %v1935, %v1935
      %v2052 = vmul.f32 %v1938, %v1938
      %v2053 = vmul.f32 %v1941, %v1941
      %v2054 = vmul.f32 %v1944, %v1944
      %v2055 = vsel %vm1467, %v2023, 0.0
      %v2056 = vsel %vm1467, %v2024, 0.0
      %v2057 = vadd.f32 %v2055, %v2056
      %v2058 = vsel %vm1467, %v2025, 0.0
      %v2059 = vadd.f32 %v2057, %v2058
      %v2060 = vsel %vm1467, %v2026, 0.0
      %v2061 = vadd.f32 %v2059, %v2060
      %v2062 = vsel %vm1467, %v2027, 0.0
      %v2063 = vadd.f32 %v2061, %v2062
      %v2064 = vsel %vm1467, %v2028, 0.0
      %v2065 = vadd.f32 %v2063, %v2064
      %v2066 = vsel %vm1467, %v2029, 0.0
      %v2067 = vadd.f32 %v2065, %v2066
      %v2068 = vsel %vm1467, %v2030, 0.0
      %v2069 = vadd.f32 %v2067, %v2068
      %v2070 = vsel %vm1467, %v2031, 0.0
      %v2071 = vadd.f32 %v2069, %v2070
      %v2072 = vsel %vm1467, %v2032, 0.0
      %v2073 = vadd.f32 %v2071, %v2072
      %v2074 = vsel %vm1467, %v2033, 0.0
      %v2075 = vadd.f32 %v2073, %v2074
      %v2076 = vsel %vm1467, %v2034, 0.0
      %v2077 = vadd.f32 %v2075, %v2076
      %v2078 = vsel %vm1467, %v2035, 0.0
      %v2079 = vadd.f32 %v2077, %v2078
      %v2080 = vsel %vm1467, %v2036, 0.0
      %v2081 = vadd.f32 %v2079, %v2080
      %v2082 = vsel %vm1467, %v2037, 0.0
      %v2083 = vadd.f32 %v2081, %v2082
      %v2084 = vsel %vm1467, %v2038, 0.0
      %v2085 = vadd.f32 %v2083, %v2084
      %v2086 = vsel %vm1467, %v2039, 0.0
      %v2087 = vadd.f32 %v2085, %v2086
      %v2088 = vsel %vm1467, %v2040, 0.0
      %v2089 = vadd.f32 %v2087, %v2088
      %v2090 = vsel %vm1467, %v2041, 0.0
      %v2091 = vadd.f32 %v2089, %v2090
      %v2092 = vsel %vm1467, %v2042, 0.0
      %v2093 = vadd.f32 %v2091, %v2092
      %v2094 = vsel %vm1467, %v2043, 0.0
      %v2095 = vadd.f32 %v2093, %v2094
      %v2096 = vsel %vm1467, %v2044, 0.0
      %v2097 = vadd.f32 %v2095, %v2096
      %v2098 = vsel %vm1467, %v2045, 0.0
      %v2099 = vadd.f32 %v2097, %v2098
      %v2100 = vsel %vm1467, %v2046, 0.0
      %v2101 = vadd.f32 %v2099, %v2100
      %v2102 = vsel %vm1467, %v2047, 0.0
      %v2103 = vadd.f32 %v2101, %v2102
      %v2104 = vsel %vm1467, %v2048, 0.0
      %v2105 = vadd.f32 %v2103, %v2104
      %v2106 = vsel %vm1467, %v2049, 0.0
      %v2107 = vadd.f32 %v2105, %v2106
      %v2108 = vsel %vm1467, %v2050, 0.0
      %v2109 = vadd.f32 %v2107, %v2108
      %v2110 = vsel %vm1467, %v2051, 0.0
      %v2111 = vadd.f32 %v2109, %v2110
      %v2112 = vsel %vm1467, %v2052, 0.0
      %v2113 = vadd.f32 %v2111, %v2112
      %v2114 = vsel %vm1467, %v2053, 0.0
      %v2115 = vadd.f32 %v2113, %v2114
      %v2116 = vsel %vm1467, %v2054, 0.0
      %v2117 = vadd.f32 %v2115, %v2116
      %v2118 = vrot.slane %v2117, 4
      %v2119 = vadd.f32 %v2117, %v2118
      %v2120 = vrot.slane %v2119, 2
      %v2121 = vadd.f32 %v2119, %v2120
      %v2122 = vrot.slane %v2121, 1
      %v2123 = vadd.f32 %v2121, %v2122
      %v2124 = vmul.f32 %v2123, %v2021
      %v2125 = vmul.f32 %v2022, %v2022
      %v2126 = vsub.f32 %v2124, %v2125
      %v2127 = vld [vmem:[%s2] sm:$0x1]
      %v2128 = vadd.f32 %v2126, 1e-05
      %v2129 = vrsqrt.pop %v2128
      %v2130 = vmul.f32 %v2129, %v2128
      %v2131 = vmul.f32 %v2130, %v2129
      %v2132 = vmul.f32 0.5, %v2131
      %v2133 = vsub.f32 1.5, %v2132
      %v2134 = vmul.f32 %v2129, %v2133
      %vm2135 = vweird.f32 %v2128
      %vm2136 = vweird.f32 %v2129
      %vm2137 = vmor %vm2135, %vm2136
      %v2138 = vsel %vm2137, %v2129, %v2134
      %v2139 = vmul.f32 %v2127, %v2138
      %v2140 = vld [vmem:[%s3] sm:$0x1]
      %v2141 = vmul.f32 %v2022, %v2139
      %v2142 = vsub.f32 %v2140, %v2141
      %v2144 = vperm.slane %v2139, 0
      %v2146 = vmul.f32 %v1851, %v2144
      %v2147 = vmul.f32 %v1854, %v2144
      %v2148 = vmul.f32 %v1857, %v2144
      %v2149 = vmul.f32 %v1860, %v2144
      %v2150 = vmul.f32 %v1863, %v2144
      %v2151 = vmul.f32 %v1866, %v2144
      %v2152 = vmul.f32 %v1869, %v2144
      %v2153 = vmul.f32 %v1872, %v2144
      %v2154 = vmul.f32 %v1875, %v2144
      %v2155 = vmul.f32 %v1878, %v2144
      %v2156 = vmul.f32 %v1881, %v2144
      %v2157 = vmul.f32 %v1884, %v2144
      %v2158 = vmul.f32 %v1887, %v2144
      %v2159 = vmul.f32 %v1890, %v2144
      %v2160 = vmul.f32 %v1893, %v2144
      %v2161 = vmul.f32 %v1896, %v2144
      %v2162 = vmul.f32 %v1899, %v2144
      %v2163 = vmul.f32 %v1902, %v2144
      %v2164 = vmul.f32 %v1905, %v2144
      %v2165 = vmul.f32 %v1908, %v2144
      %v2166 = vmul.f32 %v1911, %v2144
      %v2167 = vmul.f32 %v1914, %v2144
      %v2168 = vmul.f32 %v1917, %v2144
      %v2169 = vmul.f32 %v1920, %v2144
      %v2170 = vmul.f32 %v1923, %v2144
      %v2171 = vmul.f32 %v1926, %v2144
      %v2172 = vmul.f32 %v1929, %v2144
      %v2173 = vmul.f32 %v1932, %v2144
      %v2174 = vmul.f32 %v1935, %v2144
      %v2175 = vmul.f32 %v1938, %v2144
      %v2176 = vmul.f32 %v1941, %v2144
      %v2177 = vmul.f32 %v1944, %v2144
      %v2179 = vperm.slane %v2142, 0
      %v2181 = vadd.f32 %v2146, %v2179
      %v2182 = vadd.f32 %v2147, %v2179
      %v2183 = vadd.f32 %v2148, %v2179
      %v2184 = vadd.f32 %v2149, %v2179
      %v2185 = vadd.f32 %v2150, %v2179
      %v2186 = vadd.f32 %v2151, %v2179
      %v2187 = vadd.f32 %v2152, %v2179
      %v2188 = vadd.f32 %v2153, %v2179
      %v2189 = vadd.f32 %v2154, %v2179
      %v2190 = vadd.f32 %v2155, %v2179
      %v2191 = vadd.f32 %v2156, %v2179
      %v2192 = vadd.f32 %v2157, %v2179
      %v2193 = vadd.f32 %v2158, %v2179
      %v2194 = vadd.f32 %v2159, %v2179
      %v2195 = vadd.f32 %v2160, %v2179
      %v2196 = vadd.f32 %v2161, %v2179
      %v2197 = vadd.f32 %v2162, %v2179
      %v2198 = vadd.f32 %v2163, %v2179
      %v2199 = vadd.f32 %v2164, %v2179
      %v2200 = vadd.f32 %v2165, %v2179
      %v2201 = vadd.f32 %v2166, %v2179
      %v2202 = vadd.f32 %v2167, %v2179
      %v2203 = vadd.f32 %v2168, %v2179
      %v2204 = vadd.f32 %v2169, %v2179
      %v2205 = vadd.f32 %v2170, %v2179
      %v2206 = vadd.f32 %v2171, %v2179
      %v2207 = vadd.f32 %v2172, %v2179
      %v2208 = vadd.f32 %v2173, %v2179
      %v2209 = vadd.f32 %v2174, %v2179
      %v2210 = vadd.f32 %v2175, %v2179
      %v2211 = vadd.f32 %v2176, %v2179
      %v2212 = vadd.f32 %v2177, %v2179
      %v2213 = vmax.f32 %v2181, 0.0
      %v2214 = vmax.f32 %v2182, 0.0
      %v2215 = vmax.f32 %v2183, 0.0
      %v2216 = vmax.f32 %v2184, 0.0
      %v2217 = vmax.f32 %v2185, 0.0
      %v2218 = vmax.f32 %v2186, 0.0
      %v2219 = vmax.f32 %v2187, 0.0
      %v2220 = vmax.f32 %v2188, 0.0
      %v2221 = vmax.f32 %v2189, 0.0
      %v2222 = vmax.f32 %v2190, 0.0
      %v2223 = vmax.f32 %v2191, 0.0
      %v2224 = vmax.f32 %v2192, 0.0
      %v2225 = vmax.f32 %v2193, 0.0
      %v2226 = vmax.f32 %v2194, 0.0
      %v2227 = vmax.f32 %v2195, 0.0
      %v2228 = vmax.f32 %v2196, 0.0
      %v2229 = vmax.f32 %v2197, 0.0
      %v2230 = vmax.f32 %v2198, 0.0
      %v2231 = vmax.f32 %v2199, 0.0
      %v2232 = vmax.f32 %v2200, 0.0
      %v2233 = vmax.f32 %v2201, 0.0
      %v2234 = vmax.f32 %v2202, 0.0
      %v2235 = vmax.f32 %v2203, 0.0
      %v2236 = vmax.f32 %v2204, 0.0
      %v2237 = vmax.f32 %v2205, 0.0
      %v2238 = vmax.f32 %v2206, 0.0
      %v2239 = vmax.f32 %v2207, 0.0
      %v2240 = vmax.f32 %v2208, 0.0
      %v2241 = vmax.f32 %v2209, 0.0
      %v2242 = vmax.f32 %v2210, 0.0
      %v2243 = vmax.f32 %v2211, 0.0
      %v2244 = vmax.f32 %v2212, 0.0
      %v2261 = vrot.slane %v2215, 1
      %v2262 = vrot.slane %v2213, 1
      %v2263 = vrot.slane %v2217, 1
      %v2264 = vrot.slane %v2219, 1
      %v2265 = vrot.slane %v2221, 1
      %v2266 = vrot.slane %v2223, 1
      %v2267 = vrot.slane %v2225, 1
      %v2268 = vrot.slane %v2227, 1
      %v2269 = vrot.slane %v2229, 1
      %v2270 = vrot.slane %v2231, 1
      %v2271 = vrot.slane %v2233, 1
      %v2272 = vrot.slane %v2235, 1
      %v2273 = vrot.slane %v2237, 1
      %v2274 = vrot.slane %v2239, 1
      %v2275 = vrot.slane %v2241, 1
      %v2276 = vrot.slane %v2243, 1
      %v2309 = vrot.slane %v2215, 7
      %v2310 = vrot.slane %v2216, 7
      %v2311 = vsel %vm375, %v2309, %v2310
      %v2312 = vrot.slane %v2213, 7
      %v2313 = vrot.slane %v2214, 7
      %v2314 = vsel %vm375, %v2312, %v2313
      %v2315 = vrot.slane %v2217, 7
      %v2316 = vrot.slane %v2218, 7
      %v2317 = vsel %vm375, %v2315, %v2316
      %v2318 = vrot.slane %v2219, 7
      %v2319 = vrot.slane %v2220, 7
      %v2320 = vsel %vm375, %v2318, %v2319
      %v2321 = vrot.slane %v2221, 7
      %v2322 = vrot.slane %v2222, 7
      %v2323 = vsel %vm375, %v2321, %v2322
      %v2324 = vrot.slane %v2223, 7
      %v2325 = vrot.slane %v2224, 7
      %v2326 = vsel %vm375, %v2324, %v2325
      %v2327 = vrot.slane %v2225, 7
      %v2328 = vrot.slane %v2226, 7
      %v2329 = vsel %vm375, %v2327, %v2328
      %v2330 = vrot.slane %v2227, 7
      %v2331 = vrot.slane %v2228, 7
      %v2332 = vsel %vm375, %v2330, %v2331
      %v2333 = vrot.slane %v2229, 7
      %v2334 = vrot.slane %v2230, 7
      %v2335 = vsel %vm375, %v2333, %v2334
      %v2336 = vrot.slane %v2231, 7
      %v2337 = vrot.slane %v2232, 7
      %v2338 = vsel %vm375, %v2336, %v2337
      %v2339 = vrot.slane %v2233, 7
      %v2340 = vrot.slane %v2234, 7
      %v2341 = vsel %vm375, %v2339, %v2340
      %v2342 = vrot.slane %v2235, 7
      %v2343 = vrot.slane %v2236, 7
      %v2344 = vsel %vm375, %v2342, %v2343
      %v2345 = vrot.slane %v2237, 7
      %v2346 = vrot.slane %v2238, 7
      %v2347 = vsel %vm375, %v2345, %v2346
      %v2348 = vrot.slane %v2239, 7
      %v2349 = vrot.slane %v2240, 7
      %v2350 = vsel %vm375, %v2348, %v2349
      %v2351 = vrot.slane %v2241, 7
      %v2352 = vrot.slane %v2242, 7
      %v2353 = vsel %vm375, %v2351, %v2352
      %v2354 = vrot.slane %v2243, 7
      %v2355 = vrot.slane %v2244, 7
      %v2356 = vsel %vm375, %v2354, %v2355
      %v2404 = vrot.slane %v2216, 5
      %v2405 = vrot.slane %v2214, 5
      %v2406 = vrot.slane %v2218, 5
      %v2407 = vrot.slane %v2220, 5
      %v2408 = vrot.slane %v2222, 5
      %v2409 = vrot.slane %v2224, 5
      %v2410 = vrot.slane %v2226, 5
      %v2411 = vrot.slane %v2228, 5
      %v2412 = vrot.slane %v2230, 5
      %v2413 = vrot.slane %v2232, 5
      %v2414 = vrot.slane %v2234, 5
      %v2415 = vrot.slane %v2236, 5
      %v2416 = vrot.slane %v2238, 5
      %v2417 = vrot.slane %v2240, 5
      %v2418 = vrot.slane %v2242, 5
      %v2419 = vrot.slane %v2244, 5
      %v2436 = vsel %vm375, %v2261, %v2309
      %v2437 = vsel %vm375, %v2262, %v2312
      %v2438 = vsel %vm375, %v2263, %v2315
      %v2439 = vsel %vm375, %v2264, %v2318
      %v2440 = vsel %vm375, %v2265, %v2321
      %v2441 = vsel %vm375, %v2266, %v2324
      %v2442 = vsel %vm375, %v2267, %v2327
      %v2443 = vsel %vm375, %v2268, %v2330
      %v2444 = vsel %vm375, %v2269, %v2333
      %v2445 = vsel %vm375, %v2270, %v2336
      %v2446 = vsel %vm375, %v2271, %v2339
      %v2447 = vsel %vm375, %v2272, %v2342
      %v2448 = vsel %vm375, %v2273, %v2345
      %v2449 = vsel %vm375, %v2274, %v2348
      %v2450 = vsel %vm375, %v2275, %v2351
      %v2451 = vsel %vm375, %v2276, %v2354
      %v2452 = vsel %vm375, %v2310, %v2404
      %v2453 = vsel %vm375, %v2313, %v2405
      %v2454 = vsel %vm375, %v2316, %v2406
      %v2455 = vsel %vm375, %v2319, %v2407
      %v2456 = vsel %vm375, %v2322, %v2408
      %v2457 = vsel %vm375, %v2325, %v2409
      %v2458 = vsel %vm375, %v2328, %v2410
      %v2459 = vsel %vm375, %v2331, %v2411
      %v2460 = vsel %vm375, %v2334, %v2412
      %v2461 = vsel %vm375, %v2337, %v2413
      %v2462 = vsel %vm375, %v2340, %v2414
      %v2463 = vsel %vm375, %v2343, %v2415
      %v2464 = vsel %vm375, %v2346, %v2416
      %v2465 = vsel %vm375, %v2349, %v2417
      %v2466 = vsel %vm375, %v2352, %v2418
      %v2467 = vsel %vm375, %v2355, %v2419
      %v2498 = vrot.slane %v2436, 1
      %v2499 = vrot.slane %v2311, 1
      %v2500 = vsel %vm565, %v2498, %v2499
      %v2501 = vrot.slane %v2452, 1
      %v2502 = vsel %vm565, %v2499, %v2501
      %v2503 = vrot.slane %v2437, 1
      %v2504 = vrot.slane %v2314, 1
      %v2505 = vsel %vm565, %v2503, %v2504
      %v2506 = vrot.slane %v2453, 1
      %v2507 = vsel %vm565, %v2504, %v2506
      %v2508 = vrot.slane %v2438, 1
      %v2509 = vrot.slane %v2317, 1
      %v2510 = vsel %vm565, %v2508, %v2509
      %v2511 = vrot.slane %v2454, 1
      %v2512 = vsel %vm565, %v2509, %v2511
      %v2513 = vrot.slane %v2439, 1
      %v2514 = vrot.slane %v2320, 1
      %v2515 = vsel %vm565, %v2513, %v2514
      %v2516 = vrot.slane %v2455, 1
      %v2517 = vsel %vm565, %v2514, %v2516
      %v2518 = vrot.slane %v2440, 1
      %v2519 = vrot.slane %v2323, 1
      %v2520 = vsel %vm565, %v2518, %v2519
      %v2521 = vrot.slane %v2456, 1
      %v2522 = vsel %vm565, %v2519, %v2521
      %v2523 = vrot.slane %v2441, 1
      %v2524 = vrot.slane %v2326, 1
      %v2525 = vsel %vm565, %v2523, %v2524
      %v2526 = vrot.slane %v2457, 1
      %v2527 = vsel %vm565, %v2524, %v2526
      %v2528 = vrot.slane %v2442, 1
      %v2529 = vrot.slane %v2329, 1
      %v2530 = vsel %vm565, %v2528, %v2529
      %v2531 = vrot.slane %v2458, 1
      %v2532 = vsel %vm565, %v2529, %v2531
      %v2533 = vrot.slane %v2443, 1
      %v2534 = vrot.slane %v2332, 1
      %v2535 = vsel %vm565, %v2533, %v2534
      %v2536 = vrot.slane %v2459, 1
      %v2537 = vsel %vm565, %v2534, %v2536
      %v2538 = vrot.slane %v2444, 1
      %v2539 = vrot.slane %v2335, 1
      %v2540 = vsel %vm565, %v2538, %v2539
      %v2541 = vrot.slane %v2460, 1
      %v2542 = vsel %vm565, %v2539, %v2541
      %v2543 = vrot.slane %v2445, 1
      %v2544 = vrot.slane %v2338, 1
      %v2545 = vsel %vm565, %v2543, %v2544
      %v2546 = vrot.slane %v2461, 1
      %v2547 = vsel %vm565, %v2544, %v2546
      %v2548 = vrot.slane %v2446, 1
      %v2549 = vrot.slane %v2341, 1
      %v2550 = vsel %vm565, %v2548, %v2549
      %v2551 = vrot.slane %v2462, 1
      %v2552 = vsel %vm565, %v2549, %v2551
      %v2553 = vrot.slane %v2447, 1
      %v2554 = vrot.slane %v2344, 1
      %v2555 = vsel %vm565, %v2553, %v2554
      %v2556 = vrot.slane %v2463, 1
      %v2557 = vsel %vm565, %v2554, %v2556
      %v2558 = vrot.slane %v2448, 1
      %v2559 = vrot.slane %v2347, 1
      %v2560 = vsel %vm565, %v2558, %v2559
      %v2561 = vrot.slane %v2464, 1
      %v2562 = vsel %vm565, %v2559, %v2561
      %v2563 = vrot.slane %v2449, 1
      %v2564 = vrot.slane %v2350, 1
      %v2565 = vsel %vm565, %v2563, %v2564
      %v2566 = vrot.slane %v2465, 1
      %v2567 = vsel %vm565, %v2564, %v2566
      %v2568 = vrot.slane %v2450, 1
      %v2569 = vrot.slane %v2353, 1
      %v2570 = vsel %vm565, %v2568, %v2569
      %v2571 = vrot.slane %v2466, 1
      %v2572 = vsel %vm565, %v2569, %v2571
      %v2573 = vrot.slane %v2436, 2
      %v2574 = vrot.slane %v2311, 2
      %v2575 = vsel %vm641, %v2573, %v2574
      %v2576 = vrot.slane %v2452, 2
      %v2577 = vsel %vm641, %v2574, %v2576
      %v2578 = vrot.slane %v2437, 2
      %v2579 = vrot.slane %v2314, 2
      %v2580 = vsel %vm641, %v2578, %v2579
      %v2581 = vrot.slane %v2453, 2
      %v2582 = vsel %vm641, %v2579, %v2581
      %v2583 = vrot.slane %v2438, 2
      %v2584 = vrot.slane %v2317, 2
      %v2585 = vsel %vm641, %v2583, %v2584
      %v2586 = vrot.slane %v2454, 2
      %v2587 = vsel %vm641, %v2584, %v2586
      %v2588 = vrot.slane %v2439, 2
      %v2589 = vrot.slane %v2320, 2
      %v2590 = vsel %vm641, %v2588, %v2589
      %v2591 = vrot.slane %v2455, 2
      %v2592 = vsel %vm641, %v2589, %v2591
      %v2593 = vrot.slane %v2440, 2
      %v2594 = vrot.slane %v2323, 2
      %v2595 = vsel %vm641, %v2593, %v2594
      %v2596 = vrot.slane %v2456, 2
      %v2597 = vsel %vm641, %v2594, %v2596
      %v2598 = vrot.slane %v2441, 2
      %v2599 = vrot.slane %v2326, 2
      %v2600 = vsel %vm641, %v2598, %v2599
      %v2601 = vrot.slane %v2457, 2
      %v2602 = vsel %vm641, %v2599, %v2601
      %v2603 = vrot.slane %v2442, 2
      %v2604 = vrot.slane %v2329, 2
      %v2605 = vsel %vm641, %v2603, %v2604
      %v2606 = vrot.slane %v2458, 2
      %v2607 = vsel %vm641, %v2604, %v2606
      %v2608 = vrot.slane %v2443, 2
      %v2609 = vrot.slane %v2332, 2
      %v2610 = vsel %vm641, %v2608, %v2609
      %v2611 = vrot.slane %v2459, 2
      %v2612 = vsel %vm641, %v2609, %v2611
      %v2613 = vrot.slane %v2444, 2
      %v2614 = vrot.slane %v2335, 2
      %v2615 = vsel %vm641, %v2613, %v2614
      %v2616 = vrot.slane %v2460, 2
      %v2617 = vsel %vm641, %v2614, %v2616
      %v2618 = vrot.slane %v2445, 2
      %v2619 = vrot.slane %v2338, 2
      %v2620 = vsel %vm641, %v2618, %v2619
      %v2621 = vrot.slane %v2461, 2
      %v2622 = vsel %vm641, %v2619, %v2621
      %v2623 = vrot.slane %v2446, 2
      %v2624 = vrot.slane %v2341, 2
      %v2625 = vsel %vm641, %v2623, %v2624
      %v2626 = vrot.slane %v2462, 2
      %v2627 = vsel %vm641, %v2624, %v2626
      %v2628 = vrot.slane %v2447, 2
      %v2629 = vrot.slane %v2344, 2
      %v2630 = vsel %vm641, %v2628, %v2629
      %v2631 = vrot.slane %v2463, 2
      %v2632 = vsel %vm641, %v2629, %v2631
      %v2633 = vrot.slane %v2448, 2
      %v2634 = vrot.slane %v2347, 2
      %v2635 = vsel %vm641, %v2633, %v2634
      %v2636 = vrot.slane %v2464, 2
      %v2637 = vsel %vm641, %v2634, %v2636
      %v2638 = vrot.slane %v2449, 2
      %v2639 = vrot.slane %v2350, 2
      %v2640 = vsel %vm641, %v2638, %v2639
      %v2641 = vrot.slane %v2465, 2
      %v2642 = vsel %vm641, %v2639, %v2641
      %v2643 = vrot.slane %v2450, 2
      %v2644 = vrot.slane %v2353, 2
      %v2645 = vsel %vm641, %v2643, %v2644
      %v2646 = vrot.slane %v2466, 2
      %v2647 = vsel %vm641, %v2644, %v2646
      %v2650 = vrot.slane %v2451, 1
      %v2651 = vrot.slane %v2356, 1
      %v2652 = vsel %vm565, %v2650, %v2651
      %v2653 = vrot.slane %v2467, 1
      %v2654 = vsel %vm565, %v2651, %v2653
      %v2655 = vrot.slane %v2451, 2
      %v2656 = vrot.slane %v2356, 2
      %v2657 = vsel %vm641, %v2655, %v2656
      %v2658 = vrot.slane %v2467, 2
      %v2659 = vsel %vm641, %v2656, %v2658
      %2660 = vrot.lane.b32.xlu0 %v2500, 4
      %v2661 = vpop.permute.xlu0 %2660
      %2662 = vrot.lane.b32.xlu0 %v2502, 4
      %v2663 = vpop.permute.xlu0 %2662
      %2664 = vrot.lane.b32.xlu0 %v2505, 4
      %v2665 = vpop.permute.xlu0 %2664
      %2666 = vrot.lane.b32.xlu0 %v2507, 4
      %v2667 = vpop.permute.xlu0 %2666
      %2668 = vrot.lane.b32.xlu0 %v2510, 4
      %v2669 = vpop.permute.xlu0 %2668
      %2670 = vrot.lane.b32.xlu0 %v2512, 4
      %v2671 = vpop.permute.xlu0 %2670
      %2672 = vrot.lane.b32.xlu0 %v2515, 4
      %v2673 = vpop.permute.xlu0 %2672
      %2674 = vrot.lane.b32.xlu0 %v2517, 4
      %v2675 = vpop.permute.xlu0 %2674
      %2676 = vrot.lane.b32.xlu0 %v2520, 4
      %v2677 = vpop.permute.xlu0 %2676
      %2678 = vrot.lane.b32.xlu0 %v2522, 4
      %v2679 = vpop.permute.xlu0 %2678
      %2680 = vrot.lane.b32.xlu0 %v2525, 4
      %v2681 = vpop.permute.xlu0 %2680
      %2682 = vrot.lane.b32.xlu0 %v2527, 4
      %v2683 = vpop.permute.xlu0 %2682
      %2684 = vrot.lane.b32.xlu0 %v2530, 4
      %v2685 = vpop.permute.xlu0 %2684
      %2686 = vrot.lane.b32.xlu0 %v2532, 4
      %v2687 = vpop.permute.xlu0 %2686
      %2688 = vrot.lane.b32.xlu0 %v2535, 4
      %v2689 = vpop.permute.xlu0 %2688
      %2690 = vrot.lane.b32.xlu0 %v2537, 4
      %v2691 = vpop.permute.xlu0 %2690
      %2692 = vrot.lane.b32.xlu0 %v2540, 4
      %v2693 = vpop.permute.xlu0 %2692
      %2694 = vrot.lane.b32.xlu0 %v2542, 4
      %v2695 = vpop.permute.xlu0 %2694
      %2696 = vrot.lane.b32.xlu0 %v2545, 4
      %v2697 = vpop.permute.xlu0 %2696
      %2698 = vrot.lane.b32.xlu0 %v2547, 4
      %v2699 = vpop.permute.xlu0 %2698
      %2700 = vrot.lane.b32.xlu0 %v2550, 4
      %v2701 = vpop.permute.xlu0 %2700
      %2702 = vrot.lane.b32.xlu0 %v2552, 4
      %v2703 = vpop.permute.xlu0 %2702
      %2704 = vrot.lane.b32.xlu0 %v2555, 4
      %v2705 = vpop.permute.xlu0 %2704
      %2706 = vrot.lane.b32.xlu0 %v2557, 4
      %v2707 = vpop.permute.xlu0 %2706
      %2708 = vrot.lane.b32.xlu0 %v2560, 4
      %v2709 = vpop.permute.xlu0 %2708
      %2710 = vrot.lane.b32.xlu0 %v2562, 4
      %v2711 = vpop.permute.xlu0 %2710
      %2712 = vrot.lane.b32.xlu0 %v2565, 4
      %v2713 = vpop.permute.xlu0 %2712
      %2714 = vrot.lane.b32.xlu0 %v2567, 4
      %v2715 = vpop.permute.xlu0 %2714
      %2716 = vrot.lane.b32.xlu0 %v2570, 4
      %v2717 = vpop.permute.xlu0 %2716
      %2718 = vrot.lane.b32.xlu0 %v2572, 4
      %v2719 = vpop.permute.xlu0 %2718
      %2750 = vrot.lane.b32.xlu0 %v2575, 8
      %v2751 = vpop.permute.xlu0 %2750
      %2752 = vrot.lane.b32.xlu0 %v2577, 8
      %v2753 = vpop.permute.xlu0 %2752
      %2754 = vrot.lane.b32.xlu0 %v2580, 8
      %v2755 = vpop.permute.xlu0 %2754
      %2756 = vrot.lane.b32.xlu0 %v2582, 8
      %v2757 = vpop.permute.xlu0 %2756
      %2758 = vrot.lane.b32.xlu0 %v2585, 8
      %v2759 = vpop.permute.xlu0 %2758
      %2760 = vrot.lane.b32.xlu0 %v2587, 8
      %v2761 = vpop.permute.xlu0 %2760
      %2762 = vrot.lane.b32.xlu0 %v2590, 8
      %v2763 = vpop.permute.xlu0 %2762
      %2764 = vrot.lane.b32.xlu0 %v2592, 8
      %v2765 = vpop.permute.xlu0 %2764
      %2766 = vrot.lane.b32.xlu0 %v2595, 8
      %v2767 = vpop.permute.xlu0 %2766
      %2768 = vrot.lane.b32.xlu0 %v2597, 8
      %v2769 = vpop.permute.xlu0 %2768
      %2770 = vrot.lane.b32.xlu0 %v2600, 8
      %v2771 = vpop.permute.xlu0 %2770
      %2772 = vrot.lane.b32.xlu0 %v2602, 8
      %v2773 = vpop.permute.xlu0 %2772
      %2774 = vrot.lane.b32.xlu0 %v2605, 8
      %v2775 = vpop.permute.xlu0 %2774
      %2776 = vrot.lane.b32.xlu0 %v2607, 8
      %v2777 = vpop.permute.xlu0 %2776
      %2778 = vrot.lane.b32.xlu0 %v2610, 8
      %v2779 = vpop.permute.xlu0 %2778
      %2780 = vrot.lane.b32.xlu0 %v2612, 8
      %v2781 = vpop.permute.xlu0 %2780
      %2782 = vrot.lane.b32.xlu0 %v2615, 8
      %v2783 = vpop.permute.xlu0 %2782
      %2784 = vrot.lane.b32.xlu0 %v2617, 8
      %v2785 = vpop.permute.xlu0 %2784
      %2786 = vrot.lane.b32.xlu0 %v2620, 8
      %v2787 = vpop.permute.xlu0 %2786
      %2788 = vrot.lane.b32.xlu0 %v2622, 8
      %v2789 = vpop.permute.xlu0 %2788
      %2790 = vrot.lane.b32.xlu0 %v2625, 8
      %v2791 = vpop.permute.xlu0 %2790
      %2792 = vrot.lane.b32.xlu0 %v2627, 8
      %v2793 = vpop.permute.xlu0 %2792
      %2794 = vrot.lane.b32.xlu0 %v2630, 8
      %v2795 = vpop.permute.xlu0 %2794
      %2796 = vrot.lane.b32.xlu0 %v2632, 8
      %v2797 = vpop.permute.xlu0 %2796
      %2798 = vrot.lane.b32.xlu0 %v2635, 8
      %v2799 = vpop.permute.xlu0 %2798
      %2800 = vrot.lane.b32.xlu0 %v2637, 8
      %v2801 = vpop.permute.xlu0 %2800
      %2802 = vrot.lane.b32.xlu0 %v2640, 8
      %v2803 = vpop.permute.xlu0 %2802
      %2804 = vrot.lane.b32.xlu0 %v2642, 8
      %v2805 = vpop.permute.xlu0 %2804
      %2806 = vrot.lane.b32.xlu0 %v2645, 8
      %v2807 = vpop.permute.xlu0 %2806
      %2808 = vrot.lane.b32.xlu0 %v2647, 8
      %v2809 = vpop.permute.xlu0 %2808
      %2840 = vrot.lane.b32.xlu0 %v2437, 12
      %v2841 = vpop.permute.xlu0 %2840
      %2842 = vrot.lane.b32.xlu0 %v2314, 12
      %v2843 = vpop.permute.xlu0 %2842
      %2844 = vrot.lane.b32.xlu0 %v2436, 12
      %v2845 = vpop.permute.xlu0 %2844
      %2846 = vrot.lane.b32.xlu0 %v2311, 12
      %v2847 = vpop.permute.xlu0 %2846
      %2848 = vrot.lane.b32.xlu0 %v2438, 12
      %v2849 = vpop.permute.xlu0 %2848
      %2850 = vrot.lane.b32.xlu0 %v2317, 12
      %v2851 = vpop.permute.xlu0 %2850
      %2852 = vrot.lane.b32.xlu0 %v2439, 12
      %v2853 = vpop.permute.xlu0 %2852
      %2854 = vrot.lane.b32.xlu0 %v2320, 12
      %v2855 = vpop.permute.xlu0 %2854
      %2856 = vrot.lane.b32.xlu0 %v2440, 12
      %v2857 = vpop.permute.xlu0 %2856
      %2858 = vrot.lane.b32.xlu0 %v2323, 12
      %v2859 = vpop.permute.xlu0 %2858
      %2860 = vrot.lane.b32.xlu0 %v2441, 12
      %v2861 = vpop.permute.xlu0 %2860
      %2862 = vrot.lane.b32.xlu0 %v2326, 12
      %v2863 = vpop.permute.xlu0 %2862
      %2864 = vrot.lane.b32.xlu0 %v2442, 12
      %v2865 = vpop.permute.xlu0 %2864
      %2866 = vrot.lane.b32.xlu0 %v2329, 12
      %v2867 = vpop.permute.xlu0 %2866
      %2868 = vrot.lane.b32.xlu0 %v2443, 12
      %v2869 = vpop.permute.xlu0 %2868
      %2870 = vrot.lane.b32.xlu0 %v2332, 12
      %v2871 = vpop.permute.xlu0 %2870
      %2872 = vrot.lane.b32.xlu0 %v2444, 12
      %v2873 = vpop.permute.xlu0 %2872
      %2874 = vrot.lane.b32.xlu0 %v2335, 12
      %v2875 = vpop.permute.xlu0 %2874
      %2876 = vrot.lane.b32.xlu0 %v2445, 12
      %v2877 = vpop.permute.xlu0 %2876
      %2878 = vrot.lane.b32.xlu0 %v2338, 12
      %v2879 = vpop.permute.xlu0 %2878
      %2880 = vrot.lane.b32.xlu0 %v2446, 12
      %v2881 = vpop.permute.xlu0 %2880
      %2882 = vrot.lane.b32.xlu0 %v2341, 12
      %v2883 = vpop.permute.xlu0 %2882
      %2884 = vrot.lane.b32.xlu0 %v2447, 12
      %v2885 = vpop.permute.xlu0 %2884
      %2886 = vrot.lane.b32.xlu0 %v2344, 12
      %v2887 = vpop.permute.xlu0 %2886
      %2888 = vrot.lane.b32.xlu0 %v2448, 12
      %v2889 = vpop.permute.xlu0 %2888
      %2890 = vrot.lane.b32.xlu0 %v2347, 12
      %v2891 = vpop.permute.xlu0 %2890
      %2892 = vrot.lane.b32.xlu0 %v2449, 12
      %v2893 = vpop.permute.xlu0 %2892
      %2894 = vrot.lane.b32.xlu0 %v2350, 12
      %v2895 = vpop.permute.xlu0 %2894
      %2896 = vrot.lane.b32.xlu0 %v2450, 12
      %v2897 = vpop.permute.xlu0 %2896
      %2898 = vrot.lane.b32.xlu0 %v2353, 12
      %v2899 = vpop.permute.xlu0 %2898
      %2900 = vrot.lane.b32.xlu0 %v2451, 12
      %v2901 = vpop.permute.xlu0 %2900
      %2902 = vrot.lane.b32.xlu0 %v2356, 12
      %v2903 = vpop.permute.xlu0 %2902
      %2936 = vrot.lane.b32.xlu0 %v2505, 16
      %v2937 = vpop.permute.xlu0 %2936
      %2938 = vrot.lane.b32.xlu0 %v2507, 16
      %v2939 = vpop.permute.xlu0 %2938
      %2940 = vrot.lane.b32.xlu0 %v2500, 16
      %v2941 = vpop.permute.xlu0 %2940
      %2942 = vrot.lane.b32.xlu0 %v2502, 16
      %v2943 = vpop.permute.xlu0 %2942
      %2944 = vrot.lane.b32.xlu0 %v2510, 16
      %v2945 = vpop.permute.xlu0 %2944
      %2946 = vrot.lane.b32.xlu0 %v2512, 16
      %v2947 = vpop.permute.xlu0 %2946
      %2948 = vrot.lane.b32.xlu0 %v2515, 16
      %v2949 = vpop.permute.xlu0 %2948
      %2950 = vrot.lane.b32.xlu0 %v2517, 16
      %v2951 = vpop.permute.xlu0 %2950
      %2952 = vrot.lane.b32.xlu0 %v2520, 16
      %v2953 = vpop.permute.xlu0 %2952
      %2954 = vrot.lane.b32.xlu0 %v2522, 16
      %v2955 = vpop.permute.xlu0 %2954
      %2956 = vrot.lane.b32.xlu0 %v2525, 16
      %v2957 = vpop.permute.xlu0 %2956
      %2958 = vrot.lane.b32.xlu0 %v2527, 16
      %v2959 = vpop.permute.xlu0 %2958
      %2960 = vrot.lane.b32.xlu0 %v2530, 16
      %v2961 = vpop.permute.xlu0 %2960
      %2962 = vrot.lane.b32.xlu0 %v2532, 16
      %v2963 = vpop.permute.xlu0 %2962
      %2964 = vrot.lane.b32.xlu0 %v2535, 16
      %v2965 = vpop.permute.xlu0 %2964
      %2966 = vrot.lane.b32.xlu0 %v2537, 16
      %v2967 = vpop.permute.xlu0 %2966
      %2968 = vrot.lane.b32.xlu0 %v2540, 16
      %v2969 = vpop.permute.xlu0 %2968
      %2970 = vrot.lane.b32.xlu0 %v2542, 16
      %v2971 = vpop.permute.xlu0 %2970
      %2972 = vrot.lane.b32.xlu0 %v2545, 16
      %v2973 = vpop.permute.xlu0 %2972
      %2974 = vrot.lane.b32.xlu0 %v2547, 16
      %v2975 = vpop.permute.xlu0 %2974
      %2976 = vrot.lane.b32.xlu0 %v2550, 16
      %v2977 = vpop.permute.xlu0 %2976
      %2978 = vrot.lane.b32.xlu0 %v2552, 16
      %v2979 = vpop.permute.xlu0 %2978
      %2980 = vrot.lane.b32.xlu0 %v2555, 16
      %v2981 = vpop.permute.xlu0 %2980
      %2982 = vrot.lane.b32.xlu0 %v2557, 16
      %v2983 = vpop.permute.xlu0 %2982
      %2984 = vrot.lane.b32.xlu0 %v2560, 16
      %v2985 = vpop.permute.xlu0 %2984
      %2986 = vrot.lane.b32.xlu0 %v2562, 16
      %v2987 = vpop.permute.xlu0 %2986
      %2988 = vrot.lane.b32.xlu0 %v2565, 16
      %v2989 = vpop.permute.xlu0 %2988
      %2990 = vrot.lane.b32.xlu0 %v2567, 16
      %v2991 = vpop.permute.xlu0 %2990
      %2992 = vrot.lane.b32.xlu0 %v2570, 16
      %v2993 = vpop.permute.xlu0 %2992
      %2994 = vrot.lane.b32.xlu0 %v2572, 16
      %v2995 = vpop.permute.xlu0 %2994
      %2996 = vrot.lane.b32.xlu0 %v2652, 16
      %v2997 = vpop.permute.xlu0 %2996
      %2998 = vrot.lane.b32.xlu0 %v2654, 16
      %v2999 = vpop.permute.xlu0 %2998
      %3032 = vrot.lane.b32.xlu0 %v2580, 20
      %v3033 = vpop.permute.xlu0 %3032
      %3034 = vrot.lane.b32.xlu0 %v2582, 20
      %v3035 = vpop.permute.xlu0 %3034
      %3036 = vrot.lane.b32.xlu0 %v2575, 20
      %v3037 = vpop.permute.xlu0 %3036
      %3038 = vrot.lane.b32.xlu0 %v2577, 20
      %v3039 = vpop.permute.xlu0 %3038
      %3040 = vrot.lane.b32.xlu0 %v2585, 20
      %v3041 = vpop.permute.xlu0 %3040
      %3042 = vrot.lane.b32.xlu0 %v2587, 20
      %v3043 = vpop.permute.xlu0 %3042
      %3044 = vrot.lane.b32.xlu0 %v2590, 20
      %v3045 = vpop.permute.xlu0 %3044
      %3046 = vrot.lane.b32.xlu0 %v2592, 20
      %v3047 = vpop.permute.xlu0 %3046
      %3048 = vrot.lane.b32.xlu0 %v2595, 20
      %v3049 = vpop.permute.xlu0 %3048
      %3050 = vrot.lane.b32.xlu0 %v2597, 20
      %v3051 = vpop.permute.xlu0 %3050
      %3052 = vrot.lane.b32.xlu0 %v2600, 20
      %v3053 = vpop.permute.xlu0 %3052
      %3054 = vrot.lane.b32.xlu0 %v2602, 20
      %v3055 = vpop.permute.xlu0 %3054
      %3056 = vrot.lane.b32.xlu0 %v2605, 20
      %v3057 = vpop.permute.xlu0 %3056
      %3058 = vrot.lane.b32.xlu0 %v2607, 20
      %v3059 = vpop.permute.xlu0 %3058
      %3060 = vrot.lane.b32.xlu0 %v2610, 20
      %v3061 = vpop.permute.xlu0 %3060
      %3062 = vrot.lane.b32.xlu0 %v2612, 20
      %v3063 = vpop.permute.xlu0 %3062
      %3064 = vrot.lane.b32.xlu0 %v2615, 20
      %v3065 = vpop.permute.xlu0 %3064
      %3066 = vrot.lane.b32.xlu0 %v2617, 20
      %v3067 = vpop.permute.xlu0 %3066
      %3068 = vrot.lane.b32.xlu0 %v2620, 20
      %v3069 = vpop.permute.xlu0 %3068
      %3070 = vrot.lane.b32.xlu0 %v2622, 20
      %v3071 = vpop.permute.xlu0 %3070
      %3072 = vrot.lane.b32.xlu0 %v2625, 20
      %v3073 = vpop.permute.xlu0 %3072
      %3074 = vrot.lane.b32.xlu0 %v2627, 20
      %v3075 = vpop.permute.xlu0 %3074
      %3076 = vrot.lane.b32.xlu0 %v2630, 20
      %v3077 = vpop.permute.xlu0 %3076
      %3078 = vrot.lane.b32.xlu0 %v2632, 20
      %v3079 = vpop.permute.xlu0 %3078
      %3080 = vrot.lane.b32.xlu0 %v2635, 20
      %v3081 = vpop.permute.xlu0 %3080
      %3082 = vrot.lane.b32.xlu0 %v2637, 20
      %v3083 = vpop.permute.xlu0 %3082
      %3084 = vrot.lane.b32.xlu0 %v2640, 20
      %v3085 = vpop.permute.xlu0 %3084
      %3086 = vrot.lane.b32.xlu0 %v2642, 20
      %v3087 = vpop.permute.xlu0 %3086
      %3088 = vrot.lane.b32.xlu0 %v2645, 20
      %v3089 = vpop.permute.xlu0 %3088
      %3090 = vrot.lane.b32.xlu0 %v2647, 20
      %v3091 = vpop.permute.xlu0 %3090
      %3092 = vrot.lane.b32.xlu0 %v2657, 20
      %v3093 = vpop.permute.xlu0 %3092
      %3094 = vrot.lane.b32.xlu0 %v2659, 20
      %v3095 = vpop.permute.xlu0 %3094
      %3128 = vrot.lane.b32.xlu0 %v2436, 24
      %v3129 = vpop.permute.xlu0 %3128
      %3130 = vrot.lane.b32.xlu0 %v2311, 24
      %v3131 = vpop.permute.xlu0 %3130
      %3132 = vrot.lane.b32.xlu0 %v2438, 24
      %v3133 = vpop.permute.xlu0 %3132
      %3134 = vrot.lane.b32.xlu0 %v2317, 24
      %v3135 = vpop.permute.xlu0 %3134
      %3136 = vrot.lane.b32.xlu0 %v2439, 24
      %v3137 = vpop.permute.xlu0 %3136
      %3138 = vrot.lane.b32.xlu0 %v2320, 24
      %v3139 = vpop.permute.xlu0 %3138
      %3140 = vrot.lane.b32.xlu0 %v2440, 24
      %v3141 = vpop.permute.xlu0 %3140
      %3142 = vrot.lane.b32.xlu0 %v2323, 24
      %v3143 = vpop.permute.xlu0 %3142
      %3144 = vrot.lane.b32.xlu0 %v2441, 24
      %v3145 = vpop.permute.xlu0 %3144
      %3146 = vrot.lane.b32.xlu0 %v2326, 24
      %v3147 = vpop.permute.xlu0 %3146
      %3148 = vrot.lane.b32.xlu0 %v2442, 24
      %v3149 = vpop.permute.xlu0 %3148
      %3150 = vrot.lane.b32.xlu0 %v2329, 24
      %v3151 = vpop.permute.xlu0 %3150
      %3152 = vrot.lane.b32.xlu0 %v2443, 24
      %v3153 = vpop.permute.xlu0 %3152
      %3154 = vrot.lane.b32.xlu0 %v2332, 24
      %v3155 = vpop.permute.xlu0 %3154
      %3156 = vrot.lane.b32.xlu0 %v2444, 24
      %v3157 = vpop.permute.xlu0 %3156
      %3158 = vrot.lane.b32.xlu0 %v2335, 24
      %v3159 = vpop.permute.xlu0 %3158
      %3160 = vrot.lane.b32.xlu0 %v2445, 24
      %v3161 = vpop.permute.xlu0 %3160
      %3162 = vrot.lane.b32.xlu0 %v2338, 24
      %v3163 = vpop.permute.xlu0 %3162
      %3164 = vrot.lane.b32.xlu0 %v2446, 24
      %v3165 = vpop.permute.xlu0 %3164
      %3166 = vrot.lane.b32.xlu0 %v2341, 24
      %v3167 = vpop.permute.xlu0 %3166
      %3168 = vrot.lane.b32.xlu0 %v2447, 24
      %v3169 = vpop.permute.xlu0 %3168
      %3170 = vrot.lane.b32.xlu0 %v2344, 24
      %v3171 = vpop.permute.xlu0 %3170
      %3172 = vrot.lane.b32.xlu0 %v2448, 24
      %v3173 = vpop.permute.xlu0 %3172
      %3174 = vrot.lane.b32.xlu0 %v2347, 24
      %v3175 = vpop.permute.xlu0 %3174
      %3176 = vrot.lane.b32.xlu0 %v2449, 24
      %v3177 = vpop.permute.xlu0 %3176
      %3178 = vrot.lane.b32.xlu0 %v2350, 24
      %v3179 = vpop.permute.xlu0 %3178
      %3180 = vrot.lane.b32.xlu0 %v2450, 24
      %v3181 = vpop.permute.xlu0 %3180
      %3182 = vrot.lane.b32.xlu0 %v2353, 24
      %v3183 = vpop.permute.xlu0 %3182
      %3184 = vrot.lane.b32.xlu0 %v2451, 24
      %v3185 = vpop.permute.xlu0 %3184
      %3186 = vrot.lane.b32.xlu0 %v2356, 24
      %v3187 = vpop.permute.xlu0 %3186
      %3218 = vrot.lane.b32.xlu0 %v2500, 28
      %v3219 = vpop.permute.xlu0 %3218
      %3220 = vrot.lane.b32.xlu0 %v2502, 28
      %v3221 = vpop.permute.xlu0 %3220
      %3222 = vrot.lane.b32.xlu0 %v2510, 28
      %v3223 = vpop.permute.xlu0 %3222
      %3224 = vrot.lane.b32.xlu0 %v2512, 28
      %v3225 = vpop.permute.xlu0 %3224
      %3226 = vrot.lane.b32.xlu0 %v2515, 28
      %v3227 = vpop.permute.xlu0 %3226
      %3228 = vrot.lane.b32.xlu0 %v2517, 28
      %v3229 = vpop.permute.xlu0 %3228
      %3230 = vrot.lane.b32.xlu0 %v2520, 28
      %v3231 = vpop.permute.xlu0 %3230
      %3232 = vrot.lane.b32.xlu0 %v2522, 28
      %v3233 = vpop.permute.xlu0 %3232
      %3234 = vrot.lane.b32.xlu0 %v2525, 28
      %v3235 = vpop.permute.xlu0 %3234
      %3236 = vrot.lane.b32.xlu0 %v2527, 28
      %v3237 = vpop.permute.xlu0 %3236
      %3238 = vrot.lane.b32.xlu0 %v2530, 28
      %v3239 = vpop.permute.xlu0 %3238
      %3240 = vrot.lane.b32.xlu0 %v2532, 28
      %v3241 = vpop.permute.xlu0 %3240
      %3242 = vrot.lane.b32.xlu0 %v2535, 28
      %v3243 = vpop.permute.xlu0 %3242
      %3244 = vrot.lane.b32.xlu0 %v2537, 28
      %v3245 = vpop.permute.xlu0 %3244
      %3246 = vrot.lane.b32.xlu0 %v2540, 28
      %v3247 = vpop.permute.xlu0 %3246
      %3248 = vrot.lane.b32.xlu0 %v2542, 28
      %v3249 = vpop.permute.xlu0 %3248
      %3250 = vrot.lane.b32.xlu0 %v2545, 28
      %v3251 = vpop.permute.xlu0 %3250
      %3252 = vrot.lane.b32.xlu0 %v2547, 28
      %v3253 = vpop.permute.xlu0 %3252
      %3254 = vrot.lane.b32.xlu0 %v2550, 28
      %v3255 = vpop.permute.xlu0 %3254
      %3256 = vrot.lane.b32.xlu0 %v2552, 28
      %v3257 = vpop.permute.xlu0 %3256
      %3258 = vrot.lane.b32.xlu0 %v2555, 28
      %v3259 = vpop.permute.xlu0 %3258
      %3260 = vrot.lane.b32.xlu0 %v2557, 28
      %v3261 = vpop.permute.xlu0 %3260
      %3262 = vrot.lane.b32.xlu0 %v2560, 28
      %v3263 = vpop.permute.xlu0 %3262
      %3264 = vrot.lane.b32.xlu0 %v2562, 28
      %v3265 = vpop.permute.xlu0 %3264
      %3266 = vrot.lane.b32.xlu0 %v2565, 28
      %v3267 = vpop.permute.xlu0 %3266
      %3268 = vrot.lane.b32.xlu0 %v2567, 28
      %v3269 = vpop.permute.xlu0 %3268
      %3270 = vrot.lane.b32.xlu0 %v2570, 28
      %v3271 = vpop.permute.xlu0 %3270
      %3272 = vrot.lane.b32.xlu0 %v2572, 28
      %v3273 = vpop.permute.xlu0 %3272
      %3274 = vrot.lane.b32.xlu0 %v2652, 28
      %v3275 = vpop.permute.xlu0 %3274
      %3276 = vrot.lane.b32.xlu0 %v2654, 28
      %v3277 = vpop.permute.xlu0 %3276
      %3308 = vrot.lane.b32.xlu0 %v2575, 32
      %v3309 = vpop.permute.xlu0 %3308
      %3310 = vrot.lane.b32.xlu0 %v2577, 32
      %v3311 = vpop.permute.xlu0 %3310
      %3312 = vrot.lane.b32.xlu0 %v2585, 32
      %v3313 = vpop.permute.xlu0 %3312
      %3314 = vrot.lane.b32.xlu0 %v2587, 32
      %v3315 = vpop.permute.xlu0 %3314
      %3316 = vrot.lane.b32.xlu0 %v2590, 32
      %v3317 = vpop.permute.xlu0 %3316
      %3318 = vrot.lane.b32.xlu0 %v2592, 32
      %v3319 = vpop.permute.xlu0 %3318
      %3320 = vrot.lane.b32.xlu0 %v2595, 32
      %v3321 = vpop.permute.xlu0 %3320
      %3322 = vrot.lane.b32.xlu0 %v2597, 32
      %v3323 = vpop.permute.xlu0 %3322
      %3324 = vrot.lane.b32.xlu0 %v2600, 32
      %v3325 = vpop.permute.xlu0 %3324
      %3326 = vrot.lane.b32.xlu0 %v2602, 32
      %v3327 = vpop.permute.xlu0 %3326
      %3328 = vrot.lane.b32.xlu0 %v2605, 32
      %v3329 = vpop.permute.xlu0 %3328
      %3330 = vrot.lane.b32.xlu0 %v2607, 32
      %v3331 = vpop.permute.xlu0 %3330
      %3332 = vrot.lane.b32.xlu0 %v2610, 32
      %v3333 = vpop.permute.xlu0 %3332
      %3334 = vrot.lane.b32.xlu0 %v2612, 32
      %v3335 = vpop.permute.xlu0 %3334
      %3336 = vrot.lane.b32.xlu0 %v2615, 32
      %v3337 = vpop.permute.xlu0 %3336
      %3338 = vrot.lane.b32.xlu0 %v2617, 32
      %v3339 = vpop.permute.xlu0 %3338
      %3340 = vrot.lane.b32.xlu0 %v2620, 32
      %v3341 = vpop.permute.xlu0 %3340
      %3342 = vrot.lane.b32.xlu0 %v2622, 32
      %v3343 = vpop.permute.xlu0 %3342
      %3344 = vrot.lane.b32.xlu0 %v2625, 32
      %v3345 = vpop.permute.xlu0 %3344
      %3346 = vrot.lane.b32.xlu0 %v2627, 32
      %v3347 = vpop.permute.xlu0 %3346
      %3348 = vrot.lane.b32.xlu0 %v2630, 32
      %v3349 = vpop.permute.xlu0 %3348
      %3350 = vrot.lane.b32.xlu0 %v2632, 32
      %v3351 = vpop.permute.xlu0 %3350
      %3352 = vrot.lane.b32.xlu0 %v2635, 32
      %v3353 = vpop.permute.xlu0 %3352
      %3354 = vrot.lane.b32.xlu0 %v2637, 32
      %v3355 = vpop.permute.xlu0 %3354
      %3356 = vrot.lane.b32.xlu0 %v2640, 32
      %v3357 = vpop.permute.xlu0 %3356
      %3358 = vrot.lane.b32.xlu0 %v2642, 32
      %v3359 = vpop.permute.xlu0 %3358
      %3360 = vrot.lane.b32.xlu0 %v2645, 32
      %v3361 = vpop.permute.xlu0 %3360
      %3362 = vrot.lane.b32.xlu0 %v2647, 32
      %v3363 = vpop.permute.xlu0 %3362
      %3364 = vrot.lane.b32.xlu0 %v2657, 32
      %v3365 = vpop.permute.xlu0 %3364
      %3366 = vrot.lane.b32.xlu0 %v2659, 32
      %v3367 = vpop.permute.xlu0 %3366
      %v3398 = vsel %vm1467, %v2436, %v2661
      %v3399 = vsel %vm1467, %v2311, %v2663
      %v3400 = vsel %vm1467, %v2437, %v2665
      %v3401 = vsel %vm1467, %v2314, %v2667
      %v3402 = vsel %vm1467, %v2438, %v2669
      %v3403 = vsel %vm1467, %v2317, %v2671
      %v3404 = vsel %vm1467, %v2439, %v2673
      %v3405 = vsel %vm1467, %v2320, %v2675
      %v3406 = vsel %vm1467, %v2440, %v2677
      %v3407 = vsel %vm1467, %v2323, %v2679
      %v3408 = vsel %vm1467, %v2441, %v2681
      %v3409 = vsel %vm1467, %v2326, %v2683
      %v3410 = vsel %vm1467, %v2442, %v2685
      %v3411 = vsel %vm1467, %v2329, %v2687
      %v3412 = vsel %vm1467, %v2443, %v2689
      %v3413 = vsel %vm1467, %v2332, %v2691
      %v3414 = vsel %vm1467, %v2444, %v2693
      %v3415 = vsel %vm1467, %v2335, %v2695
      %v3416 = vsel %vm1467, %v2445, %v2697
      %v3417 = vsel %vm1467, %v2338, %v2699
      %v3418 = vsel %vm1467, %v2446, %v2701
      %v3419 = vsel %vm1467, %v2341, %v2703
      %v3420 = vsel %vm1467, %v2447, %v2705
      %v3421 = vsel %vm1467, %v2344, %v2707
      %v3422 = vsel %vm1467, %v2448, %v2709
      %v3423 = vsel %vm1467, %v2347, %v2711
      %v3424 = vsel %vm1467, %v2449, %v2713
      %v3425 = vsel %vm1467, %v2350, %v2715
      %v3426 = vsel %vm1467, %v2450, %v2717
      %v3427 = vsel %vm1467, %v2353, %v2719
      %v3428 = vsel %vm1498, %v3398, %v2751
      %v3429 = vsel %vm1498, %v3399, %v2753
      %v3430 = vsel %vm1498, %v3400, %v2755
      %v3431 = vsel %vm1498, %v3401, %v2757
      %v3432 = vsel %vm1498, %v3402, %v2759
      %v3433 = vsel %vm1498, %v3403, %v2761
      %v3434 = vsel %vm1498, %v3404, %v2763
      %v3435 = vsel %vm1498, %v3405, %v2765
      %v3436 = vsel %vm1498, %v3406, %v2767
      %v3437 = vsel %vm1498, %v3407, %v2769
      %v3438 = vsel %vm1498, %v3408, %v2771
      %v3439 = vsel %vm1498, %v3409, %v2773
      %v3440 = vsel %vm1498, %v3410, %v2775
      %v3441 = vsel %vm1498, %v3411, %v2777
      %v3442 = vsel %vm1498, %v3412, %v2779
      %v3443 = vsel %vm1498, %v3413, %v2781
      %v3444 = vsel %vm1498, %v3414, %v2783
      %v3445 = vsel %vm1498, %v3415, %v2785
      %v3446 = vsel %vm1498, %v3416, %v2787
      %v3447 = vsel %vm1498, %v3417, %v2789
      %v3448 = vsel %vm1498, %v3418, %v2791
      %v3449 = vsel %vm1498, %v3419, %v2793
      %v3450 = vsel %vm1498, %v3420, %v2795
      %v3451 = vsel %vm1498, %v3421, %v2797
      %v3452 = vsel %vm1498, %v3422, %v2799
      %v3453 = vsel %vm1498, %v3423, %v2801
      %v3454 = vsel %vm1498, %v3424, %v2803
      %v3455 = vsel %vm1498, %v3425, %v2805
      %v3456 = vsel %vm1498, %v3426, %v2807
      %v3457 = vsel %vm1498, %v3427, %v2809
      %v3458 = vsel %vm1529, %v3428, %v2841
      %v3459 = vsel %vm1529, %v3429, %v2843
      %v3460 = vsel %vm1529, %v3430, %v2845
      %v3461 = vsel %vm1529, %v3431, %v2847
      %v3462 = vsel %vm1529, %v3428, %v2849
      %v3463 = vsel %vm1529, %v3429, %v2851
      %v3464 = vsel %vm1529, %v3432, %v2853
      %v3465 = vsel %vm1529, %v3433, %v2855
      %v3466 = vsel %vm1529, %v3434, %v2857
      %v3467 = vsel %vm1529, %v3435, %v2859
      %v3468 = vsel %vm1529, %v3436, %v2861
      %v3469 = vsel %vm1529, %v3437, %v2863
      %v3470 = vsel %vm1529, %v3438, %v2865
      %v3471 = vsel %vm1529, %v3439, %v2867
      %v3472 = vsel %vm1529, %v3440, %v2869
      %v3473 = vsel %vm1529, %v3441, %v2871
      %v3474 = vsel %vm1529, %v3442, %v2873
      %v3475 = vsel %vm1529, %v3443, %v2875
      %v3476 = vsel %vm1529, %v3444, %v2877
      %v3477 = vsel %vm1529, %v3445, %v2879
      %v3478 = vsel %vm1529, %v3446, %v2881
      %v3479 = vsel %vm1529, %v3447, %v2883
      %v3480 = vsel %vm1529, %v3448, %v2885
      %v3481 = vsel %vm1529, %v3449, %v2887
      %v3482 = vsel %vm1529, %v3450, %v2889
      %v3483 = vsel %vm1529, %v3451, %v2891
      %v3484 = vsel %vm1529, %v3452, %v2893
      %v3485 = vsel %vm1529, %v3453, %v2895
      %v3486 = vsel %vm1529, %v3454, %v2897
      %v3487 = vsel %vm1529, %v3455, %v2899
      %v3488 = vsel %vm1529, %v3456, %v2901
      %v3489 = vsel %vm1529, %v3457, %v2903
      %v3490 = vsel %vm1562, %v3458, %v2937
      %v3491 = vsel %vm1562, %v3459, %v2939
      %v3492 = vsel %vm1562, %v3460, %v2941
      %v3493 = vsel %vm1562, %v3461, %v2943
      %v3494 = vsel %vm1562, %v3462, %v2945
      %v3495 = vsel %vm1562, %v3463, %v2947
      %v3496 = vsel %vm1562, %v3464, %v2949
      %v3497 = vsel %vm1562, %v3465, %v2951
      %v3498 = vsel %vm1562, %v3466, %v2953
      %v3499 = vsel %vm1562, %v3467, %v2955
      %v3500 = vsel %vm1562, %v3468, %v2957
      %v3501 = vsel %vm1562, %v3469, %v2959
      %v3502 = vsel %vm1562, %v3470, %v2961
      %v3503 = vsel %vm1562, %v3471, %v2963
      %v3504 = vsel %vm1562, %v3472, %v2965
      %v3505 = vsel %vm1562, %v3473, %v2967
      %v3506 = vsel %vm1562, %v3474, %v2969
      %v3507 = vsel %vm1562, %v3475, %v2971
      %v3508 = vsel %vm1562, %v3476, %v2973
      %v3509 = vsel %vm1562, %v3477, %v2975
      %v3510 = vsel %vm1562, %v3478, %v2977
      %v3511 = vsel %vm1562, %v3479, %v2979
      %v3512 = vsel %vm1562, %v3480, %v2981
      %v3513 = vsel %vm1562, %v3481, %v2983
      %v3514 = vsel %vm1562, %v3482, %v2985
      %v3515 = vsel %vm1562, %v3483, %v2987
      %v3516 = vsel %vm1562, %v3484, %v2989
      %v3517 = vsel %vm1562, %v3485, %v2991
      %v3518 = vsel %vm1562, %v3486, %v2993
      %v3519 = vsel %vm1562, %v3487, %v2995
      %v3520 = vsel %vm1562, %v3488, %v2997
      %v3521 = vsel %vm1562, %v3489, %v2999
      %v3522 = vsel %vm1595, %v3490, %v3033
      %v3523 = vsel %vm1595, %v3491, %v3035
      %v3524 = vsel %vm1595, %v3492, %v3037
      %v3525 = vsel %vm1595, %v3493, %v3039
      %v3526 = vsel %vm1595, %v3494, %v3041
      %v3527 = vsel %vm1595, %v3495, %v3043
      %v3528 = vsel %vm1595, %v3496, %v3045
      %v3529 = vsel %vm1595, %v3497, %v3047
      %v3530 = vsel %vm1595, %v3498, %v3049
      %v3531 = vsel %vm1595, %v3499, %v3051
      %v3532 = vsel %vm1595, %v3500, %v3053
      %v3533 = vsel %vm1595, %v3501, %v3055
      %v3534 = vsel %vm1595, %v3502, %v3057
      %v3535 = vsel %vm1595, %v3503, %v3059
      %v3536 = vsel %vm1595, %v3504, %v3061
      %v3537 = vsel %vm1595, %v3505, %v3063
      %v3538 = vsel %vm1595, %v3506, %v3065
      %v3539 = vsel %vm1595, %v3507, %v3067
      %v3540 = vsel %vm1595, %v3508, %v3069
      %v3541 = vsel %vm1595, %v3509, %v3071
      %v3542 = vsel %vm1595, %v3510, %v3073
      %v3543 = vsel %vm1595, %v3511, %v3075
      %v3544 = vsel %vm1595, %v3512, %v3077
      %v3545 = vsel %vm1595, %v3513, %v3079
      %v3546 = vsel %vm1595, %v3514, %v3081
      %v3547 = vsel %vm1595, %v3515, %v3083
      %v3548 = vsel %vm1595, %v3516, %v3085
      %v3549 = vsel %vm1595, %v3517, %v3087
      %v3550 = vsel %vm1595, %v3518, %v3089
      %v3551 = vsel %vm1595, %v3519, %v3091
      %v3552 = vsel %vm1595, %v3520, %v3093
      %v3553 = vsel %vm1595, %v3521, %v3095
      %v3554 = vsel %vm1628, %v3522, %v3129
      %v3555 = vsel %vm1628, %v3523, %v3131
      %v3556 = vsel %vm1628, %v3524, %v3133
      %v3557 = vsel %vm1628, %v3525, %v3135
      %v3558 = vsel %vm1628, %v3526, %v3137
      %v3559 = vsel %vm1628, %v3527, %v3139
      %v3560 = vsel %vm1628, %v3528, %v3141
      %v3561 = vsel %vm1628, %v3529, %v3143
      %v3562 = vsel %vm1628, %v3530, %v3145
      %v3563 = vsel %vm1628, %v3531, %v3147
      %v3564 = vsel %vm1628, %v3532, %v3149
      %v3565 = vsel %vm1628, %v3533, %v3151
      %v3566 = vsel %vm1628, %v3534, %v3153
      %v3567 = vsel %vm1628, %v3535, %v3155
      %v3568 = vsel %vm1628, %v3536, %v3157
      %v3569 = vsel %vm1628, %v3537, %v3159
      %v3570 = vsel %vm1628, %v3538, %v3161
      %v3571 = vsel %vm1628, %v3539, %v3163
      %v3572 = vsel %vm1628, %v3540, %v3165
      %v3573 = vsel %vm1628, %v3541, %v3167
      %v3574 = vsel %vm1628, %v3542, %v3169
      %v3575 = vsel %vm1628, %v3543, %v3171
      %v3576 = vsel %vm1628, %v3544, %v3173
      %v3577 = vsel %vm1628, %v3545, %v3175
      %v3578 = vsel %vm1628, %v3546, %v3177
      %v3579 = vsel %vm1628, %v3547, %v3179
      %v3580 = vsel %vm1628, %v3548, %v3181
      %v3581 = vsel %vm1628, %v3549, %v3183
      %v3582 = vsel %vm1628, %v3550, %v3185
      %v3583 = vsel %vm1628, %v3551, %v3187
      %v3584 = vsel %vm1628, %v3552, %v3181
      %v3585 = vsel %vm1628, %v3553, %v3183
      %v3586 = vsel %vm1661, %v3554, %v3219
      %v3587 = vsel %vm1661, %v3555, %v3221
      %v3588 = vsel %vm1661, %v3556, %v3223
      %v3589 = vsel %vm1661, %v3557, %v3225
      %v3590 = vsel %vm1661, %v3558, %v3227
      %v3591 = vsel %vm1661, %v3559, %v3229
      %v3592 = vsel %vm1661, %v3560, %v3231
      %v3593 = vsel %vm1661, %v3561, %v3233
      %v3594 = vsel %vm1661, %v3562, %v3235
      %v3595 = vsel %vm1661, %v3563, %v3237
      %v3596 = vsel %vm1661, %v3564, %v3239
      %v3597 = vsel %vm1661, %v3565, %v3241
      %v3598 = vsel %vm1661, %v3566, %v3243
      %v3599 = vsel %vm1661, %v3567, %v3245
      %v3600 = vsel %vm1661, %v3568, %v3247
      %v3601 = vsel %vm1661, %v3569, %v3249
      %v3602 = vsel %vm1661, %v3570, %v3251
      %v3603 = vsel %vm1661, %v3571, %v3253
      %v3604 = vsel %vm1661, %v3572, %v3255
      %v3605 = vsel %vm1661, %v3573, %v3257
      %v3606 = vsel %vm1661, %v3574, %v3259
      %v3607 = vsel %vm1661, %v3575, %v3261
      %v3608 = vsel %vm1661, %v3576, %v3263
      %v3609 = vsel %vm1661, %v3577, %v3265
      %v3610 = vsel %vm1661, %v3578, %v3267
      %v3611 = vsel %vm1661, %v3579, %v3269
      %v3612 = vsel %vm1661, %v3580, %v3271
      %v3613 = vsel %vm1661, %v3581, %v3273
      %v3614 = vsel %vm1661, %v3582, %v3275
      %v3615 = vsel %vm1661, %v3583, %v3277
      %v3616 = vsel %vm1661, %v3584, %v3271
      %v3617 = vsel %vm1661, %v3585, %v3273
      %v3618 = vsel %vm1694, %v3586, %v3309
      %v3619 = vsel %vm1694, %v3587, %v3311
      %v3620 = vsel %vm1694, %v3588, %v3313
      %v3621 = vsel %vm1694, %v3589, %v3315
      %v3622 = vsel %vm1694, %v3590, %v3317
      %v3623 = vsel %vm1694, %v3591, %v3319
      %v3624 = vsel %vm1694, %v3592, %v3321
      %v3625 = vsel %vm1694, %v3593, %v3323
      %v3626 = vsel %vm1694, %v3594, %v3325
      %v3627 = vsel %vm1694, %v3595, %v3327
      %v3628 = vsel %vm1694, %v3596, %v3329
      %v3629 = vsel %vm1694, %v3597, %v3331
      %v3630 = vsel %vm1694, %v3598, %v3333
      %v3631 = vsel %vm1694, %v3599, %v3335
      %v3632 = vsel %vm1694, %v3600, %v3337
      %v3633 = vsel %vm1694, %v3601, %v3339
      %v3634 = vsel %vm1694, %v3602, %v3341
      %v3635 = vsel %vm1694, %v3603, %v3343
      %v3636 = vsel %vm1694, %v3604, %v3345
      %v3637 = vsel %vm1694, %v3605, %v3347
      %v3638 = vsel %vm1694, %v3606, %v3349
      %v3639 = vsel %vm1694, %v3607, %v3351
      %v3640 = vsel %vm1694, %v3608, %v3353
      %v3641 = vsel %vm1694, %v3609, %v3355
      %v3642 = vsel %vm1694, %v3610, %v3357
      %v3643 = vsel %vm1694, %v3611, %v3359
      %v3644 = vsel %vm1694, %v3612, %v3361
      %v3645 = vsel %vm1694, %v3613, %v3363
      %v3646 = vsel %vm1694, %v3614, %v3365
      %v3647 = vsel %vm1694, %v3615, %v3367
      %v3648 = vsel %vm1694, %v3616, %v3361
      %v3649 = vsel %vm1694, %v3617, %v3363
      %v3650 = vld [vmem:[%s4] sm:$0xff]
      %v3651 = vld [vmem:[%s4 + $0x8] sm:$0xff]
      %v3652 = vld [vmem:[%s4 + $0x10] sm:$0xff]
      %v3653 = vld [vmem:[%s4 + $0x18] sm:$0xff]
      %v3654 = vld [vmem:[%s4 + $0x20] sm:$0xf]
      %v3656 = vsel %vm1732, %v3618, 0
      %v3659 = vsel %vm1732, %v3619, 0
      %v3662 = vsel %vm1732, %v3620, 0
      %v3665 = vsel %vm1732, %v3621, 0
      %v3668 = vsel %vm1732, %v3622, 0
      %v3671 = vsel %vm1732, %v3623, 0
      %v3674 = vsel %vm1732, %v3624, 0
      %v3677 = vsel %vm1732, %v3625, 0
      %v3680 = vsel %vm1732, %v3626, 0
      %v3683 = vsel %vm1732, %v3627, 0
      %v3686 = vsel %vm1732, %v3628, 0
      %v3689 = vsel %vm1732, %v3629, 0
      %v3692 = vsel %vm1732, %v3630, 0
      %v3695 = vsel %vm1732, %v3631, 0
      %v3698 = vsel %vm1732, %v3632, 0
      %v3701 = vsel %vm1732, %v3633, 0
      %v3704 = vsel %vm1732, %v3634, 0
      %v3707 = vsel %vm1732, %v3635, 0
      %v3710 = vsel %vm1732, %v3636, 0
      %v3713 = vsel %vm1732, %v3637, 0
      %v3716 = vsel %vm1732, %v3638, 0
      %v3719 = vsel %vm1732, %v3639, 0
      %v3722 = vsel %vm1732, %v3640, 0
      %v3725 = vsel %vm1732, %v3641, 0
      %v3728 = vsel %vm1732, %v3642, 0
      %v3731 = vsel %vm1732, %v3643, 0
      %v3734 = vsel %vm1732, %v3644, 0
      %v3737 = vsel %vm1732, %v3645, 0
      %v3740 = vsel %vm1732, %v3646, 0
      %v3743 = vsel %vm1732, %v3647, 0
      %v3746 = vsel %vm1732, %v3648, 0
      %v3749 = vsel %vm1732, %v3649, 0
      %v3752 = vsel %vm1829, %v3654, 0
      %3754 = vmatpush.msra.mxu0 0.0
      %3755 = vmatpush.msra.mxu0 0.0
      %3756 = vmatpush.msra.mxu0 0.0
      %3757 = vmatpush.msra.mxu0 0.0
      %3758 = vmatpush.msra.mxu0 0.0
      %3759 = vmatpush.msra.mxu0 0.0
      %3760 = vmatpush.msra.mxu0 0.0
      %3761 = vmatpush.msra.mxu0 0.0
      %3762 = vmatpush.msra.mxu0 0.0
      %3763 = vmatpush.msra.mxu0 0.0
      %3764 = vmatpush.msra.mxu0 0.0
      %3765 = vmatpush.msra.mxu0 %v3752
      %3766 = vmatpush.msra.mxu0 %v3653
      %3767 = vmatpush.msra.mxu0 %v3652
      %3768 = vmatpush.msra.mxu0 %v3651
      %3769 = vmatpush.msra.mxu0 %v3650
      %3770 = vmatmul.f32.gmra.mxu0 %v3656
      %v3771 = vpop.f32.mrf.mxu0
      %v3772 = vadd.f32 0.0, %v3771
      %3773 = vmatmul.f32.gmra.mxu0 %v3659
      %v3774 = vpop.f32.mrf.mxu0
      %v3775 = vadd.f32 0.0, %v3774
      %3776 = vmatmul.f32.gmra.mxu0 %v3662
      %v3777 = vpop.f32.mrf.mxu0
      %v3778 = vadd.f32 0.0, %v3777
      %3779 = vmatmul.f32.gmra.mxu0 %v3665
      %v3780 = vpop.f32.mrf.mxu0
      %v3781 = vadd.f32 0.0, %v3780
      %3782 = vmatmul.f32.gmra.mxu0 %v3668
      %v3783 = vpop.f32.mrf.mxu0
      %v3784 = vadd.f32 0.0, %v3783
      %3785 = vmatmul.f32.gmra.mxu0 %v3671
      %v3786 = vpop.f32.mrf.mxu0
      %v3787 = vadd.f32 0.0, %v3786
      %3788 = vmatmul.f32.gmra.mxu0 %v3674
      %v3789 = vpop.f32.mrf.mxu0
      %v3790 = vadd.f32 0.0, %v3789
      %3791 = vmatmul.f32.gmra.mxu0 %v3677
      %v3792 = vpop.f32.mrf.mxu0
      %v3793 = vadd.f32 0.0, %v3792
      %3794 = vmatmul.f32.gmra.mxu0 %v3680
      %v3795 = vpop.f32.mrf.mxu0
      %v3796 = vadd.f32 0.0, %v3795
      %3797 = vmatmul.f32.gmra.mxu0 %v3683
      %v3798 = vpop.f32.mrf.mxu0
      %v3799 = vadd.f32 0.0, %v3798
      %3800 = vmatmul.f32.gmra.mxu0 %v3686
      %v3801 = vpop.f32.mrf.mxu0
      %v3802 = vadd.f32 0.0, %v3801
      %3803 = vmatmul.f32.gmra.mxu0 %v3689
      %v3804 = vpop.f32.mrf.mxu0
      %v3805 = vadd.f32 0.0, %v3804
      %3806 = vmatmul.f32.gmra.mxu0 %v3692
      %v3807 = vpop.f32.mrf.mxu0
      %v3808 = vadd.f32 0.0, %v3807
      %3809 = vmatmul.f32.gmra.mxu0 %v3695
      %v3810 = vpop.f32.mrf.mxu0
      %v3811 = vadd.f32 0.0, %v3810
      %3812 = vmatmul.f32.gmra.mxu0 %v3698
      %v3813 = vpop.f32.mrf.mxu0
      %v3814 = vadd.f32 0.0, %v3813
      %3815 = vmatmul.f32.gmra.mxu0 %v3701
      %v3816 = vpop.f32.mrf.mxu0
      %v3817 = vadd.f32 0.0, %v3816
      %3818 = vmatmul.f32.gmra.mxu0 %v3704
      %v3819 = vpop.f32.mrf.mxu0
      %v3820 = vadd.f32 0.0, %v3819
      %3821 = vmatmul.f32.gmra.mxu0 %v3707
      %v3822 = vpop.f32.mrf.mxu0
      %v3823 = vadd.f32 0.0, %v3822
      %3824 = vmatmul.f32.gmra.mxu0 %v3710
      %v3825 = vpop.f32.mrf.mxu0
      %v3826 = vadd.f32 0.0, %v3825
      %3827 = vmatmul.f32.gmra.mxu0 %v3713
      %v3828 = vpop.f32.mrf.mxu0
      %v3829 = vadd.f32 0.0, %v3828
      %3830 = vmatmul.f32.gmra.mxu0 %v3716
      %v3831 = vpop.f32.mrf.mxu0
      %v3832 = vadd.f32 0.0, %v3831
      %3833 = vmatmul.f32.gmra.mxu0 %v3719
      %v3834 = vpop.f32.mrf.mxu0
      %v3835 = vadd.f32 0.0, %v3834
      %3836 = vmatmul.f32.gmra.mxu0 %v3722
      %v3837 = vpop.f32.mrf.mxu0
      %v3838 = vadd.f32 0.0, %v3837
      %3839 = vmatmul.f32.gmra.mxu0 %v3725
      %v3840 = vpop.f32.mrf.mxu0
      %v3841 = vadd.f32 0.0, %v3840
      %3842 = vmatmul.f32.gmra.mxu0 %v3728
      %v3843 = vpop.f32.mrf.mxu0
      %v3844 = vadd.f32 0.0, %v3843
      %3845 = vmatmul.f32.gmra.mxu0 %v3731
      %v3846 = vpop.f32.mrf.mxu0
      %v3847 = vadd.f32 0.0, %v3846
      %3848 = vmatmul.f32.gmra.mxu0 %v3734
      %v3849 = vpop.f32.mrf.mxu0
      %v3850 = vadd.f32 0.0, %v3849
      %3851 = vmatmul.f32.gmra.mxu0 %v3737
      %v3852 = vpop.f32.mrf.mxu0
      %v3853 = vadd.f32 0.0, %v3852
      %3854 = vmatmul.f32.gmra.mxu0 %v3740
      %v3855 = vpop.f32.mrf.mxu0
      %v3856 = vadd.f32 0.0, %v3855
      %3857 = vmatmul.f32.gmra.mxu0 %v3743
      %v3858 = vpop.f32.mrf.mxu0
      %v3859 = vadd.f32 0.0, %v3858
      %3860 = vmatmul.f32.gmra.mxu0 %v3746
      %v3861 = vpop.f32.mrf.mxu0
      %v3862 = vadd.f32 0.0, %v3861
      %3863 = vmatmul.f32.gmra.mxu0 %v3749
      %v3864 = vpop.f32.mrf.mxu0
      %v3865 = vadd.f32 0.0, %v3864
      %3866 = vdwg.mxu0
      %v3867 = vsel %vm1467, %v3772, 0.0
      %v3868 = vsel %vm1467, %v3775, 0.0
      %v3869 = vadd.f32 %v3867, %v3868
      %v3870 = vsel %vm1467, %v3778, 0.0
      %v3871 = vadd.f32 %v3869, %v3870
      %v3872 = vsel %vm1467, %v3781, 0.0
      %v3873 = vadd.f32 %v3871, %v3872
      %v3874 = vsel %vm1467, %v3784, 0.0
      %v3875 = vadd.f32 %v3873, %v3874
      %v3876 = vsel %vm1467, %v3787, 0.0
      %v3877 = vadd.f32 %v3875, %v3876
      %v3878 = vsel %vm1467, %v3790, 0.0
      %v3879 = vadd.f32 %v3877, %v3878
      %v3880 = vsel %vm1467, %v3793, 0.0
      %v3881 = vadd.f32 %v3879, %v3880
      %v3882 = vsel %vm1467, %v3796, 0.0
      %v3883 = vadd.f32 %v3881, %v3882
      %v3884 = vsel %vm1467, %v3799, 0.0
      %v3885 = vadd.f32 %v3883, %v3884
      %v3886 = vsel %vm1467, %v3802, 0.0
      %v3887 = vadd.f32 %v3885, %v3886
      %v3888 = vsel %vm1467, %v3805, 0.0
      %v3889 = vadd.f32 %v3887, %v3888
      %v3890 = vsel %vm1467, %v3808, 0.0
      %v3891 = vadd.f32 %v3889, %v3890
      %v3892 = vsel %vm1467, %v3811, 0.0
      %v3893 = vadd.f32 %v3891, %v3892
      %v3894 = vsel %vm1467, %v3814, 0.0
      %v3895 = vadd.f32 %v3893, %v3894
      %v3896 = vsel %vm1467, %v3817, 0.0
      %v3897 = vadd.f32 %v3895, %v3896
      %v3898 = vsel %vm1467, %v3820, 0.0
      %v3899 = vadd.f32 %v3897, %v3898
      %v3900 = vsel %vm1467, %v3823, 0.0
      %v3901 = vadd.f32 %v3899, %v3900
      %v3902 = vsel %vm1467, %v3826, 0.0
      %v3903 = vadd.f32 %v3901, %v3902
      %v3904 = vsel %vm1467, %v3829, 0.0
      %v3905 = vadd.f32 %v3903, %v3904
      %v3906 = vsel %vm1467, %v3832, 0.0
      %v3907 = vadd.f32 %v3905, %v3906
      %v3908 = vsel %vm1467, %v3835, 0.0
      %v3909 = vadd.f32 %v3907, %v3908
      %v3910 = vsel %vm1467, %v3838, 0.0
      %v3911 = vadd.f32 %v3909, %v3910
      %v3912 = vsel %vm1467, %v3841, 0.0
      %v3913 = vadd.f32 %v3911, %v3912
      %v3914 = vsel %vm1467, %v3844, 0.0
      %v3915 = vadd.f32 %v3913, %v3914
      %v3916 = vsel %vm1467, %v3847, 0.0
      %v3917 = vadd.f32 %v3915, %v3916
      %v3918 = vsel %vm1467, %v3850, 0.0
      %v3919 = vadd.f32 %v3917, %v3918
      %v3920 = vsel %vm1467, %v3853, 0.0
      %v3921 = vadd.f32 %v3919, %v3920
      %v3922 = vsel %vm1467, %v3856, 0.0
      %v3923 = vadd.f32 %v3921, %v3922
      %v3924 = vsel %vm1467, %v3859, 0.0
      %v3925 = vadd.f32 %v3923, %v3924
      %v3926 = vsel %vm1467, %v3862, 0.0
      %v3927 = vadd.f32 %v3925, %v3926
      %v3928 = vsel %vm1467, %v3865, 0.0
      %v3929 = vadd.f32 %v3927, %v3928
      %v3930 = vrot.slane %v3929, 4
      %v3931 = vadd.f32 %v3929, %v3930
      %v3932 = vrot.slane %v3931, 2
      %v3933 = vadd.f32 %v3931, %v3932
      %v3934 = vrot.slane %v3933, 1
      %v3935 = vadd.f32 %v3933, %v3934
      %v3936 = vmul.f32 %v3935, %v2021
      %v3937 = vmul.f32 %v3772, %v3772
      %v3938 = vmul.f32 %v3775, %v3775
      %v3939 = vmul.f32 %v3778, %v3778
      %v3940 = vmul.f32 %v3781, %v3781
      %v3941 = vmul.f32 %v3784, %v3784
      %v3942 = vmul.f32 %v3787, %v3787
      %v3943 = vmul.f32 %v3790, %v3790
      %v3944 = vmul.f32 %v3793, %v3793
      %v3945 = vmul.f32 %v3796, %v3796
      %v3946 = vmul.f32 %v3799, %v3799
      %v3947 = vmul.f32 %v3802, %v3802
      %v3948 = vmul.f32 %v3805, %v3805
      %v3949 = vmul.f32 %v3808, %v3808
      %v3950 = vmul.f32 %v3811, %v3811
      %v3951 = vmul.f32 %v3814, %v3814
      %v3952 = vmul.f32 %v3817, %v3817
      %v3953 = vmul.f32 %v3820, %v3820
      %v3954 = vmul.f32 %v3823, %v3823
      %v3955 = vmul.f32 %v3826, %v3826
      %v3956 = vmul.f32 %v3829, %v3829
      %v3957 = vmul.f32 %v3832, %v3832
      %v3958 = vmul.f32 %v3835, %v3835
      %v3959 = vmul.f32 %v3838, %v3838
      %v3960 = vmul.f32 %v3841, %v3841
      %v3961 = vmul.f32 %v3844, %v3844
      %v3962 = vmul.f32 %v3847, %v3847
      %v3963 = vmul.f32 %v3850, %v3850
      %v3964 = vmul.f32 %v3853, %v3853
      %v3965 = vmul.f32 %v3856, %v3856
      %v3966 = vmul.f32 %v3859, %v3859
      %v3967 = vmul.f32 %v3862, %v3862
      %v3968 = vmul.f32 %v3865, %v3865
      %v3969 = vsel %vm1467, %v3937, 0.0
      %v3970 = vsel %vm1467, %v3938, 0.0
      %v3971 = vadd.f32 %v3969, %v3970
      %v3972 = vsel %vm1467, %v3939, 0.0
      %v3973 = vadd.f32 %v3971, %v3972
      %v3974 = vsel %vm1467, %v3940, 0.0
      %v3975 = vadd.f32 %v3973, %v3974
      %v3976 = vsel %vm1467, %v3941, 0.0
      %v3977 = vadd.f32 %v3975, %v3976
      %v3978 = vsel %vm1467, %v3942, 0.0
      %v3979 = vadd.f32 %v3977, %v3978
      %v3980 = vsel %vm1467, %v3943, 0.0
      %v3981 = vadd.f32 %v3979, %v3980
      %v3982 = vsel %vm1467, %v3944, 0.0
      %v3983 = vadd.f32 %v3981, %v3982
      %v3984 = vsel %vm1467, %v3945, 0.0
      %v3985 = vadd.f32 %v3983, %v3984
      %v3986 = vsel %vm1467, %v3946, 0.0
      %v3987 = vadd.f32 %v3985, %v3986
      %v3988 = vsel %vm1467, %v3947, 0.0
      %v3989 = vadd.f32 %v3987, %v3988
      %v3990 = vsel %vm1467, %v3948, 0.0
      %v3991 = vadd.f32 %v3989, %v3990
      %v3992 = vsel %vm1467, %v3949, 0.0
      %v3993 = vadd.f32 %v3991, %v3992
      %v3994 = vsel %vm1467, %v3950, 0.0
      %v3995 = vadd.f32 %v3993, %v3994
      %v3996 = vsel %vm1467, %v3951, 0.0
      %v3997 = vadd.f32 %v3995, %v3996
      %v3998 = vsel %vm1467, %v3952, 0.0
      %v3999 = vadd.f32 %v3997, %v3998
      %v4000 = vsel %vm1467, %v3953, 0.0
      %v4001 = vadd.f32 %v3999, %v4000
      %v4002 = vsel %vm1467, %v3954, 0.0
      %v4003 = vadd.f32 %v4001, %v4002
      %v4004 = vsel %vm1467, %v3955, 0.0
      %v4005 = vadd.f32 %v4003, %v4004
      %v4006 = vsel %vm1467, %v3956, 0.0
      %v4007 = vadd.f32 %v4005, %v4006
      %v4008 = vsel %vm1467, %v3957, 0.0
      %v4009 = vadd.f32 %v4007, %v4008
      %v4010 = vsel %vm1467, %v3958, 0.0
      %v4011 = vadd.f32 %v4009, %v4010
      %v4012 = vsel %vm1467, %v3959, 0.0
      %v4013 = vadd.f32 %v4011, %v4012
      %v4014 = vsel %vm1467, %v3960, 0.0
      %v4015 = vadd.f32 %v4013, %v4014
      %v4016 = vsel %vm1467, %v3961, 0.0
      %v4017 = vadd.f32 %v4015, %v4016
      %v4018 = vsel %vm1467, %v3962, 0.0
      %v4019 = vadd.f32 %v4017, %v4018
      %v4020 = vsel %vm1467, %v3963, 0.0
      %v4021 = vadd.f32 %v4019, %v4020
      %v4022 = vsel %vm1467, %v3964, 0.0
      %v4023 = vadd.f32 %v4021, %v4022
      %v4024 = vsel %vm1467, %v3965, 0.0
      %v4025 = vadd.f32 %v4023, %v4024
      %v4026 = vsel %vm1467, %v3966, 0.0
      %v4027 = vadd.f32 %v4025, %v4026
      %v4028 = vsel %vm1467, %v3967, 0.0
      %v4029 = vadd.f32 %v4027, %v4028
      %v4030 = vsel %vm1467, %v3968, 0.0
      %v4031 = vadd.f32 %v4029, %v4030
      %v4032 = vrot.slane %v4031, 4
      %v4033 = vadd.f32 %v4031, %v4032
      %v4034 = vrot.slane %v4033, 2
      %v4035 = vadd.f32 %v4033, %v4034
      %v4036 = vrot.slane %v4035, 1
      %v4037 = vadd.f32 %v4035, %v4036
      %v4038 = vmul.f32 %v4037, %v2021
      %v4039 = vmul.f32 %v3936, %v3936
      %v4040 = vsub.f32 %v4038, %v4039
      %v4041 = vld [vmem:[%s5] sm:$0x1]
      %v4042 = vadd.f32 %v4040, 1e-05
      %v4043 = vrsqrt.pop %v4042
      %v4044 = vmul.f32 %v4043, %v4042
      %v4045 = vmul.f32 %v4044, %v4043
      %v4046 = vmul.f32 0.5, %v4045
      %v4047 = vsub.f32 1.5, %v4046
      %v4048 = vmul.f32 %v4043, %v4047
      %vm4049 = vweird.f32 %v4042
      %vm4050 = vweird.f32 %v4043
      %vm4051 = vmor %vm4049, %vm4050
      %v4052 = vsel %vm4051, %v4043, %v4048
      %v4053 = vmul.f32 %v4041, %v4052
      %v4054 = vld [vmem:[%s6] sm:$0x1]
      %v4055 = vmul.f32 %v3936, %v4053
      %v4056 = vsub.f32 %v4054, %v4055
      %v4058 = vperm.slane %v4053, 0
      %v4060 = vmul.f32 %v3772, %v4058
      %v4061 = vmul.f32 %v3775, %v4058
      %v4062 = vmul.f32 %v3778, %v4058
      %v4063 = vmul.f32 %v3781, %v4058
      %v4064 = vmul.f32 %v3784, %v4058
      %v4065 = vmul.f32 %v3787, %v4058
      %v4066 = vmul.f32 %v3790, %v4058
      %v4067 = vmul.f32 %v3793, %v4058
      %v4068 = vmul.f32 %v3796, %v4058
      %v4069 = vmul.f32 %v3799, %v4058
      %v4070 = vmul.f32 %v3802, %v4058
      %v4071 = vmul.f32 %v3805, %v4058
      %v4072 = vmul.f32 %v3808, %v4058
      %v4073 = vmul.f32 %v3811, %v4058
      %v4074 = vmul.f32 %v3814, %v4058
      %v4075 = vmul.f32 %v3817, %v4058
      %v4076 = vmul.f32 %v3820, %v4058
      %v4077 = vmul.f32 %v3823, %v4058
      %v4078 = vmul.f32 %v3826, %v4058
      %v4079 = vmul.f32 %v3829, %v4058
      %v4080 = vmul.f32 %v3832, %v4058
      %v4081 = vmul.f32 %v3835, %v4058
      %v4082 = vmul.f32 %v3838, %v4058
      %v4083 = vmul.f32 %v3841, %v4058
      %v4084 = vmul.f32 %v3844, %v4058
      %v4085 = vmul.f32 %v3847, %v4058
      %v4086 = vmul.f32 %v3850, %v4058
      %v4087 = vmul.f32 %v3853, %v4058
      %v4088 = vmul.f32 %v3856, %v4058
      %v4089 = vmul.f32 %v3859, %v4058
      %v4090 = vmul.f32 %v3862, %v4058
      %v4091 = vmul.f32 %v3865, %v4058
      %v4093 = vperm.slane %v4056, 0
      %v4095 = vadd.f32 %v4060, %v4093
      %v4096 = vadd.f32 %v4061, %v4093
      %v4097 = vadd.f32 %v4062, %v4093
      %v4098 = vadd.f32 %v4063, %v4093
      %v4099 = vadd.f32 %v4064, %v4093
      %v4100 = vadd.f32 %v4065, %v4093
      %v4101 = vadd.f32 %v4066, %v4093
      %v4102 = vadd.f32 %v4067, %v4093
      %v4103 = vadd.f32 %v4068, %v4093
      %v4104 = vadd.f32 %v4069, %v4093
      %v4105 = vadd.f32 %v4070, %v4093
      %v4106 = vadd.f32 %v4071, %v4093
      %v4107 = vadd.f32 %v4072, %v4093
      %v4108 = vadd.f32 %v4073, %v4093
      %v4109 = vadd.f32 %v4074, %v4093
      %v4110 = vadd.f32 %v4075, %v4093
      %v4111 = vadd.f32 %v4076, %v4093
      %v4112 = vadd.f32 %v4077, %v4093
      %v4113 = vadd.f32 %v4078, %v4093
      %v4114 = vadd.f32 %v4079, %v4093
      %v4115 = vadd.f32 %v4080, %v4093
      %v4116 = vadd.f32 %v4081, %v4093
      %v4117 = vadd.f32 %v4082, %v4093
      %v4118 = vadd.f32 %v4083, %v4093
      %v4119 = vadd.f32 %v4084, %v4093
      %v4120 = vadd.f32 %v4085, %v4093
      %v4121 = vadd.f32 %v4086, %v4093
      %v4122 = vadd.f32 %v4087, %v4093
      %v4123 = vadd.f32 %v4088, %v4093
      %v4124 = vadd.f32 %v4089, %v4093
      %v4125 = vadd.f32 %v4090, %v4093
      %v4126 = vadd.f32 %v4091, %v4093
      %v4127 = vadd.f32 %v4095, %v279
      %v4128 = vadd.f32 %v4096, %v280
      %v4129 = vadd.f32 %v4097, %v281
      %v4130 = vadd.f32 %v4098, %v282
      %v4131 = vadd.f32 %v4099, %v283
      %v4132 = vadd.f32 %v4100, %v284
      %v4133 = vadd.f32 %v4101, %v285
      %v4134 = vadd.f32 %v4102, %v286
      %v4135 = vadd.f32 %v4103, %v287
      %v4136 = vadd.f32 %v4104, %v288
      %v4137 = vadd.f32 %v4105, %v289
      %v4138 = vadd.f32 %v4106, %v290
      %v4139 = vadd.f32 %v4107, %v291
      %v4140 = vadd.f32 %v4108, %v292
      %v4141 = vadd.f32 %v4109, %v293
      %v4142 = vadd.f32 %v4110, %v294
      %v4143 = vadd.f32 %v4111, %v295
      %v4144 = vadd.f32 %v4112, %v296
      %v4145 = vadd.f32 %v4113, %v297
      %v4146 = vadd.f32 %v4114, %v298
      %v4147 = vadd.f32 %v4115, %v299
      %v4148 = vadd.f32 %v4116, %v300
      %v4149 = vadd.f32 %v4117, %v301
      %v4150 = vadd.f32 %v4118, %v302
      %v4151 = vadd.f32 %v4119, %v303
      %v4152 = vadd.f32 %v4120, %v304
      %v4153 = vadd.f32 %v4121, %v305
      %v4154 = vadd.f32 %v4122, %v306
      %v4155 = vadd.f32 %v4123, %v307
      %v4156 = vadd.f32 %v4124, %v308
      %v4157 = vadd.f32 %v4125, %v309
      %v4158 = vadd.f32 %v4126, %v310
      %4159 = vst.msk [vmem:[%s278] sm:$0xff] %vm1467, %v4127
      %4160 = vst.msk [vmem:[%s278 + $0x8] sm:$0xff] %vm1467, %v4128
      %4161 = vst.msk [vmem:[%s278 + $0x10] sm:$0xff] %vm1467, %v4129
      %4162 = vst.msk [vmem:[%s278 + $0x18] sm:$0xff] %vm1467, %v4130
      %4163 = vst.msk [vmem:[%s278 + $0x20] sm:$0xff] %vm1467, %v4131
      %4164 = vst.msk [vmem:[%s278 + $0x28] sm:$0xff] %vm1467, %v4132
      %4165 = vst.msk [vmem:[%s278 + $0x30] sm:$0xff] %vm1467, %v4133
      %4166 = vst.msk [vmem:[%s278 + $0x38] sm:$0xff] %vm1467, %v4134
      %4167 = vst.msk [vmem:[%s278 + $0x40] sm:$0xff] %vm1467, %v4135
      %4168 = vst.msk [vmem:[%s278 + $0x48] sm:$0xff] %vm1467, %v4136
      %4169 = vst.msk [vmem:[%s278 + $0x50] sm:$0xff] %vm1467, %v4137
      %4170 = vst.msk [vmem:[%s278 + $0x58] sm:$0xff] %vm1467, %v4138
      %4171 = vst.msk [vmem:[%s278 + $0x60] sm:$0xff] %vm1467, %v4139
      %4172 = vst.msk [vmem:[%s278 + $0x68] sm:$0xff] %vm1467, %v4140
      %4173 = vst.msk [vmem:[%s278 + $0x70] sm:$0xff] %vm1467, %v4141
      %4174 = vst.msk [vmem:[%s278 + $0x78] sm:$0xff] %vm1467, %v4142
      %4175 = vst.msk [vmem:[%s278 + $0x80] sm:$0xff] %vm1467, %v4143
      %4176 = vst.msk [vmem:[%s278 + $0x88] sm:$0xff] %vm1467, %v4144
      %4177 = vst.msk [vmem:[%s278 + $0x90] sm:$0xff] %vm1467, %v4145
      %4178 = vst.msk [vmem:[%s278 + $0x98] sm:$0xff] %vm1467, %v4146
      %4179 = vst.msk [vmem:[%s278 + $0xa0] sm:$0xff] %vm1467, %v4147
      %4180 = vst.msk [vmem:[%s278 + $0xa8] sm:$0xff] %vm1467, %v4148
      %4181 = vst.msk [vmem:[%s278 + $0xb0] sm:$0xff] %vm1467, %v4149
      %4182 = vst.msk [vmem:[%s278 + $0xb8] sm:$0xff] %vm1467, %v4150
      %4183 = vst.msk [vmem:[%s278 + $0xc0] sm:$0xff] %vm1467, %v4151
      %4184 = vst.msk [vmem:[%s278 + $0xc8] sm:$0xff] %vm1467, %v4152
      %4185 = vst.msk [vmem:[%s278 + $0xd0] sm:$0xff] %vm1467, %v4153
      %4186 = vst.msk [vmem:[%s278 + $0xd8] sm:$0xff] %vm1467, %v4154
      %4187 = vst.msk [vmem:[%s278 + $0xe0] sm:$0xff] %vm1467, %v4155
      %4188 = vst.msk [vmem:[%s278 + $0xe8] sm:$0xff] %vm1467, %v4156
      %4189 = vst.msk [vmem:[%s278 + $0xf0] sm:$0xff] %vm1467, %v4157
      %4190 = vst.msk [vmem:[%s278 + $0xf8] sm:$0xff] %vm1467, %v4158
      %p4191 = scmp.lt.s32.totalorder %s18, 1
      %s4192 = scalar_select %p4191, %s18, 1
      %s4193 = smul.addr %s4192, 32
      %s4194 = smul.addr %s4193, 8
      %s4195 = scalar_lea.vmem %s7, %s4194
      // Predicated region
      $region49: #{residual_forward.1} parent=47 // pred_check
        %p4196 = pneg %p188
      $region50: #{residual_forward.1} parent=47 // pred_check_branch
        %4198 = sbr.rel (%p4196) target = $region52
      $region51: #{residual_forward.1} parent=47 // pred_region
        _
      $region52: #{residual_forward.1} parent=47 // pred_fallthru
        _
    $region48: #{residual_forward.1} parent=5 // pred_fallthru
      _
    %p4199 = scmp.le.s32.totalorder 2, %s13
    // Predicated region
    $region53: #{residual_forward.1} parent=5 // pred_check
      %p4200 = pneg %p4199
    $region54: #{residual_forward.1} parent=5 // pred_check_branch
      %4202 = sbr.rel (%p4200) target = $region56
    $region55: #{residual_forward.1} parent=5 // pred_region
      %s4203 = ssub.s32 %s13, 2
      // Predicated region
      $region57: #{residual_forward.1} parent=55 // pred_check
        %p4204 = pneg %p194
      $region58: #{residual_forward.1} parent=55 // pred_check_branch
        %4206 = sbr.rel (%p4204) target = $region60
      $region59: #{residual_forward.1} parent=55 // pred_region
        %p4207 = scmp.lt.s32.totalorder %s19, 1
        %s4208 = scalar_select %p4207, %s19, 1
        %s4209 = smul.addr %s4208, 32
        %s4210 = smul.addr %s4209, 8
        %s4211 = scalar_lea.vmem %s7, %s4210
      $region60: #{residual_forward.1} parent=55 // pred_fallthru
        _
    $region56: #{residual_forward.1} parent=5 // pred_fallthru
      _
  $region6: #{residual_forward.1} parent=0 // loop_footer
    %s17 = sadd.s32 1, %s13
  $region7: #{residual_forward.1} parent=0 // loop_footer_branch
    %12 = sbr.rel target = $region3
  $region8: #{residual_forward.1} parent=0 // loop_exit
    _

</llo_original>
